<compile_context>
chip_gen: v6e
topology: v6e:2x2x1
jax: 0.10.0
libtpu: 0.0.40
codegen_flags: <defaults>
</compile_context>

<pallas_src>
import functools

import jax
import jax.numpy as jnp
from jax.experimental import pallas as pl
from jax.experimental.pallas import tpu as pltpu

KERNEL_SIZES = (3, 5, 7)
MAX_K = max(KERNEL_SIZES)
MAX_PAD = MAX_K // 2  # = 3

# Taps of the 7x7 window in "ring order": the first 9 are the central 3x3,
# the first 25 are the central 5x5, all 49 are the 7x7.  This lets the 3x3 and
# 5x5 branches reuse contiguous row sub-slices of ONE shared im2col matrix.
_ORDER = (
    [(dy, dx) for dy in (2, 3, 4) for dx in (2, 3, 4)]
    + [(dy, dx) for dy in (1, 2, 3, 4, 5) for dx in (1, 2, 3, 4, 5)
       if not (2 <= dy <= 4 and 2 <= dx <= 4)]
    + [(dy, dx) for dy in range(7) for dx in range(7)
       if not (1 <= dy <= 5 and 1 <= dx <= 5)]
)
assert len(_ORDER) == 49
assert _ORDER[:9] == [(dy, dx) for dy in (2, 3, 4) for dx in (2, 3, 4)]


def _flatten_weight(w, k):
    """(k, k, Cin, Cout) HWIO -> (Cout, k*k*Cin), taps in ring order."""
    off = MAX_PAD - k // 2
    cols = [w[dy - off, dx - off] for (dy, dx) in _ORDER[: k * k]]  # (Cin, Cout)
    return jnp.concatenate(cols, axis=0).T                          # (Cout, k*k*Cin)


def _msconv_kernel(x_ref, w3_ref, w5_ref, w7_ref, out_ref, *,
                   cin, cout, th, out_w):
    # x_ref:   (Cin, Hp, Wp)     padded input image of one batch element
    # wK_ref:  (Cout, K*K*Cin)   ring-ordered flattened weights (compute dtype)
    # out_ref: (3*Cout, TH*W)    one row-tile: channels on sublanes,
    #                            flattened spatial on lanes (lane-dense)
    r = pl.program_id(1)
    row0 = r * th
    if th % 8 == 0:
        row0 = pl.multiple_of(row0, 8)

    # Only the TH + 2*MAX_PAD halo rows this row-tile needs.
    win = x_ref[:, pl.ds(row0, th + 2 * MAX_PAD), :]

    # Shared im2col patch matrix: (49*Cin, TH*W), taps in ring order.
    hw = th * out_w
    cols = [win[:, dy:dy + th, dx:dx + out_w].reshape(cin, hw)
            for (dy, dx) in _ORDER]
    patch = jnp.concatenate(cols, axis=0)

    # Three MXU matmuls against contiguous row sub-slices of the same patch
    # (starting at row 0 -> cheap views, no FLOP inflation).
    o3 = jnp.dot(w3_ref[...], patch[: 9 * cin],
                 preferred_element_type=jnp.float32)
    o5 = jnp.dot(w5_ref[...], patch[: 25 * cin],
                 preferred_element_type=jnp.float32)
    o7 = jnp.dot(w7_ref[...], patch,
                 preferred_element_type=jnp.float32)

    # ReLU + direct sublane-sliced stores (no lane-axis concatenate).
    out_ref[0 * cout:1 * cout, :] = jnp.maximum(o3, 0.0).astype(out_ref.dtype)
    out_ref[1 * cout:2 * cout, :] = jnp.maximum(o5, 0.0).astype(out_ref.dtype)
    out_ref[2 * cout:3 * cout, :] = jnp.maximum(o7, 0.0).astype(out_ref.dtype)


def _pick_row_tile(H, W, requested, cin, cout, item, budget_bytes=8 << 20):
    """Largest lane-aligned row tile dividing H whose working set fits VMEM."""
    def lane_ok(th):
        return H % th == 0 and (th == H or (th * W) % 128 == 0)

    def step_bytes(th):
        hw = th * W
        patch = 49 * cin * hw * item                       # im2col matrix
        win = cin * (th + 2 * MAX_PAD) * (W + 2 * MAX_PAD) * item
        out = 2 * 3 * cout * hw * 4                        # double-buffered out
        return patch + win + out

    if requested is not None and lane_ok(requested):
        return requested
    cands = [th for th in range(1, H + 1) if lane_ok(th)]  # always contains H
    fitting = [th for th in cands if step_bytes(th) <= budget_bytes]
    return max(fitting) if fitting else min(cands)


def multi_scale_conv_block(x_nchw, w3, w5, w7, *, row_tile=None,
                           compute_dtype=jnp.float32):
    """x_nchw: (N, Cin, H, W); wK: (K, K, Cin, Cout) HWIO. Returns (N, 3*Cout, H, W)."""
    N, Cin, H, W = x_nchw.shape
    Cout = w3.shape[-1]
    item = jnp.dtype(compute_dtype).itemsize
    TH = _pick_row_tile(H, W, row_tile, Cin, Cout, item)
    R = H // TH
    Hp, Wp = H + 2 * MAX_PAD, W + 2 * MAX_PAD

    # Stay in NCHW; cast to compute dtype once, pad spatially by the largest
    # halo (3).  Casting in the wrapper keeps all per-step casts out of the
    # kernel and (for bf16) halves the input DMA bytes.
    x_pad = jnp.pad(x_nchw.astype(compute_dtype),
                    ((0, 0), (0, 0), (MAX_PAD, MAX_PAD), (MAX_PAD, MAX_PAD)))

    # Ring-ordered 2-D weights (Cout, K*K*Cin) matching the patch row layout.
    w3f = _flatten_weight(w3, 3).astype(compute_dtype)
    w5f = _flatten_weight(w5, 5).astype(compute_dtype)
    w7f = _flatten_weight(w7, 7).astype(compute_dtype)

    kernel = functools.partial(_msconv_kernel, cin=Cin, cout=Cout, th=TH,
                               out_w=W)

    flops = 2 * N * H * W * Cin * Cout * sum(k * k for k in KERNEL_SIZES)
    bytes_accessed = (x_pad.size * x_pad.dtype.itemsize
                      + sum(w.size * w.dtype.itemsize for w in (w3f, w5f, w7f))
                      + N * 3 * Cout * H * W * x_nchw.dtype.itemsize)

    out_flat = pl.pallas_call(
        kernel,
        out_shape=jax.ShapeDtypeStruct((N, 3 * Cout, H * W), x_nchw.dtype),
        grid_spec=pltpu.PrefetchScalarGridSpec(
            num_scalar_prefetch=0,
            grid=(N, R),
            in_specs=[
                # Full padded image per batch element (block index is invariant
                # over r, so it is fetched once per n); the kernel slices only
                # the halo rows it needs.
                pl.BlockSpec((None, Cin, Hp, Wp), lambda n, r: (n, 0, 0, 0)),
                pl.BlockSpec((Cout, 9 * Cin), lambda n, r: (0, 0)),
                pl.BlockSpec((Cout, 25 * Cin), lambda n, r: (0, 0)),
                pl.BlockSpec((Cout, 49 * Cin), lambda n, r: (0, 0)),
            ],
            out_specs=pl.BlockSpec((None, 3 * Cout, TH * W),
                                   lambda n, r: (n, 0, r)),
        ),
        compiler_params=pltpu.CompilerParams(
            dimension_semantics=("parallel", "parallel"),
            vmem_limit_bytes=32 * 1024 * 1024,
        ),
        cost_estimate=pl.CostEstimate(flops=flops, transcendentals=0,
                                      bytes_accessed=bytes_accessed),
    )(x_pad, w3f, w5f, w7f)

    # (N, 3*Cout, H*W) -> NCHW is a pure reshape (no transpose round-trip).
    return out_flat.reshape(N, 3 * Cout, H, W)


def _reference(x_nchw, w3, w5, w7):
    """Pure-JAX reference (same semantics as the PyTorch module)."""
    outs = []
    for w, k in ((w3, 3), (w5, 5), (w7, 7)):
        p = k // 2
        y = jax.lax.conv_general_dilated(
            x_nchw.astype(jnp.float32), w.astype(jnp.float32),
            window_strides=(1, 1), padding=((p, p), (p, p)),
            dimension_numbers=("NCHW", "HWIO", "NCHW"))
        outs.append(y)
    return jnp.maximum(jnp.concatenate(outs, axis=1), 0.0)


if __name__ == "__main__":
    # batch=2, in_channels=4, out_channels=8, spatial=16x16 (matches module).
    N, Cin, Cout, H, W = 2, 4, 8, 16, 16

    key = jax.random.PRNGKey(0)
    kx, k3, k5, k7 = jax.random.split(key, 4)
    x = jax.random.normal(kx, (N, Cin, H, W), dtype=jnp.float32)
    w3 = jax.random.normal(k3, (3, 3, Cin, Cout), dtype=jnp.float32) * 0.1
    w5 = jax.random.normal(k5, (5, 5, Cin, Cout), dtype=jnp.float32) * 0.1
    w7 = jax.random.normal(k7, (7, 7, Cin, Cout), dtype=jnp.float32) * 0.1

    # row_tile=8 -> grid (2 batches, 2 row tiles), exercising the 2-D grid.
    out = multi_scale_conv_block(x, w3, w5, w7, row_tile=8)
    out = jax.block_until_ready(out)

    ref = jax.block_until_ready(_reference(x, w3, w5, w7))
    assert out.shape == (N, 3 * Cout, H, W), out.shape
    max_err = float(jnp.max(jnp.abs(out - ref)))
    assert jnp.allclose(out, ref, atol=1e-3, rtol=1e-3), max_err

    print("KERNEL_OK")
</pallas_src>

<mosaic_0001>
module attributes {stable_mosaic.version = 11 : i64} {
  func.func @_msconv_kernel(%arg0: i32, %arg1: i32, %arg2: memref<1x4x22x22xf32, #tpu.memory_space<vmem>>, %arg3: memref<8x36xf32, #tpu.memory_space<vmem>>, %arg4: memref<8x100xf32, #tpu.memory_space<vmem>>, %arg5: memref<8x196xf32, #tpu.memory_space<vmem>>, %arg6: memref<1x24x128xf32, #tpu.memory_space<vmem>>) attributes {dimension_semantics = [#tpu.dimension_semantics<parallel>, #tpu.dimension_semantics<parallel>], iteration_bounds = array<i64: 2, 2>, scalar_prefetch = 0 : i64, scratch_operands = 0 : i64, tpu.core_type = #tpu.core_type<tc>, window_params = [{transform_indices = @transform_0, window_bounds = array<i64: 1, 4, 22, 22>}, {pipeline_mode = #tpu.pipeline_mode<synchronous>, transform_indices = @transform_1, window_bounds = array<i64: 8, 36>}, {pipeline_mode = #tpu.pipeline_mode<synchronous>, transform_indices = @transform_2, window_bounds = array<i64: 8, 100>}, {pipeline_mode = #tpu.pipeline_mode<synchronous>, transform_indices = @transform_3, window_bounds = array<i64: 8, 196>}, {transform_indices = @transform_4, window_bounds = array<i64: 1, 24, 128>}]} {
    %c8_i32 = arith.constant 8 : i32
    %0 = arith.muli %arg1, %c8_i32 : i32
    %1 = tpu.assume_multiple %0, 8 : i32
    %c0 = arith.constant 0 : index
    %c0_0 = arith.constant 0 : index
    %2 = arith.index_cast %1 : i32 to index
    %c0_1 = arith.constant 0 : index
    %3 = vector.load %arg2[%c0, %c0_0, %2, %c0_1] : memref<1x4x22x22xf32, #tpu.memory_space<vmem>>, vector<1x4x14x22xf32>
    %4 = vector.shape_cast %3 : vector<1x4x14x22xf32> to vector<4x14x22xf32>
    %5 = vector.extract_strided_slice %4 {offsets = [0, 2, 2], sizes = [4, 8, 16], strides = [1, 1, 1]} : vector<4x14x22xf32> to vector<4x8x16xf32>
    %6 = vector.shape_cast %5 : vector<4x8x16xf32> to vector<4x128xf32>
    %7 = vector.extract_strided_slice %4 {offsets = [0, 2, 3], sizes = [4, 8, 16], strides = [1, 1, 1]} : vector<4x14x22xf32> to vector<4x8x16xf32>
    %8 = vector.shape_cast %7 : vector<4x8x16xf32> to vector<4x128xf32>
    %9 = vector.extract_strided_slice %4 {offsets = [0, 2, 4], sizes = [4, 8, 16], strides = [1, 1, 1]} : vector<4x14x22xf32> to vector<4x8x16xf32>
    %10 = vector.shape_cast %9 : vector<4x8x16xf32> to vector<4x128xf32>
    %11 = vector.extract_strided_slice %4 {offsets = [0, 3, 2], sizes = [4, 8, 16], strides = [1, 1, 1]} : vector<4x14x22xf32> to vector<4x8x16xf32>
    %12 = vector.shape_cast %11 : vector<4x8x16xf32> to vector<4x128xf32>
    %13 = vector.extract_strided_slice %4 {offsets = [0, 3, 3], sizes = [4, 8, 16], strides = [1, 1, 1]} : vector<4x14x22xf32> to vector<4x8x16xf32>
    %14 = vector.shape_cast %13 : vector<4x8x16xf32> to vector<4x128xf32>
    %15 = vector.extract_strided_slice %4 {offsets = [0, 3, 4], sizes = [4, 8, 16], strides = [1, 1, 1]} : vector<4x14x22xf32> to vector<4x8x16xf32>
    %16 = vector.shape_cast %15 : vector<4x8x16xf32> to vector<4x128xf32>
    %17 = vector.extract_strided_slice %4 {offsets = [0, 4, 2], sizes = [4, 8, 16], strides = [1, 1, 1]} : vector<4x14x22xf32> to vector<4x8x16xf32>
    %18 = vector.shape_cast %17 : vector<4x8x16xf32> to vector<4x128xf32>
    %19 = vector.extract_strided_slice %4 {offsets = [0, 4, 3], sizes = [4, 8, 16], strides = [1, 1, 1]} : vector<4x14x22xf32> to vector<4x8x16xf32>
    %20 = vector.shape_cast %19 : vector<4x8x16xf32> to vector<4x128xf32>
    %21 = vector.extract_strided_slice %4 {offsets = [0, 4, 4], sizes = [4, 8, 16], strides = [1, 1, 1]} : vector<4x14x22xf32> to vector<4x8x16xf32>
    %22 = vector.shape_cast %21 : vector<4x8x16xf32> to vector<4x128xf32>
    %23 = vector.extract_strided_slice %4 {offsets = [0, 1, 1], sizes = [4, 8, 16], strides = [1, 1, 1]} : vector<4x14x22xf32> to vector<4x8x16xf32>
    %24 = vector.shape_cast %23 : vector<4x8x16xf32> to vector<4x128xf32>
    %25 = vector.extract_strided_slice %4 {offsets = [0, 1, 2], sizes = [4, 8, 16], strides = [1, 1, 1]} : vector<4x14x22xf32> to vector<4x8x16xf32>
    %26 = vector.shape_cast %25 : vector<4x8x16xf32> to vector<4x128xf32>
    %27 = vector.extract_strided_slice %4 {offsets = [0, 1, 3], sizes = [4, 8, 16], strides = [1, 1, 1]} : vector<4x14x22xf32> to vector<4x8x16xf32>
    %28 = vector.shape_cast %27 : vector<4x8x16xf32> to vector<4x128xf32>
    %29 = vector.extract_strided_slice %4 {offsets = [0, 1, 4], sizes = [4, 8, 16], strides = [1, 1, 1]} : vector<4x14x22xf32> to vector<4x8x16xf32>
    %30 = vector.shape_cast %29 : vector<4x8x16xf32> to vector<4x128xf32>
    %31 = vector.extract_strided_slice %4 {offsets = [0, 1, 5], sizes = [4, 8, 16], strides = [1, 1, 1]} : vector<4x14x22xf32> to vector<4x8x16xf32>
    %32 = vector.shape_cast %31 : vector<4x8x16xf32> to vector<4x128xf32>
    %33 = vector.extract_strided_slice %4 {offsets = [0, 2, 1], sizes = [4, 8, 16], strides = [1, 1, 1]} : vector<4x14x22xf32> to vector<4x8x16xf32>
    %34 = vector.shape_cast %33 : vector<4x8x16xf32> to vector<4x128xf32>
    %35 = vector.extract_strided_slice %4 {offsets = [0, 2, 5], sizes = [4, 8, 16], strides = [1, 1, 1]} : vector<4x14x22xf32> to vector<4x8x16xf32>
    %36 = vector.shape_cast %35 : vector<4x8x16xf32> to vector<4x128xf32>
    %37 = vector.extract_strided_slice %4 {offsets = [0, 3, 1], sizes = [4, 8, 16], strides = [1, 1, 1]} : vector<4x14x22xf32> to vector<4x8x16xf32>
    %38 = vector.shape_cast %37 : vector<4x8x16xf32> to vector<4x128xf32>
    %39 = vector.extract_strided_slice %4 {offsets = [0, 3, 5], sizes = [4, 8, 16], strides = [1, 1, 1]} : vector<4x14x22xf32> to vector<4x8x16xf32>
    %40 = vector.shape_cast %39 : vector<4x8x16xf32> to vector<4x128xf32>
    %41 = vector.extract_strided_slice %4 {offsets = [0, 4, 1], sizes = [4, 8, 16], strides = [1, 1, 1]} : vector<4x14x22xf32> to vector<4x8x16xf32>
    %42 = vector.shape_cast %41 : vector<4x8x16xf32> to vector<4x128xf32>
    %43 = vector.extract_strided_slice %4 {offsets = [0, 4, 5], sizes = [4, 8, 16], strides = [1, 1, 1]} : vector<4x14x22xf32> to vector<4x8x16xf32>
    %44 = vector.shape_cast %43 : vector<4x8x16xf32> to vector<4x128xf32>
    %45 = vector.extract_strided_slice %4 {offsets = [0, 5, 1], sizes = [4, 8, 16], strides = [1, 1, 1]} : vector<4x14x22xf32> to vector<4x8x16xf32>
    %46 = vector.shape_cast %45 : vector<4x8x16xf32> to vector<4x128xf32>
    %47 = vector.extract_strided_slice %4 {offsets = [0, 5, 2], sizes = [4, 8, 16], strides = [1, 1, 1]} : vector<4x14x22xf32> to vector<4x8x16xf32>
    %48 = vector.shape_cast %47 : vector<4x8x16xf32> to vector<4x128xf32>
    %49 = vector.extract_strided_slice %4 {offsets = [0, 5, 3], sizes = [4, 8, 16], strides = [1, 1, 1]} : vector<4x14x22xf32> to vector<4x8x16xf32>
    %50 = vector.shape_cast %49 : vector<4x8x16xf32> to vector<4x128xf32>
    %51 = vector.extract_strided_slice %4 {offsets = [0, 5, 4], sizes = [4, 8, 16], strides = [1, 1, 1]} : vector<4x14x22xf32> to vector<4x8x16xf32>
    %52 = vector.shape_cast %51 : vector<4x8x16xf32> to vector<4x128xf32>
    %53 = vector.extract_strided_slice %4 {offsets = [0, 5, 5], sizes = [4, 8, 16], strides = [1, 1, 1]} : vector<4x14x22xf32> to vector<4x8x16xf32>
    %54 = vector.shape_cast %53 : vector<4x8x16xf32> to vector<4x128xf32>
    %55 = vector.extract_strided_slice %4 {offsets = [0, 0, 0], sizes = [4, 8, 16], strides = [1, 1, 1]} : vector<4x14x22xf32> to vector<4x8x16xf32>
    %56 = vector.shape_cast %55 : vector<4x8x16xf32> to vector<4x128xf32>
    %57 = vector.extract_strided_slice %4 {offsets = [0, 0, 1], sizes = [4, 8, 16], strides = [1, 1, 1]} : vector<4x14x22xf32> to vector<4x8x16xf32>
    %58 = vector.shape_cast %57 : vector<4x8x16xf32> to vector<4x128xf32>
    %59 = vector.extract_strided_slice %4 {offsets = [0, 0, 2], sizes = [4, 8, 16], strides = [1, 1, 1]} : vector<4x14x22xf32> to vector<4x8x16xf32>
    %60 = vector.shape_cast %59 : vector<4x8x16xf32> to vector<4x128xf32>
    %61 = vector.extract_strided_slice %4 {offsets = [0, 0, 3], sizes = [4, 8, 16], strides = [1, 1, 1]} : vector<4x14x22xf32> to vector<4x8x16xf32>
    %62 = vector.shape_cast %61 : vector<4x8x16xf32> to vector<4x128xf32>
    %63 = vector.extract_strided_slice %4 {offsets = [0, 0, 4], sizes = [4, 8, 16], strides = [1, 1, 1]} : vector<4x14x22xf32> to vector<4x8x16xf32>
    %64 = vector.shape_cast %63 : vector<4x8x16xf32> to vector<4x128xf32>
    %65 = vector.extract_strided_slice %4 {offsets = [0, 0, 5], sizes = [4, 8, 16], strides = [1, 1, 1]} : vector<4x14x22xf32> to vector<4x8x16xf32>
    %66 = vector.shape_cast %65 : vector<4x8x16xf32> to vector<4x128xf32>
    %67 = vector.extract_strided_slice %4 {offsets = [0, 0, 6], sizes = [4, 8, 16], strides = [1, 1, 1]} : vector<4x14x22xf32> to vector<4x8x16xf32>
    %68 = vector.shape_cast %67 : vector<4x8x16xf32> to vector<4x128xf32>
    %69 = vector.extract_strided_slice %4 {offsets = [0, 1, 0], sizes = [4, 8, 16], strides = [1, 1, 1]} : vector<4x14x22xf32> to vector<4x8x16xf32>
    %70 = vector.shape_cast %69 : vector<4x8x16xf32> to vector<4x128xf32>
    %71 = vector.extract_strided_slice %4 {offsets = [0, 1, 6], sizes = [4, 8, 16], strides = [1, 1, 1]} : vector<4x14x22xf32> to vector<4x8x16xf32>
    %72 = vector.shape_cast %71 : vector<4x8x16xf32> to vector<4x128xf32>
    %73 = vector.extract_strided_slice %4 {offsets = [0, 2, 0], sizes = [4, 8, 16], strides = [1, 1, 1]} : vector<4x14x22xf32> to vector<4x8x16xf32>
    %74 = vector.shape_cast %73 : vector<4x8x16xf32> to vector<4x128xf32>
    %75 = vector.extract_strided_slice %4 {offsets = [0, 2, 6], sizes = [4, 8, 16], strides = [1, 1, 1]} : vector<4x14x22xf32> to vector<4x8x16xf32>
    %76 = vector.shape_cast %75 : vector<4x8x16xf32> to vector<4x128xf32>
    %77 = vector.extract_strided_slice %4 {offsets = [0, 3, 0], sizes = [4, 8, 16], strides = [1, 1, 1]} : vector<4x14x22xf32> to vector<4x8x16xf32>
    %78 = vector.shape_cast %77 : vector<4x8x16xf32> to vector<4x128xf32>
    %79 = vector.extract_strided_slice %4 {offsets = [0, 3, 6], sizes = [4, 8, 16], strides = [1, 1, 1]} : vector<4x14x22xf32> to vector<4x8x16xf32>
    %80 = vector.shape_cast %79 : vector<4x8x16xf32> to vector<4x128xf32>
    %81 = vector.extract_strided_slice %4 {offsets = [0, 4, 0], sizes = [4, 8, 16], strides = [1, 1, 1]} : vector<4x14x22xf32> to vector<4x8x16xf32>
    %82 = vector.shape_cast %81 : vector<4x8x16xf32> to vector<4x128xf32>
    %83 = vector.extract_strided_slice %4 {offsets = [0, 4, 6], sizes = [4, 8, 16], strides = [1, 1, 1]} : vector<4x14x22xf32> to vector<4x8x16xf32>
    %84 = vector.shape_cast %83 : vector<4x8x16xf32> to vector<4x128xf32>
    %85 = vector.extract_strided_slice %4 {offsets = [0, 5, 0], sizes = [4, 8, 16], strides = [1, 1, 1]} : vector<4x14x22xf32> to vector<4x8x16xf32>
    %86 = vector.shape_cast %85 : vector<4x8x16xf32> to vector<4x128xf32>
    %87 = vector.extract_strided_slice %4 {offsets = [0, 5, 6], sizes = [4, 8, 16], strides = [1, 1, 1]} : vector<4x14x22xf32> to vector<4x8x16xf32>
    %88 = vector.shape_cast %87 : vector<4x8x16xf32> to vector<4x128xf32>
    %89 = vector.extract_strided_slice %4 {offsets = [0, 6, 0], sizes = [4, 8, 16], strides = [1, 1, 1]} : vector<4x14x22xf32> to vector<4x8x16xf32>
    %90 = vector.shape_cast %89 : vector<4x8x16xf32> to vector<4x128xf32>
    %91 = vector.extract_strided_slice %4 {offsets = [0, 6, 1], sizes = [4, 8, 16], strides = [1, 1, 1]} : vector<4x14x22xf32> to vector<4x8x16xf32>
    %92 = vector.shape_cast %91 : vector<4x8x16xf32> to vector<4x128xf32>
    %93 = vector.extract_strided_slice %4 {offsets = [0, 6, 2], sizes = [4, 8, 16], strides = [1, 1, 1]} : vector<4x14x22xf32> to vector<4x8x16xf32>
    %94 = vector.shape_cast %93 : vector<4x8x16xf32> to vector<4x128xf32>
    %95 = vector.extract_strided_slice %4 {offsets = [0, 6, 3], sizes = [4, 8, 16], strides = [1, 1, 1]} : vector<4x14x22xf32> to vector<4x8x16xf32>
    %96 = vector.shape_cast %95 : vector<4x8x16xf32> to vector<4x128xf32>
    %97 = vector.extract_strided_slice %4 {offsets = [0, 6, 4], sizes = [4, 8, 16], strides = [1, 1, 1]} : vector<4x14x22xf32> to vector<4x8x16xf32>
    %98 = vector.shape_cast %97 : vector<4x8x16xf32> to vector<4x128xf32>
    %99 = vector.extract_strided_slice %4 {offsets = [0, 6, 5], sizes = [4, 8, 16], strides = [1, 1, 1]} : vector<4x14x22xf32> to vector<4x8x16xf32>
    %100 = vector.shape_cast %99 : vector<4x8x16xf32> to vector<4x128xf32>
    %101 = vector.extract_strided_slice %4 {offsets = [0, 6, 6], sizes = [4, 8, 16], strides = [1, 1, 1]} : vector<4x14x22xf32> to vector<4x8x16xf32>
    %102 = vector.shape_cast %101 : vector<4x8x16xf32> to vector<4x128xf32>
    %103 = tpu.concatenate %6, %8, %10, %12, %14, %16, %18, %20, %22, %24, %26, %28, %30, %32, %34, %36 in 0 : vector<4x128xf32>, vector<4x128xf32>, vector<4x128xf32>, vector<4x128xf32>, vector<4x128xf32>, vector<4x128xf32>, vector<4x128xf32>, vector<4x128xf32>, vector<4x128xf32>, vector<4x128xf32>, vector<4x128xf32>, vector<4x128xf32>, vector<4x128xf32>, vector<4x128xf32>, vector<4x128xf32>, vector<4x128xf32> -> vector<64x128xf32>
    %104 = tpu.concatenate %38, %40, %42, %44, %46, %48, %50, %52, %54, %56, %58, %60, %62, %64, %66, %68 in 0 : vector<4x128xf32>, vector<4x128xf32>, vector<4x128xf32>, vector<4x128xf32>, vector<4x128xf32>, vector<4x128xf32>, vector<4x128xf32>, vector<4x128xf32>, vector<4x128xf32>, vector<4x128xf32>, vector<4x128xf32>, vector<4x128xf32>, vector<4x128xf32>, vector<4x128xf32>, vector<4x128xf32>, vector<4x128xf32> -> vector<64x128xf32>
    %105 = tpu.concatenate %70, %72, %74, %76, %78, %80, %82, %84, %86, %88, %90, %92, %94, %96, %98, %100 in 0 : vector<4x128xf32>, vector<4x128xf32>, vector<4x128xf32>, vector<4x128xf32>, vector<4x128xf32>, vector<4x128xf32>, vector<4x128xf32>, vector<4x128xf32>, vector<4x128xf32>, vector<4x128xf32>, vector<4x128xf32>, vector<4x128xf32>, vector<4x128xf32>, vector<4x128xf32>, vector<4x128xf32>, vector<4x128xf32> -> vector<64x128xf32>
    %106 = tpu.concatenate %103, %104, %105, %102 in 0 : vector<64x128xf32>, vector<64x128xf32>, vector<64x128xf32>, vector<4x128xf32> -> vector<196x128xf32>
    %c0_2 = arith.constant 0 : index
    %c0_3 = arith.constant 0 : index
    %107 = vector.load %arg3[%c0_2, %c0_3] : memref<8x36xf32, #tpu.memory_space<vmem>>, vector<8x36xf32>
    %108 = vector.extract_strided_slice %106 {offsets = [0, 0], sizes = [36, 128], strides = [1, 1]} : vector<196x128xf32> to vector<36x128xf32>
    %cst = arith.constant dense<0.000000e+00> : vector<8x128xf32>
    %109 = tpu.matmul %107, %108, %cst {dimension_numbers = #tpu.dot_dimension_numbers<[1], [0], [0], [1], [0, 0, 1, 1], [], []>} : vector<8x36xf32>, vector<36x128xf32>, vector<8x128xf32> -> vector<8x128xf32>
    %c0_4 = arith.constant 0 : index
    %c0_5 = arith.constant 0 : index
    %110 = vector.load %arg4[%c0_4, %c0_5] : memref<8x100xf32, #tpu.memory_space<vmem>>, vector<8x100xf32>
    %111 = vector.extract_strided_slice %106 {offsets = [0, 0], sizes = [100, 128], strides = [1, 1]} : vector<196x128xf32> to vector<100x128xf32>
    %cst_6 = arith.constant dense<0.000000e+00> : vector<8x128xf32>
    %112 = tpu.matmul %110, %111, %cst_6 {dimension_numbers = #tpu.dot_dimension_numbers<[1], [0], [0], [1], [0, 0, 1, 1], [], []>} : vector<8x100xf32>, vector<100x128xf32>, vector<8x128xf32> -> vector<8x128xf32>
    %c0_7 = arith.constant 0 : index
    %c0_8 = arith.constant 0 : index
    %113 = vector.load %arg5[%c0_7, %c0_8] : memref<8x196xf32, #tpu.memory_space<vmem>>, vector<8x196xf32>
    %cst_9 = arith.constant dense<0.000000e+00> : vector<8x128xf32>
    %114 = tpu.matmul %113, %106, %cst_9 {dimension_numbers = #tpu.dot_dimension_numbers<[1], [0], [0], [1], [0, 0, 1, 1], [], []>} : vector<8x196xf32>, vector<196x128xf32>, vector<8x128xf32> -> vector<8x128xf32>
    %cst_10 = arith.constant 0.000000e+00 : f32
    %115 = vector.broadcast %cst_10 : f32 to vector<8x128xf32>
    %116 = arith.maximumf %109, %115 : vector<8x128xf32>
    %c0_11 = arith.constant 0 : index
    %c0_12 = arith.constant 0 : index
    %c0_13 = arith.constant 0 : index
    %117 = vector.load %arg6[%c0_11, %c0_12, %c0_13] : memref<1x24x128xf32, #tpu.memory_space<vmem>>, vector<1x8x128xf32>
    %118 = vector.shape_cast %117 : vector<1x8x128xf32> to vector<8x128xf32>
    %119 = vector.shape_cast %116 : vector<8x128xf32> to vector<1x8x128xf32>
    tpu.vector_store %arg6[%c0_11, %c0_12, %c0_13], %119 {strides = array<i32>} : memref<1x24x128xf32, #tpu.memory_space<vmem>>, vector<1x8x128xf32>,
    %cst_14 = arith.constant 0.000000e+00 : f32
    %120 = vector.broadcast %cst_14 : f32 to vector<8x128xf32>
    %121 = arith.maximumf %112, %120 : vector<8x128xf32>
    %c0_15 = arith.constant 0 : index
    %c8 = arith.constant 8 : index
    %c0_16 = arith.constant 0 : index
    %122 = vector.load %arg6[%c0_15, %c8, %c0_16] : memref<1x24x128xf32, #tpu.memory_space<vmem>>, vector<1x8x128xf32>
    %123 = vector.shape_cast %122 : vector<1x8x128xf32> to vector<8x128xf32>
    %124 = vector.shape_cast %121 : vector<8x128xf32> to vector<1x8x128xf32>
    tpu.vector_store %arg6[%c0_15, %c8, %c0_16], %124 {strides = array<i32>} : memref<1x24x128xf32, #tpu.memory_space<vmem>>, vector<1x8x128xf32>,
    %cst_17 = arith.constant 0.000000e+00 : f32
    %125 = vector.broadcast %cst_17 : f32 to vector<8x128xf32>
    %126 = arith.maximumf %114, %125 : vector<8x128xf32>
    %c0_18 = arith.constant 0 : index
    %c16 = arith.constant 16 : index
    %c0_19 = arith.constant 0 : index
    %127 = vector.load %arg6[%c0_18, %c16, %c0_19] : memref<1x24x128xf32, #tpu.memory_space<vmem>>, vector<1x8x128xf32>
    %128 = vector.shape_cast %127 : vector<1x8x128xf32> to vector<8x128xf32>
    %129 = vector.shape_cast %126 : vector<8x128xf32> to vector<1x8x128xf32>
    tpu.vector_store %arg6[%c0_18, %c16, %c0_19], %129 {strides = array<i32>} : memref<1x24x128xf32, #tpu.memory_space<vmem>>, vector<1x8x128xf32>,
    return
  }
  func.func @transform_0(%arg0: i32, %arg1: i32) -> (i32, i32, i32, i32) {
    %c0_i32 = arith.constant 0 : i32
    %c0_i32_0 = arith.constant 0 : i32
    %c0_i32_1 = arith.constant 0 : i32
    %c0_i32_2 = arith.constant 0 : i32
    return %arg0, %c0_i32, %c0_i32_0, %c0_i32_1 : i32, i32, i32, i32
  }
  func.func @transform_1(%arg0: i32, %arg1: i32) -> (i32, i32) {
    %c0_i32 = arith.constant 0 : i32
    %c0_i32_0 = arith.constant 0 : i32
    %c0_i32_1 = arith.constant 0 : i32
    return %c0_i32, %c0_i32_0 : i32, i32
  }
  func.func @transform_2(%arg0: i32, %arg1: i32) -> (i32, i32) {
    %c0_i32 = arith.constant 0 : i32
    %c0_i32_0 = arith.constant 0 : i32
    %c0_i32_1 = arith.constant 0 : i32
    return %c0_i32, %c0_i32_0 : i32, i32
  }
  func.func @transform_3(%arg0: i32, %arg1: i32) -> (i32, i32) {
    %c0_i32 = arith.constant 0 : i32
    %c0_i32_0 = arith.constant 0 : i32
    %c0_i32_1 = arith.constant 0 : i32
    return %c0_i32, %c0_i32_0 : i32, i32
  }
  func.func @transform_4(%arg0: i32, %arg1: i32) -> (i32, i32, i32) {
    %c0_i32 = arith.constant 0 : i32
    %c0_i32_0 = arith.constant 0 : i32
    return %arg0, %c0_i32, %arg1 : i32, i32, i32
  }
}

</mosaic_0001>

<llo_original>
// kernel: tpu_custom_call.1
$region0: #{tpu_custom_call.1}
  #allocation0 [shape = 'u32[]', space=smem, size = 0x4, offset = 0x4, fixed_abs, tag = 'smem constant byte address 0x4 - core index']
  #allocation1 [shape = 'u32[144,128]{1,0:T(1,128)}', space=vmem, size = 0x12000, scoped, tag = 'internal scratch']
  %s0 = inlined_call_operand.vmem [shape: f32[2,4,22,22], index: 0, kind: input, shape index: {}]
  %s1 = inlined_call_operand.vmem [shape: f32[8,36], index: 1, kind: input, shape index: {}]
  %s2 = inlined_call_operand.vmem [shape: f32[8,100], index: 2, kind: input, shape index: {}]
  %s3 = inlined_call_operand.vmem [shape: f32[8,196], index: 3, kind: input, shape index: {}]
  %s4 = inlined_call_operand.hbm [shape: f32[2,24,256], index: 4, kind: output, shape index: {}]
  %s5 = sld [smem:[#allocation0]]
  $region49: #{tpu_custom_call.1} parent=0
    _
  %s7 = ssub.s32 1, %s5
  %s8 = scalar_select 0, %s7, %s5
  $region1: #{tpu_custom_call.1} parent=0
    #allocation2 [shape = 'u8[24576]{0}', space=vmem, size = 0x6000, scoped, tag = 'output window, operand 0']
    #allocation3 [shape = 's32[2]{0}', space=sflag, size = 0x8, scoped, tag = 'scoped memory for tpu_custom_call.1']
    %9 = vsyncpa [#allocation3], 0
    %s10 = scalar_lea.sflag [#allocation3], 1
    %11 = vsyncpa %s10, 0
    loop: start=0, step=1, limit=6
    $region2: #{tpu_custom_call.1} parent=1 // loop_pre_header
      _
    $region3: #{tpu_custom_call.1} parent=1 // loop_header
      %s13 = sphi 0, %s17
      %p14 = scmp.ge.s32.totalorder %s13, 6
      %s20 = sphi 0, %s32
      %s21 = sphi 0, %s28
      %s22 = sphi 0, %s20
      %s23 = sphi 0, %s21
      %s24 = sphi 0, %s22
      %s25 = sphi 0, %s23
      %s35 = sphi 0, %s37
      %s38 = sphi 0, %s35
      %s39 = sphi 0, %s38
      %s55 = sphi 0, %s39
      %s59 = sphi 0, %s59
      %s61 = sphi 0, %s59
      %s62 = sphi 0, %s61
      %s76 = sphi 0, %s62
      %s80 = sphi 0, %s80
      %s82 = sphi 0, %s80
      %s83 = sphi 0, %s82
      %s97 = sphi 0, %s83
      %s101 = sphi 0, %s101
      %s103 = sphi 0, %s101
      %s104 = sphi 0, %s103
      %s118 = sphi 0, %s104
      %s126 = sphi 0, %s128
      %s129 = sphi 0, %s126
      %s130 = sphi 0, %s129
      %s146 = sphi 0, %s130
    $region4: #{tpu_custom_call.1} parent=1 // loop_header_branch
      %16 = sbr.rel (%p14) target = $region8
    $region5: #{tpu_custom_call.1} parent=1 // loop_body
      %s18 = ssub.s32 %s13, 1
      %s19 = ssub.s32 %s13, 2
      %s26 = sadd.s32 1, %s21
      %p27 = scmp.ge.s32.totalorder %s26, 2
      %s28 = scalar_select %p27, 0, %s26
      %s29 = sadd.s32 1, %s20
      %s30 = scalar_select %p27, %s29, %s20
      %p31 = scmp.ge.s32.totalorder %s30, 2
      %s32 = scalar_select %p31, 0, %s30
      %s33 = ssub.s32 %s20, %s32
      %p34 = scmp.eq.s32.totalorder %s33, 0
      %s36 = sadd.s32 %s35, 1
      %s37 = scalar_select %p34, %s35, %s36
      %p40 = pneg %p34
      %p41 = scmp.eq.s32.totalorder %s13, 3
      %p42 = por %p40, %p41
      %p43 = scmp.ne.s32.totalorder %s35, %s38
      %p44 = scmp.eq.s32.totalorder %s13, 0
      %p45 = por %p43, %p44
      %p46 = scmp.ne.s32.totalorder %s35, %s38
      %p47 = scmp.eq.s32.totalorder %s18, 3
      %p48 = por %p46, %p47
      %p49 = scmp.ne.s32.totalorder %s38, %s39
      %p50 = scmp.eq.s32.totalorder %s18, 0
      %p51 = por %p49, %p50
      %p52 = scmp.ne.s32.totalorder %s38, %s39
      %p53 = scmp.eq.s32.totalorder %s19, 3
      %p54 = por %p52, %p53
      %p56 = scmp.ne.s32.totalorder %s39, %s55
      %p57 = scmp.eq.s32.totalorder %s19, 0
      %p58 = por %p56, %p57
      %s60 = sadd.s32 %s59, 1
      %p63 = scmp.eq.s32.totalorder %s13, 3
      %p64 = scmp.ne.s32.totalorder %s59, %s61
      %p65 = scmp.eq.s32.totalorder %s13, 0
      %p66 = por %p64, %p65
      %p67 = scmp.ne.s32.totalorder %s59, %s61
      %p68 = scmp.eq.s32.totalorder %s18, 3
      %p69 = por %p67, %p68
      %p70 = scmp.ne.s32.totalorder %s61, %s62
      %p71 = scmp.eq.s32.totalorder %s18, 0
      %p72 = por %p70, %p71
      %p73 = scmp.ne.s32.totalorder %s61, %s62
      %p74 = scmp.eq.s32.totalorder %s19, 3
      %p75 = por %p73, %p74
      %p77 = scmp.ne.s32.totalorder %s62, %s76
      %p78 = scmp.eq.s32.totalorder %s19, 0
      %p79 = por %p77, %p78
      %s81 = sadd.s32 %s80, 1
      %p84 = scmp.eq.s32.totalorder %s13, 3
      %p85 = scmp.ne.s32.totalorder %s80, %s82
      %p86 = scmp.eq.s32.totalorder %s13, 0
      %p87 = por %p85, %p86
      %p88 = scmp.ne.s32.totalorder %s80, %s82
      %p89 = scmp.eq.s32.totalorder %s18, 3
      %p90 = por %p88, %p89
      %p91 = scmp.ne.s32.totalorder %s82, %s83
      %p92 = scmp.eq.s32.totalorder %s18, 0
      %p93 = por %p91, %p92
      %p94 = scmp.ne.s32.totalorder %s82, %s83
      %p95 = scmp.eq.s32.totalorder %s19, 3
      %p96 = por %p94, %p95
      %p98 = scmp.ne.s32.totalorder %s83, %s97
      %p99 = scmp.eq.s32.totalorder %s19, 0
      %p100 = por %p98, %p99
      %s102 = sadd.s32 %s101, 1
      %p105 = scmp.eq.s32.totalorder %s13, 3
      %p106 = scmp.ne.s32.totalorder %s101, %s103
      %p107 = scmp.eq.s32.totalorder %s13, 0
      %p108 = por %p106, %p107
      %p109 = scmp.ne.s32.totalorder %s101, %s103
      %p110 = scmp.eq.s32.totalorder %s18, 3
      %p111 = por %p109, %p110
      %p112 = scmp.ne.s32.totalorder %s103, %s104
      %p113 = scmp.eq.s32.totalorder %s18, 0
      %p114 = por %p112, %p113
      %p115 = scmp.ne.s32.totalorder %s103, %s104
      %p116 = scmp.eq.s32.totalorder %s19, 3
      %p117 = por %p115, %p116
      %p119 = scmp.ne.s32.totalorder %s104, %s118
      %p120 = scmp.eq.s32.totalorder %s19, 0
      %p121 = por %p119, %p120
      %s122 = ssub.s32 %s20, %s32
      %s123 = ssub.s32 %s21, %s28
      %s124 = sor.u32 %s122, %s123
      %p125 = scmp.eq.s32.totalorder %s124, 0
      %s127 = sadd.s32 %s126, 1
      %s128 = scalar_select %p125, %s126, %s127
      %p131 = pneg %p125
      %p132 = scmp.eq.s32.totalorder %s13, 3
      %p133 = por %p131, %p132
      %p134 = scmp.ne.s32.totalorder %s126, %s129
      %p135 = scmp.eq.s32.totalorder %s13, 0
      %p136 = por %p134, %p135
      %p137 = scmp.ne.s32.totalorder %s126, %s129
      %p138 = scmp.eq.s32.totalorder %s18, 3
      %p139 = por %p137, %p138
      %p140 = scmp.ne.s32.totalorder %s129, %s130
      %p141 = scmp.eq.s32.totalorder %s18, 0
      %p142 = por %p140, %p141
      %p143 = scmp.ne.s32.totalorder %s129, %s130
      %p144 = scmp.eq.s32.totalorder %s19, 3
      %p145 = por %p143, %p144
      %p147 = scmp.ne.s32.totalorder %s130, %s146
      %p148 = scmp.eq.s32.totalorder %s19, 0
      %p149 = por %p147, %p148
      %p150 = scmp.le.s32.totalorder 1, %s13
      %p151 = scmp.lt.s32.totalorder %s13, 5
      %p152 = pnand %p150, %p151
      %p153 = pneg %p152
      // Predicated region
      $region9: #{tpu_custom_call.1} parent=5 // pred_check
        _
      $region10: #{tpu_custom_call.1} parent=5 // pred_check_branch
        %155 = sbr.rel (%p152) target = $region12
      $region11: #{tpu_custom_call.1} parent=5 // pred_region
        %s156 = ssub.s32 %s13, 1
        // Predicated region
        $region13: #{tpu_custom_call.1} parent=11 // pred_check
          %p157 = pneg %p72
        $region14: #{tpu_custom_call.1} parent=11 // pred_check_branch
          %159 = sbr.rel (%p157) target = $region16
        $region15: #{tpu_custom_call.1} parent=11 // pred_region
          _
        $region16: #{tpu_custom_call.1} parent=11 // pred_fallthru
          _
        // Predicated region
        $region17: #{tpu_custom_call.1} parent=11 // pred_check
          %p160 = pneg %p93
        $region18: #{tpu_custom_call.1} parent=11 // pred_check_branch
          %162 = sbr.rel (%p160) target = $region20
        $region19: #{tpu_custom_call.1} parent=11 // pred_region
          _
        $region20: #{tpu_custom_call.1} parent=11 // pred_fallthru
          _
        // Predicated region
        $region21: #{tpu_custom_call.1} parent=11 // pred_check
          %p163 = pneg %p114
        $region22: #{tpu_custom_call.1} parent=11 // pred_check_branch
          %165 = sbr.rel (%p163) target = $region24
        $region23: #{tpu_custom_call.1} parent=11 // pred_region
          _
        $region24: #{tpu_custom_call.1} parent=11 // pred_fallthru
          _
      $region12: #{tpu_custom_call.1} parent=5 // pred_fallthru
        _
      %p166 = scmp.lt.s32.totalorder %s13, 4
      // Predicated region
      $region25: #{tpu_custom_call.1} parent=5 // pred_check
        %p167 = pneg %p166
      $region26: #{tpu_custom_call.1} parent=5 // pred_check_branch
        %169 = sbr.rel (%p167) target = $region28
      $region27: #{tpu_custom_call.1} parent=5 // pred_region
        // Predicated region
        $region29: #{tpu_custom_call.1} parent=27 // pred_check
          %p170 = pneg %p45
        $region30: #{tpu_custom_call.1} parent=27 // pred_check_branch
          %172 = sbr.rel (%p170) target = $region32
        $region31: #{tpu_custom_call.1} parent=27 // pred_region
          %p173 = scmp.lt.s32.totalorder %s20, 1
          %s174 = scalar_select %p173, %s20, 1
          %s175 = smul.addr %s174, 12
          %s176 = smul.addr %s175, 8
          %s177 = scalar_lea.vmem %s0, %s176
        $region32: #{tpu_custom_call.1} parent=27 // pred_fallthru
          _
      $region28: #{tpu_custom_call.1} parent=5 // pred_fallthru
        _
      %p178 = scmp.le.s32.totalorder 1, %s13
      %p179 = scmp.lt.s32.totalorder %s13, 5
      %p180 = pnand %p178, %p179
      %p181 = pneg %p180
      // Predicated region
      $region33: #{tpu_custom_call.1} parent=5 // pred_check
        _
      $region34: #{tpu_custom_call.1} parent=5 // pred_check_branch
        %183 = sbr.rel (%p180) target = $region36
      $region35: #{tpu_custom_call.1} parent=5 // pred_region
        %s184 = ssub.s32 %s13, 1
        %p185 = scmp.lt.s32.totalorder %s22, 1
        %s186 = scalar_select %p185, %s22, 1
        %s187 = smul.addr %s186, 12
        %s188 = smul.addr %s187, 8
        %s189 = scalar_lea.vmem %s0, %s188
        %p190 = pneg %p51
        %p191 = pneg %p48
        %p192 = pneg %p72
        %p193 = pneg %p69
        %p194 = pneg %p93
        %p195 = pneg %p90
        %p196 = pneg %p114
        %p197 = pneg %p111
        %p198 = pneg %p142
        %p199 = pneg %p139
        %s200 = sand.u32 %s129, 1
        %s201 = scalar_lea.sflag [#allocation3], %s200
        %s202 = sand.u32 %s129, 1
        %s203 = smul.addr %s202, 24
        %s204 = scalar_lea.vmem [#allocation2], %s203
        %p205 = scmp.lt.s32.totalorder %s22, 1
        %s206 = scalar_select %p205, %s22, 1
        %s207 = smul.addr %s206, 12
        %s208 = smul.addr %s207, 8
        %s209 = scalar_lea.vmem %s0, %s208
        %s210 = smul.u32 %s23, 8
        %s211 = scalar_lea.vmem %s209, %s210
        %v212 = vld [vmem:[%s211] sm:$0xff]
        %v213 = vld [vmem:[%s211 + $0x8] sm:$0x3f]
        %v214 = vld [vmem:[%s211 + $0x18] sm:$0xff]
        %v215 = vld [vmem:[%s211 + $0x20] sm:$0x3f]
        %v216 = vld [vmem:[%s211 + $0x30] sm:$0xff]
        %v217 = vld [vmem:[%s211 + $0x38] sm:$0x3f]
        %v218 = vld [vmem:[%s211 + $0x48] sm:$0xff]
        %v219 = vld [vmem:[%s211 + $0x50] sm:$0x3f]
        %vm228 = vcmask 1045504
        %v229 = vrot.slane %v212, 2
        %v230 = vrot.slane %v213, 2
        %v231 = vsel %vm228, %v229, %v230
        %v232 = vrot.slane %v214, 2
        %v233 = vrot.slane %v215, 2
        %v234 = vsel %vm228, %v232, %v233
        %v235 = vrot.slane %v216, 2
        %v236 = vrot.slane %v217, 2
        %v237 = vsel %vm228, %v235, %v236
        %v238 = vrot.slane %v218, 2
        %v239 = vrot.slane %v219, 2
        %v240 = vsel %vm228, %v238, %v239
        %241 = vrot.lane.b32.xlu0 %v231, 126
        %v242 = vpop.permute.xlu0 %241
        %243 = vrot.lane.b32.xlu0 %v234, 126
        %v244 = vpop.permute.xlu0 %243
        %245 = vrot.lane.b32.xlu0 %v237, 126
        %v246 = vpop.permute.xlu0 %245
        %247 = vrot.lane.b32.xlu0 %v240, 126
        %v248 = vpop.permute.xlu0 %247
        %v253 = vcombine.low %v242, %v246
        %v254 = vcombine.high %v242, %v246
        %v256 = vunpack.c.l.s4 1983009808
        %v257 = vunpack.c.0.s8 %v256
        %v258 = vlaneseq
        %v259 = vshrl.u32 %v258, 7
        %v260 = vsub.s32 %v257, %v259
        %v261 = vrot.slane %v253, %v260
        %v263 = vunpack.c.l.s4 1983009808
        %v264 = vunpack.c.0.s8 %v263
        %v265 = vlaneseq
        %v266 = vshrl.u32 %v265, 7
        %v267 = vsub.s32 %v264, %v266
        %v268 = vrot.slane %v254, %v267
        %v269 = vcombine.low %v244, %v248
        %v270 = vcombine.high %v244, %v248
        %v272 = vunpack.c.l.s4 1983009808
        %v273 = vunpack.c.0.s8 %v272
        %v274 = vlaneseq
        %v275 = vshrl.u32 %v274, 7
        %v276 = vsub.s32 %v273, %v275
        %v277 = vrot.slane %v269, %v276
        %v279 = vunpack.c.l.s4 1983009808
        %v280 = vunpack.c.0.s8 %v279
        %v281 = vlaneseq
        %v282 = vshrl.u32 %v281, 7
        %v283 = vsub.s32 %v280, %v282
        %v284 = vrot.slane %v270, %v283
        %v285 = vcombine.low %v261, %v277
        %v286 = vcombine.high %v261, %v277
        %v288 = vunpack.c.l.s4 1934713408
        %v289 = vunpack.c.0.s8 %v288
        %v290 = vlaneseq
        %v291 = vshrl.u32 %v290, 7
        %v292 = vsub.s32 %v289, %v291
        %v293 = vrot.slane %v285, %v292
        %v295 = vunpack.c.l.s4 1934713408
        %v296 = vunpack.c.0.s8 %v295
        %v297 = vlaneseq
        %v298 = vshrl.u32 %v297, 7
        %v299 = vsub.s32 %v296, %v298
        %v300 = vrot.slane %v286, %v299
        %v301 = vcombine.low %v268, %v284
        %v302 = vcombine.high %v268, %v284
        %v304 = vunpack.c.l.s4 1934713408
        %v305 = vunpack.c.0.s8 %v304
        %v306 = vlaneseq
        %v307 = vshrl.u32 %v306, 7
        %v308 = vsub.s32 %v305, %v307
        %v309 = vrot.slane %v301, %v308
        %v311 = vunpack.c.l.s4 1934713408
        %v312 = vunpack.c.0.s8 %v311
        %v313 = vlaneseq
        %v314 = vshrl.u32 %v313, 7
        %v315 = vsub.s32 %v312, %v314
        %v316 = vrot.slane %v302, %v315
        %v317 = vcombine.high %v293, 0.0
        %v318 = vcombine.high %v300, 0.0
        %v319 = vcombine.high %v309, 0.0
        %v320 = vcombine.high %v316, 0.0
        %322 = vrot.lane.b32.xlu0 %v317, 16
        %v323 = vpop.permute.xlu0 %322
        %326 = vrot.lane.b32.xlu0 %v300, 32
        %v327 = vpop.permute.xlu0 %326
        %330 = vrot.lane.b32.xlu0 %v318, 48
        %v331 = vpop.permute.xlu0 %330
        %334 = vrot.lane.b32.xlu0 %v309, 64
        %v335 = vpop.permute.xlu0 %334
        %338 = vrot.lane.b32.xlu0 %v319, 80
        %v339 = vpop.permute.xlu0 %338
        %342 = vrot.lane.b32.xlu0 %v316, 96
        %v343 = vpop.permute.xlu0 %342
        %346 = vrot.lane.b32.xlu0 %v320, 112
        %v347 = vpop.permute.xlu0 %346
        %vm349 = vcmask 130048
        %v350 = vsel %vm349, %v293, %v323
        %vm351 = vcmask 261120
        %v352 = vsel %vm351, %v350, %v327
        %vm353 = vcmask 392192
        %v354 = vsel %vm353, %v352, %v331
        %vm355 = vcmask 523264
        %v356 = vsel %vm355, %v354, %v335
        %vm357 = vcmask 654336
        %v358 = vsel %vm357, %v356, %v339
        %vm359 = vcmask 785408
        %v360 = vsel %vm359, %v358, %v343
        %vm361 = vcmask 916480
        %v362 = vsel %vm361, %v360, %v347
        %363 = vrot.lane.b32.xlu0 %v231, 125
        %v364 = vpop.permute.xlu0 %363
        %365 = vrot.lane.b32.xlu0 %v234, 125
        %v366 = vpop.permute.xlu0 %365
        %367 = vrot.lane.b32.xlu0 %v237, 125
        %v368 = vpop.permute.xlu0 %367
        %369 = vrot.lane.b32.xlu0 %v240, 125
        %v370 = vpop.permute.xlu0 %369
        %v375 = vcombine.low %v364, %v368
        %v376 = vcombine.high %v364, %v368
        %v378 = vunpack.c.l.s4 1983009808
        %v379 = vunpack.c.0.s8 %v378
        %v380 = vlaneseq
        %v381 = vshrl.u32 %v380, 7
        %v382 = vsub.s32 %v379, %v381
        %v383 = vrot.slane %v375, %v382
        %v385 = vunpack.c.l.s4 1983009808
        %v386 = vunpack.c.0.s8 %v385
        %v387 = vlaneseq
        %v388 = vshrl.u32 %v387, 7
        %v389 = vsub.s32 %v386, %v388
        %v390 = vrot.slane %v376, %v389
        %v391 = vcombine.low %v366, %v370
        %v392 = vcombine.high %v366, %v370
        %v394 = vunpack.c.l.s4 1983009808
        %v395 = vunpack.c.0.s8 %v394
        %v396 = vlaneseq
        %v397 = vshrl.u32 %v396, 7
        %v398 = vsub.s32 %v395, %v397
        %v399 = vrot.slane %v391, %v398
        %v401 = vunpack.c.l.s4 1983009808
        %v402 = vunpack.c.0.s8 %v401
        %v403 = vlaneseq
        %v404 = vshrl.u32 %v403, 7
        %v405 = vsub.s32 %v402, %v404
        %v406 = vrot.slane %v392, %v405
        %v407 = vcombine.low %v383, %v399
        %v408 = vcombine.high %v383, %v399
        %v410 = vunpack.c.l.s4 1934713408
        %v411 = vunpack.c.0.s8 %v410
        %v412 = vlaneseq
        %v413 = vshrl.u32 %v412, 7
        %v414 = vsub.s32 %v411, %v413
        %v415 = vrot.slane %v407, %v414
        %v417 = vunpack.c.l.s4 1934713408
        %v418 = vunpack.c.0.s8 %v417
        %v419 = vlaneseq
        %v420 = vshrl.u32 %v419, 7
        %v421 = vsub.s32 %v418, %v420
        %v422 = vrot.slane %v408, %v421
        %v423 = vcombine.low %v390, %v406
        %v424 = vcombine.high %v390, %v406
        %v426 = vunpack.c.l.s4 1934713408
        %v427 = vunpack.c.0.s8 %v426
        %v428 = vlaneseq
        %v429 = vshrl.u32 %v428, 7
        %v430 = vsub.s32 %v427, %v429
        %v431 = vrot.slane %v423, %v430
        %v433 = vunpack.c.l.s4 1934713408
        %v434 = vunpack.c.0.s8 %v433
        %v435 = vlaneseq
        %v436 = vshrl.u32 %v435, 7
        %v437 = vsub.s32 %v434, %v436
        %v438 = vrot.slane %v424, %v437
        %v439 = vcombine.high %v415, 0.0
        %v440 = vcombine.high %v422, 0.0
        %v441 = vcombine.high %v431, 0.0
        %v442 = vcombine.high %v438, 0.0
        %444 = vrot.lane.b32.xlu0 %v439, 16
        %v445 = vpop.permute.xlu0 %444
        %448 = vrot.lane.b32.xlu0 %v422, 32
        %v449 = vpop.permute.xlu0 %448
        %452 = vrot.lane.b32.xlu0 %v440, 48
        %v453 = vpop.permute.xlu0 %452
        %456 = vrot.lane.b32.xlu0 %v431, 64
        %v457 = vpop.permute.xlu0 %456
        %460 = vrot.lane.b32.xlu0 %v441, 80
        %v461 = vpop.permute.xlu0 %460
        %464 = vrot.lane.b32.xlu0 %v438, 96
        %v465 = vpop.permute.xlu0 %464
        %468 = vrot.lane.b32.xlu0 %v442, 112
        %v469 = vpop.permute.xlu0 %468
        %v471 = vsel %vm349, %v415, %v445
        %v472 = vsel %vm351, %v471, %v449
        %v473 = vsel %vm353, %v472, %v453
        %v474 = vsel %vm355, %v473, %v457
        %v475 = vsel %vm357, %v474, %v461
        %v476 = vsel %vm359, %v475, %v465
        %v477 = vsel %vm361, %v476, %v469
        %478 = vrot.lane.b32.xlu0 %v231, 124
        %v479 = vpop.permute.xlu0 %478
        %480 = vrot.lane.b32.xlu0 %v234, 124
        %v481 = vpop.permute.xlu0 %480
        %482 = vrot.lane.b32.xlu0 %v237, 124
        %v483 = vpop.permute.xlu0 %482
        %484 = vrot.lane.b32.xlu0 %v240, 124
        %v485 = vpop.permute.xlu0 %484
        %v490 = vcombine.low %v479, %v483
        %v491 = vcombine.high %v479, %v483
        %v493 = vunpack.c.l.s4 1983009808
        %v494 = vunpack.c.0.s8 %v493
        %v495 = vlaneseq
        %v496 = vshrl.u32 %v495, 7
        %v497 = vsub.s32 %v494, %v496
        %v498 = vrot.slane %v490, %v497
        %v500 = vunpack.c.l.s4 1983009808
        %v501 = vunpack.c.0.s8 %v500
        %v502 = vlaneseq
        %v503 = vshrl.u32 %v502, 7
        %v504 = vsub.s32 %v501, %v503
        %v505 = vrot.slane %v491, %v504
        %v506 = vcombine.low %v481, %v485
        %v507 = vcombine.high %v481, %v485
        %v509 = vunpack.c.l.s4 1983009808
        %v510 = vunpack.c.0.s8 %v509
        %v511 = vlaneseq
        %v512 = vshrl.u32 %v511, 7
        %v513 = vsub.s32 %v510, %v512
        %v514 = vrot.slane %v506, %v513
        %v516 = vunpack.c.l.s4 1983009808
        %v517 = vunpack.c.0.s8 %v516
        %v518 = vlaneseq
        %v519 = vshrl.u32 %v518, 7
        %v520 = vsub.s32 %v517, %v519
        %v521 = vrot.slane %v507, %v520
        %v522 = vcombine.low %v498, %v514
        %v523 = vcombine.high %v498, %v514
        %v525 = vunpack.c.l.s4 1934713408
        %v526 = vunpack.c.0.s8 %v525
        %v527 = vlaneseq
        %v528 = vshrl.u32 %v527, 7
        %v529 = vsub.s32 %v526, %v528
        %v530 = vrot.slane %v522, %v529
        %v532 = vunpack.c.l.s4 1934713408
        %v533 = vunpack.c.0.s8 %v532
        %v534 = vlaneseq
        %v535 = vshrl.u32 %v534, 7
        %v536 = vsub.s32 %v533, %v535
        %v537 = vrot.slane %v523, %v536
        %v538 = vcombine.low %v505, %v521
        %v539 = vcombine.high %v505, %v521
        %v541 = vunpack.c.l.s4 1934713408
        %v542 = vunpack.c.0.s8 %v541
        %v543 = vlaneseq
        %v544 = vshrl.u32 %v543, 7
        %v545 = vsub.s32 %v542, %v544
        %v546 = vrot.slane %v538, %v545
        %v548 = vunpack.c.l.s4 1934713408
        %v549 = vunpack.c.0.s8 %v548
        %v550 = vlaneseq
        %v551 = vshrl.u32 %v550, 7
        %v552 = vsub.s32 %v549, %v551
        %v553 = vrot.slane %v539, %v552
        %v554 = vcombine.high %v530, 0.0
        %v555 = vcombine.high %v537, 0.0
        %v556 = vcombine.high %v546, 0.0
        %v557 = vcombine.high %v553, 0.0
        %559 = vrot.lane.b32.xlu0 %v554, 16
        %v560 = vpop.permute.xlu0 %559
        %563 = vrot.lane.b32.xlu0 %v537, 32
        %v564 = vpop.permute.xlu0 %563
        %567 = vrot.lane.b32.xlu0 %v555, 48
        %v568 = vpop.permute.xlu0 %567
        %571 = vrot.lane.b32.xlu0 %v546, 64
        %v572 = vpop.permute.xlu0 %571
        %575 = vrot.lane.b32.xlu0 %v556, 80
        %v576 = vpop.permute.xlu0 %575
        %579 = vrot.lane.b32.xlu0 %v553, 96
        %v580 = vpop.permute.xlu0 %579
        %583 = vrot.lane.b32.xlu0 %v557, 112
        %v584 = vpop.permute.xlu0 %583
        %v586 = vsel %vm349, %v530, %v560
        %v587 = vsel %vm351, %v586, %v564
        %v588 = vsel %vm353, %v587, %v568
        %v589 = vsel %vm355, %v588, %v572
        %v590 = vsel %vm357, %v589, %v576
        %v591 = vsel %vm359, %v590, %v580
        %v592 = vsel %vm361, %v591, %v584
        %vm593 = vcmask 1044480
        %v594 = vrot.slane %v212, 3
        %v595 = vrot.slane %v213, 3
        %v596 = vsel %vm593, %v594, %v595
        %v597 = vrot.slane %v214, 3
        %v598 = vrot.slane %v215, 3
        %v599 = vsel %vm593, %v597, %v598
        %v600 = vrot.slane %v216, 3
        %v601 = vrot.slane %v217, 3
        %v602 = vsel %vm593, %v600, %v601
        %v603 = vrot.slane %v218, 3
        %v604 = vrot.slane %v219, 3
        %v605 = vsel %vm593, %v603, %v604
        %606 = vrot.lane.b32.xlu0 %v596, 126
        %v607 = vpop.permute.xlu0 %606
        %608 = vrot.lane.b32.xlu0 %v599, 126
        %v609 = vpop.permute.xlu0 %608
        %610 = vrot.lane.b32.xlu0 %v602, 126
        %v611 = vpop.permute.xlu0 %610
        %612 = vrot.lane.b32.xlu0 %v605, 126
        %v613 = vpop.permute.xlu0 %612
        %v618 = vcombine.low %v607, %v611
        %v619 = vcombine.high %v607, %v611
        %v621 = vunpack.c.l.s4 1983009808
        %v622 = vunpack.c.0.s8 %v621
        %v623 = vlaneseq
        %v624 = vshrl.u32 %v623, 7
        %v625 = vsub.s32 %v622, %v624
        %v626 = vrot.slane %v618, %v625
        %v628 = vunpack.c.l.s4 1983009808
        %v629 = vunpack.c.0.s8 %v628
        %v630 = vlaneseq
        %v631 = vshrl.u32 %v630, 7
        %v632 = vsub.s32 %v629, %v631
        %v633 = vrot.slane %v619, %v632
        %v634 = vcombine.low %v609, %v613
        %v635 = vcombine.high %v609, %v613
        %v637 = vunpack.c.l.s4 1983009808
        %v638 = vunpack.c.0.s8 %v637
        %v639 = vlaneseq
        %v640 = vshrl.u32 %v639, 7
        %v641 = vsub.s32 %v638, %v640
        %v642 = vrot.slane %v634, %v641
        %v644 = vunpack.c.l.s4 1983009808
        %v645 = vunpack.c.0.s8 %v644
        %v646 = vlaneseq
        %v647 = vshrl.u32 %v646, 7
        %v648 = vsub.s32 %v645, %v647
        %v649 = vrot.slane %v635, %v648
        %v650 = vcombine.low %v626, %v642
        %v651 = vcombine.high %v626, %v642
        %v653 = vunpack.c.l.s4 1934713408
        %v654 = vunpack.c.0.s8 %v653
        %v655 = vlaneseq
        %v656 = vshrl.u32 %v655, 7
        %v657 = vsub.s32 %v654, %v656
        %v658 = vrot.slane %v650, %v657
        %v660 = vunpack.c.l.s4 1934713408
        %v661 = vunpack.c.0.s8 %v660
        %v662 = vlaneseq
        %v663 = vshrl.u32 %v662, 7
        %v664 = vsub.s32 %v661, %v663
        %v665 = vrot.slane %v651, %v664
        %v666 = vcombine.low %v633, %v649
        %v667 = vcombine.high %v633, %v649
        %v669 = vunpack.c.l.s4 1934713408
        %v670 = vunpack.c.0.s8 %v669
        %v671 = vlaneseq
        %v672 = vshrl.u32 %v671, 7
        %v673 = vsub.s32 %v670, %v672
        %v674 = vrot.slane %v666, %v673
        %v676 = vunpack.c.l.s4 1934713408
        %v677 = vunpack.c.0.s8 %v676
        %v678 = vlaneseq
        %v679 = vshrl.u32 %v678, 7
        %v680 = vsub.s32 %v677, %v679
        %v681 = vrot.slane %v667, %v680
        %v682 = vcombine.high %v658, 0.0
        %v683 = vcombine.high %v665, 0.0
        %v684 = vcombine.high %v674, 0.0
        %v685 = vcombine.high %v681, 0.0
        %687 = vrot.lane.b32.xlu0 %v682, 16
        %v688 = vpop.permute.xlu0 %687
        %691 = vrot.lane.b32.xlu0 %v665, 32
        %v692 = vpop.permute.xlu0 %691
        %695 = vrot.lane.b32.xlu0 %v683, 48
        %v696 = vpop.permute.xlu0 %695
        %699 = vrot.lane.b32.xlu0 %v674, 64
        %v700 = vpop.permute.xlu0 %699
        %703 = vrot.lane.b32.xlu0 %v684, 80
        %v704 = vpop.permute.xlu0 %703
        %707 = vrot.lane.b32.xlu0 %v681, 96
        %v708 = vpop.permute.xlu0 %707
        %711 = vrot.lane.b32.xlu0 %v685, 112
        %v712 = vpop.permute.xlu0 %711
        %v714 = vsel %vm349, %v658, %v688
        %v715 = vsel %vm351, %v714, %v692
        %v716 = vsel %vm353, %v715, %v696
        %v717 = vsel %vm355, %v716, %v700
        %v718 = vsel %vm357, %v717, %v704
        %v719 = vsel %vm359, %v718, %v708
        %v720 = vsel %vm361, %v719, %v712
        %721 = vrot.lane.b32.xlu0 %v596, 125
        %v722 = vpop.permute.xlu0 %721
        %723 = vrot.lane.b32.xlu0 %v599, 125
        %v724 = vpop.permute.xlu0 %723
        %725 = vrot.lane.b32.xlu0 %v602, 125
        %v726 = vpop.permute.xlu0 %725
        %727 = vrot.lane.b32.xlu0 %v605, 125
        %v728 = vpop.permute.xlu0 %727
        %v733 = vcombine.low %v722, %v726
        %v734 = vcombine.high %v722, %v726
        %v736 = vunpack.c.l.s4 1983009808
        %v737 = vunpack.c.0.s8 %v736
        %v738 = vlaneseq
        %v739 = vshrl.u32 %v738, 7
        %v740 = vsub.s32 %v737, %v739
        %v741 = vrot.slane %v733, %v740
        %v743 = vunpack.c.l.s4 1983009808
        %v744 = vunpack.c.0.s8 %v743
        %v745 = vlaneseq
        %v746 = vshrl.u32 %v745, 7
        %v747 = vsub.s32 %v744, %v746
        %v748 = vrot.slane %v734, %v747
        %v749 = vcombine.low %v724, %v728
        %v750 = vcombine.high %v724, %v728
        %v752 = vunpack.c.l.s4 1983009808
        %v753 = vunpack.c.0.s8 %v752
        %v754 = vlaneseq
        %v755 = vshrl.u32 %v754, 7
        %v756 = vsub.s32 %v753, %v755
        %v757 = vrot.slane %v749, %v756
        %v759 = vunpack.c.l.s4 1983009808
        %v760 = vunpack.c.0.s8 %v759
        %v761 = vlaneseq
        %v762 = vshrl.u32 %v761, 7
        %v763 = vsub.s32 %v760, %v762
        %v764 = vrot.slane %v750, %v763
        %v765 = vcombine.low %v741, %v757
        %v766 = vcombine.high %v741, %v757
        %v768 = vunpack.c.l.s4 1934713408
        %v769 = vunpack.c.0.s8 %v768
        %v770 = vlaneseq
        %v771 = vshrl.u32 %v770, 7
        %v772 = vsub.s32 %v769, %v771
        %v773 = vrot.slane %v765, %v772
        %v775 = vunpack.c.l.s4 1934713408
        %v776 = vunpack.c.0.s8 %v775
        %v777 = vlaneseq
        %v778 = vshrl.u32 %v777, 7
        %v779 = vsub.s32 %v776, %v778
        %v780 = vrot.slane %v766, %v779
        %v781 = vcombine.low %v748, %v764
        %v782 = vcombine.high %v748, %v764
        %v784 = vunpack.c.l.s4 1934713408
        %v785 = vunpack.c.0.s8 %v784
        %v786 = vlaneseq
        %v787 = vshrl.u32 %v786, 7
        %v788 = vsub.s32 %v785, %v787
        %v789 = vrot.slane %v781, %v788
        %v791 = vunpack.c.l.s4 1934713408
        %v792 = vunpack.c.0.s8 %v791
        %v793 = vlaneseq
        %v794 = vshrl.u32 %v793, 7
        %v795 = vsub.s32 %v792, %v794
        %v796 = vrot.slane %v782, %v795
        %v797 = vcombine.high %v773, 0.0
        %v798 = vcombine.high %v780, 0.0
        %v799 = vcombine.high %v789, 0.0
        %v800 = vcombine.high %v796, 0.0
        %802 = vrot.lane.b32.xlu0 %v797, 16
        %v803 = vpop.permute.xlu0 %802
        %806 = vrot.lane.b32.xlu0 %v780, 32
        %v807 = vpop.permute.xlu0 %806
        %810 = vrot.lane.b32.xlu0 %v798, 48
        %v811 = vpop.permute.xlu0 %810
        %814 = vrot.lane.b32.xlu0 %v789, 64
        %v815 = vpop.permute.xlu0 %814
        %818 = vrot.lane.b32.xlu0 %v799, 80
        %v819 = vpop.permute.xlu0 %818
        %822 = vrot.lane.b32.xlu0 %v796, 96
        %v823 = vpop.permute.xlu0 %822
        %826 = vrot.lane.b32.xlu0 %v800, 112
        %v827 = vpop.permute.xlu0 %826
        %v829 = vsel %vm349, %v773, %v803
        %v830 = vsel %vm351, %v829, %v807
        %v831 = vsel %vm353, %v830, %v811
        %v832 = vsel %vm355, %v831, %v815
        %v833 = vsel %vm357, %v832, %v819
        %v834 = vsel %vm359, %v833, %v823
        %v835 = vsel %vm361, %v834, %v827
        %836 = vrot.lane.b32.xlu0 %v596, 124
        %v837 = vpop.permute.xlu0 %836
        %838 = vrot.lane.b32.xlu0 %v599, 124
        %v839 = vpop.permute.xlu0 %838
        %840 = vrot.lane.b32.xlu0 %v602, 124
        %v841 = vpop.permute.xlu0 %840
        %842 = vrot.lane.b32.xlu0 %v605, 124
        %v843 = vpop.permute.xlu0 %842
        %v848 = vcombine.low %v837, %v841
        %v849 = vcombine.high %v837, %v841
        %v851 = vunpack.c.l.s4 1983009808
        %v852 = vunpack.c.0.s8 %v851
        %v853 = vlaneseq
        %v854 = vshrl.u32 %v853, 7
        %v855 = vsub.s32 %v852, %v854
        %v856 = vrot.slane %v848, %v855
        %v858 = vunpack.c.l.s4 1983009808
        %v859 = vunpack.c.0.s8 %v858
        %v860 = vlaneseq
        %v861 = vshrl.u32 %v860, 7
        %v862 = vsub.s32 %v859, %v861
        %v863 = vrot.slane %v849, %v862
        %v864 = vcombine.low %v839, %v843
        %v865 = vcombine.high %v839, %v843
        %v867 = vunpack.c.l.s4 1983009808
        %v868 = vunpack.c.0.s8 %v867
        %v869 = vlaneseq
        %v870 = vshrl.u32 %v869, 7
        %v871 = vsub.s32 %v868, %v870
        %v872 = vrot.slane %v864, %v871
        %v874 = vunpack.c.l.s4 1983009808
        %v875 = vunpack.c.0.s8 %v874
        %v876 = vlaneseq
        %v877 = vshrl.u32 %v876, 7
        %v878 = vsub.s32 %v875, %v877
        %v879 = vrot.slane %v865, %v878
        %v880 = vcombine.low %v856, %v872
        %v881 = vcombine.high %v856, %v872
        %v883 = vunpack.c.l.s4 1934713408
        %v884 = vunpack.c.0.s8 %v883
        %v885 = vlaneseq
        %v886 = vshrl.u32 %v885, 7
        %v887 = vsub.s32 %v884, %v886
        %v888 = vrot.slane %v880, %v887
        %v890 = vunpack.c.l.s4 1934713408
        %v891 = vunpack.c.0.s8 %v890
        %v892 = vlaneseq
        %v893 = vshrl.u32 %v892, 7
        %v894 = vsub.s32 %v891, %v893
        %v895 = vrot.slane %v881, %v894
        %v896 = vcombine.low %v863, %v879
        %v897 = vcombine.high %v863, %v879
        %v899 = vunpack.c.l.s4 1934713408
        %v900 = vunpack.c.0.s8 %v899
        %v901 = vlaneseq
        %v902 = vshrl.u32 %v901, 7
        %v903 = vsub.s32 %v900, %v902
        %v904 = vrot.slane %v896, %v903
        %v906 = vunpack.c.l.s4 1934713408
        %v907 = vunpack.c.0.s8 %v906
        %v908 = vlaneseq
        %v909 = vshrl.u32 %v908, 7
        %v910 = vsub.s32 %v907, %v909
        %v911 = vrot.slane %v897, %v910
        %v912 = vcombine.high %v888, 0.0
        %v913 = vcombine.high %v895, 0.0
        %v914 = vcombine.high %v904, 0.0
        %v915 = vcombine.high %v911, 0.0
        %917 = vrot.lane.b32.xlu0 %v912, 16
        %v918 = vpop.permute.xlu0 %917
        %921 = vrot.lane.b32.xlu0 %v895, 32
        %v922 = vpop.permute.xlu0 %921
        %925 = vrot.lane.b32.xlu0 %v913, 48
        %v926 = vpop.permute.xlu0 %925
        %929 = vrot.lane.b32.xlu0 %v904, 64
        %v930 = vpop.permute.xlu0 %929
        %933 = vrot.lane.b32.xlu0 %v914, 80
        %v934 = vpop.permute.xlu0 %933
        %937 = vrot.lane.b32.xlu0 %v911, 96
        %v938 = vpop.permute.xlu0 %937
        %941 = vrot.lane.b32.xlu0 %v915, 112
        %v942 = vpop.permute.xlu0 %941
        %v944 = vsel %vm349, %v888, %v918
        %v945 = vsel %vm351, %v944, %v922
        %v946 = vsel %vm353, %v945, %v926
        %v947 = vsel %vm355, %v946, %v930
        %v948 = vsel %vm357, %v947, %v934
        %v949 = vsel %vm359, %v948, %v938
        %v950 = vsel %vm361, %v949, %v942
        %vm951 = vcmask 1043456
        %v952 = vrot.slane %v212, 4
        %v953 = vrot.slane %v213, 4
        %v954 = vsel %vm951, %v952, %v953
        %v955 = vrot.slane %v214, 4
        %v956 = vrot.slane %v215, 4
        %v957 = vsel %vm951, %v955, %v956
        %v958 = vrot.slane %v216, 4
        %v959 = vrot.slane %v217, 4
        %v960 = vsel %vm951, %v958, %v959
        %v961 = vrot.slane %v218, 4
        %v962 = vrot.slane %v219, 4
        %v963 = vsel %vm951, %v961, %v962
        %964 = vrot.lane.b32.xlu0 %v954, 126
        %v965 = vpop.permute.xlu0 %964
        %966 = vrot.lane.b32.xlu0 %v957, 126
        %v967 = vpop.permute.xlu0 %966
        %968 = vrot.lane.b32.xlu0 %v960, 126
        %v969 = vpop.permute.xlu0 %968
        %970 = vrot.lane.b32.xlu0 %v963, 126
        %v971 = vpop.permute.xlu0 %970
        %v976 = vcombine.low %v965, %v969
        %v977 = vcombine.high %v965, %v969
        %v979 = vunpack.c.l.s4 1983009808
        %v980 = vunpack.c.0.s8 %v979
        %v981 = vlaneseq
        %v982 = vshrl.u32 %v981, 7
        %v983 = vsub.s32 %v980, %v982
        %v984 = vrot.slane %v976, %v983
        %v986 = vunpack.c.l.s4 1983009808
        %v987 = vunpack.c.0.s8 %v986
        %v988 = vlaneseq
        %v989 = vshrl.u32 %v988, 7
        %v990 = vsub.s32 %v987, %v989
        %v991 = vrot.slane %v977, %v990
        %v992 = vcombine.low %v967, %v971
        %v993 = vcombine.high %v967, %v971
        %v995 = vunpack.c.l.s4 1983009808
        %v996 = vunpack.c.0.s8 %v995
        %v997 = vlaneseq
        %v998 = vshrl.u32 %v997, 7
        %v999 = vsub.s32 %v996, %v998
        %v1000 = vrot.slane %v992, %v999
        %v1002 = vunpack.c.l.s4 1983009808
        %v1003 = vunpack.c.0.s8 %v1002
        %v1004 = vlaneseq
        %v1005 = vshrl.u32 %v1004, 7
        %v1006 = vsub.s32 %v1003, %v1005
        %v1007 = vrot.slane %v993, %v1006
        %v1008 = vcombine.low %v984, %v1000
        %v1009 = vcombine.high %v984, %v1000
        %v1011 = vunpack.c.l.s4 1934713408
        %v1012 = vunpack.c.0.s8 %v1011
        %v1013 = vlaneseq
        %v1014 = vshrl.u32 %v1013, 7
        %v1015 = vsub.s32 %v1012, %v1014
        %v1016 = vrot.slane %v1008, %v1015
        %v1018 = vunpack.c.l.s4 1934713408
        %v1019 = vunpack.c.0.s8 %v1018
        %v1020 = vlaneseq
        %v1021 = vshrl.u32 %v1020, 7
        %v1022 = vsub.s32 %v1019, %v1021
        %v1023 = vrot.slane %v1009, %v1022
        %v1024 = vcombine.low %v991, %v1007
        %v1025 = vcombine.high %v991, %v1007
        %v1027 = vunpack.c.l.s4 1934713408
        %v1028 = vunpack.c.0.s8 %v1027
        %v1029 = vlaneseq
        %v1030 = vshrl.u32 %v1029, 7
        %v1031 = vsub.s32 %v1028, %v1030
        %v1032 = vrot.slane %v1024, %v1031
        %v1034 = vunpack.c.l.s4 1934713408
        %v1035 = vunpack.c.0.s8 %v1034
        %v1036 = vlaneseq
        %v1037 = vshrl.u32 %v1036, 7
        %v1038 = vsub.s32 %v1035, %v1037
        %v1039 = vrot.slane %v1025, %v1038
        %v1040 = vcombine.high %v1016, 0.0
        %v1041 = vcombine.high %v1023, 0.0
        %v1042 = vcombine.high %v1032, 0.0
        %v1043 = vcombine.high %v1039, 0.0
        %1045 = vrot.lane.b32.xlu0 %v1040, 16
        %v1046 = vpop.permute.xlu0 %1045
        %1049 = vrot.lane.b32.xlu0 %v1023, 32
        %v1050 = vpop.permute.xlu0 %1049
        %1053 = vrot.lane.b32.xlu0 %v1041, 48
        %v1054 = vpop.permute.xlu0 %1053
        %1057 = vrot.lane.b32.xlu0 %v1032, 64
        %v1058 = vpop.permute.xlu0 %1057
        %1061 = vrot.lane.b32.xlu0 %v1042, 80
        %v1062 = vpop.permute.xlu0 %1061
        %1065 = vrot.lane.b32.xlu0 %v1039, 96
        %v1066 = vpop.permute.xlu0 %1065
        %1069 = vrot.lane.b32.xlu0 %v1043, 112
        %v1070 = vpop.permute.xlu0 %1069
        %v1072 = vsel %vm349, %v1016, %v1046
        %v1073 = vsel %vm351, %v1072, %v1050
        %v1074 = vsel %vm353, %v1073, %v1054
        %v1075 = vsel %vm355, %v1074, %v1058
        %v1076 = vsel %vm357, %v1075, %v1062
        %v1077 = vsel %vm359, %v1076, %v1066
        %v1078 = vsel %vm361, %v1077, %v1070
        %1079 = vrot.lane.b32.xlu0 %v954, 125
        %v1080 = vpop.permute.xlu0 %1079
        %1081 = vrot.lane.b32.xlu0 %v957, 125
        %v1082 = vpop.permute.xlu0 %1081
        %1083 = vrot.lane.b32.xlu0 %v960, 125
        %v1084 = vpop.permute.xlu0 %1083
        %1085 = vrot.lane.b32.xlu0 %v963, 125
        %v1086 = vpop.permute.xlu0 %1085
        %v1091 = vcombine.low %v1080, %v1084
        %v1092 = vcombine.high %v1080, %v1084
        %v1094 = vunpack.c.l.s4 1983009808
        %v1095 = vunpack.c.0.s8 %v1094
        %v1096 = vlaneseq
        %v1097 = vshrl.u32 %v1096, 7
        %v1098 = vsub.s32 %v1095, %v1097
        %v1099 = vrot.slane %v1091, %v1098
        %v1101 = vunpack.c.l.s4 1983009808
        %v1102 = vunpack.c.0.s8 %v1101
        %v1103 = vlaneseq
        %v1104 = vshrl.u32 %v1103, 7
        %v1105 = vsub.s32 %v1102, %v1104
        %v1106 = vrot.slane %v1092, %v1105
        %v1107 = vcombine.low %v1082, %v1086
        %v1108 = vcombine.high %v1082, %v1086
        %v1110 = vunpack.c.l.s4 1983009808
        %v1111 = vunpack.c.0.s8 %v1110
        %v1112 = vlaneseq
        %v1113 = vshrl.u32 %v1112, 7
        %v1114 = vsub.s32 %v1111, %v1113
        %v1115 = vrot.slane %v1107, %v1114
        %v1117 = vunpack.c.l.s4 1983009808
        %v1118 = vunpack.c.0.s8 %v1117
        %v1119 = vlaneseq
        %v1120 = vshrl.u32 %v1119, 7
        %v1121 = vsub.s32 %v1118, %v1120
        %v1122 = vrot.slane %v1108, %v1121
        %v1123 = vcombine.low %v1099, %v1115
        %v1124 = vcombine.high %v1099, %v1115
        %v1126 = vunpack.c.l.s4 1934713408
        %v1127 = vunpack.c.0.s8 %v1126
        %v1128 = vlaneseq
        %v1129 = vshrl.u32 %v1128, 7
        %v1130 = vsub.s32 %v1127, %v1129
        %v1131 = vrot.slane %v1123, %v1130
        %v1133 = vunpack.c.l.s4 1934713408
        %v1134 = vunpack.c.0.s8 %v1133
        %v1135 = vlaneseq
        %v1136 = vshrl.u32 %v1135, 7
        %v1137 = vsub.s32 %v1134, %v1136
        %v1138 = vrot.slane %v1124, %v1137
        %v1139 = vcombine.low %v1106, %v1122
        %v1140 = vcombine.high %v1106, %v1122
        %v1142 = vunpack.c.l.s4 1934713408
        %v1143 = vunpack.c.0.s8 %v1142
        %v1144 = vlaneseq
        %v1145 = vshrl.u32 %v1144, 7
        %v1146 = vsub.s32 %v1143, %v1145
        %v1147 = vrot.slane %v1139, %v1146
        %v1149 = vunpack.c.l.s4 1934713408
        %v1150 = vunpack.c.0.s8 %v1149
        %v1151 = vlaneseq
        %v1152 = vshrl.u32 %v1151, 7
        %v1153 = vsub.s32 %v1150, %v1152
        %v1154 = vrot.slane %v1140, %v1153
        %v1155 = vcombine.high %v1131, 0.0
        %v1156 = vcombine.high %v1138, 0.0
        %v1157 = vcombine.high %v1147, 0.0
        %v1158 = vcombine.high %v1154, 0.0
        %1160 = vrot.lane.b32.xlu0 %v1155, 16
        %v1161 = vpop.permute.xlu0 %1160
        %1164 = vrot.lane.b32.xlu0 %v1138, 32
        %v1165 = vpop.permute.xlu0 %1164
        %1168 = vrot.lane.b32.xlu0 %v1156, 48
        %v1169 = vpop.permute.xlu0 %1168
        %1172 = vrot.lane.b32.xlu0 %v1147, 64
        %v1173 = vpop.permute.xlu0 %1172
        %1176 = vrot.lane.b32.xlu0 %v1157, 80
        %v1177 = vpop.permute.xlu0 %1176
        %1180 = vrot.lane.b32.xlu0 %v1154, 96
        %v1181 = vpop.permute.xlu0 %1180
        %1184 = vrot.lane.b32.xlu0 %v1158, 112
        %v1185 = vpop.permute.xlu0 %1184
        %v1187 = vsel %vm349, %v1131, %v1161
        %v1188 = vsel %vm351, %v1187, %v1165
        %v1189 = vsel %vm353, %v1188, %v1169
        %v1190 = vsel %vm355, %v1189, %v1173
        %v1191 = vsel %vm357, %v1190, %v1177
        %v1192 = vsel %vm359, %v1191, %v1181
        %v1193 = vsel %vm361, %v1192, %v1185
        %1194 = vrot.lane.b32.xlu0 %v954, 124
        %v1195 = vpop.permute.xlu0 %1194
        %1196 = vrot.lane.b32.xlu0 %v957, 124
        %v1197 = vpop.permute.xlu0 %1196
        %1198 = vrot.lane.b32.xlu0 %v960, 124
        %v1199 = vpop.permute.xlu0 %1198
        %1200 = vrot.lane.b32.xlu0 %v963, 124
        %v1201 = vpop.permute.xlu0 %1200
        %v1206 = vcombine.low %v1195, %v1199
        %v1207 = vcombine.high %v1195, %v1199
        %v1209 = vunpack.c.l.s4 1983009808
        %v1210 = vunpack.c.0.s8 %v1209
        %v1211 = vlaneseq
        %v1212 = vshrl.u32 %v1211, 7
        %v1213 = vsub.s32 %v1210, %v1212
        %v1214 = vrot.slane %v1206, %v1213
        %v1216 = vunpack.c.l.s4 1983009808
        %v1217 = vunpack.c.0.s8 %v1216
        %v1218 = vlaneseq
        %v1219 = vshrl.u32 %v1218, 7
        %v1220 = vsub.s32 %v1217, %v1219
        %v1221 = vrot.slane %v1207, %v1220
        %v1222 = vcombine.low %v1197, %v1201
        %v1223 = vcombine.high %v1197, %v1201
        %v1225 = vunpack.c.l.s4 1983009808
        %v1226 = vunpack.c.0.s8 %v1225
        %v1227 = vlaneseq
        %v1228 = vshrl.u32 %v1227, 7
        %v1229 = vsub.s32 %v1226, %v1228
        %v1230 = vrot.slane %v1222, %v1229
        %v1232 = vunpack.c.l.s4 1983009808
        %v1233 = vunpack.c.0.s8 %v1232
        %v1234 = vlaneseq
        %v1235 = vshrl.u32 %v1234, 7
        %v1236 = vsub.s32 %v1233, %v1235
        %v1237 = vrot.slane %v1223, %v1236
        %v1238 = vcombine.low %v1214, %v1230
        %v1239 = vcombine.high %v1214, %v1230
        %v1241 = vunpack.c.l.s4 1934713408
        %v1242 = vunpack.c.0.s8 %v1241
        %v1243 = vlaneseq
        %v1244 = vshrl.u32 %v1243, 7
        %v1245 = vsub.s32 %v1242, %v1244
        %v1246 = vrot.slane %v1238, %v1245
        %v1248 = vunpack.c.l.s4 1934713408
        %v1249 = vunpack.c.0.s8 %v1248
        %v1250 = vlaneseq
        %v1251 = vshrl.u32 %v1250, 7
        %v1252 = vsub.s32 %v1249, %v1251
        %v1253 = vrot.slane %v1239, %v1252
        %v1254 = vcombine.low %v1221, %v1237
        %v1255 = vcombine.high %v1221, %v1237
        %v1257 = vunpack.c.l.s4 1934713408
        %v1258 = vunpack.c.0.s8 %v1257
        %v1259 = vlaneseq
        %v1260 = vshrl.u32 %v1259, 7
        %v1261 = vsub.s32 %v1258, %v1260
        %v1262 = vrot.slane %v1254, %v1261
        %v1264 = vunpack.c.l.s4 1934713408
        %v1265 = vunpack.c.0.s8 %v1264
        %v1266 = vlaneseq
        %v1267 = vshrl.u32 %v1266, 7
        %v1268 = vsub.s32 %v1265, %v1267
        %v1269 = vrot.slane %v1255, %v1268
        %v1270 = vcombine.high %v1246, 0.0
        %v1271 = vcombine.high %v1253, 0.0
        %v1272 = vcombine.high %v1262, 0.0
        %v1273 = vcombine.high %v1269, 0.0
        %1275 = vrot.lane.b32.xlu0 %v1270, 16
        %v1276 = vpop.permute.xlu0 %1275
        %1279 = vrot.lane.b32.xlu0 %v1253, 32
        %v1280 = vpop.permute.xlu0 %1279
        %1283 = vrot.lane.b32.xlu0 %v1271, 48
        %v1284 = vpop.permute.xlu0 %1283
        %1287 = vrot.lane.b32.xlu0 %v1262, 64
        %v1288 = vpop.permute.xlu0 %1287
        %1291 = vrot.lane.b32.xlu0 %v1272, 80
        %v1292 = vpop.permute.xlu0 %1291
        %1295 = vrot.lane.b32.xlu0 %v1269, 96
        %v1296 = vpop.permute.xlu0 %1295
        %1299 = vrot.lane.b32.xlu0 %v1273, 112
        %v1300 = vpop.permute.xlu0 %1299
        %v1302 = vsel %vm349, %v1246, %v1276
        %v1303 = vsel %vm351, %v1302, %v1280
        %v1304 = vsel %vm353, %v1303, %v1284
        %v1305 = vsel %vm355, %v1304, %v1288
        %v1306 = vsel %vm357, %v1305, %v1292
        %v1307 = vsel %vm359, %v1306, %v1296
        %v1308 = vsel %vm361, %v1307, %v1300
        %vm1309 = vcmask 1046528
        %v1310 = vrot.slane %v212, 1
        %v1311 = vrot.slane %v213, 1
        %v1312 = vsel %vm1309, %v1310, %v1311
        %v1313 = vrot.slane %v214, 1
        %v1314 = vrot.slane %v215, 1
        %v1315 = vsel %vm1309, %v1313, %v1314
        %v1316 = vrot.slane %v216, 1
        %v1317 = vrot.slane %v217, 1
        %v1318 = vsel %vm1309, %v1316, %v1317
        %v1319 = vrot.slane %v218, 1
        %v1320 = vrot.slane %v219, 1
        %v1321 = vsel %vm1309, %v1319, %v1320
        %1322 = vrot.lane.b32.xlu0 %v1312, 127
        %v1323 = vpop.permute.xlu0 %1322
        %1324 = vrot.lane.b32.xlu0 %v1315, 127
        %v1325 = vpop.permute.xlu0 %1324
        %1326 = vrot.lane.b32.xlu0 %v1318, 127
        %v1327 = vpop.permute.xlu0 %1326
        %1328 = vrot.lane.b32.xlu0 %v1321, 127
        %v1329 = vpop.permute.xlu0 %1328
        %v1334 = vcombine.low %v1323, %v1327
        %v1335 = vcombine.high %v1323, %v1327
        %v1337 = vunpack.c.l.s4 1983009808
        %v1338 = vunpack.c.0.s8 %v1337
        %v1339 = vlaneseq
        %v1340 = vshrl.u32 %v1339, 7
        %v1341 = vsub.s32 %v1338, %v1340
        %v1342 = vrot.slane %v1334, %v1341
        %v1344 = vunpack.c.l.s4 1983009808
        %v1345 = vunpack.c.0.s8 %v1344
        %v1346 = vlaneseq
        %v1347 = vshrl.u32 %v1346, 7
        %v1348 = vsub.s32 %v1345, %v1347
        %v1349 = vrot.slane %v1335, %v1348
        %v1350 = vcombine.low %v1325, %v1329
        %v1351 = vcombine.high %v1325, %v1329
        %v1353 = vunpack.c.l.s4 1983009808
        %v1354 = vunpack.c.0.s8 %v1353
        %v1355 = vlaneseq
        %v1356 = vshrl.u32 %v1355, 7
        %v1357 = vsub.s32 %v1354, %v1356
        %v1358 = vrot.slane %v1350, %v1357
        %v1360 = vunpack.c.l.s4 1983009808
        %v1361 = vunpack.c.0.s8 %v1360
        %v1362 = vlaneseq
        %v1363 = vshrl.u32 %v1362, 7
        %v1364 = vsub.s32 %v1361, %v1363
        %v1365 = vrot.slane %v1351, %v1364
        %v1366 = vcombine.low %v1342, %v1358
        %v1367 = vcombine.high %v1342, %v1358
        %v1369 = vunpack.c.l.s4 1934713408
        %v1370 = vunpack.c.0.s8 %v1369
        %v1371 = vlaneseq
        %v1372 = vshrl.u32 %v1371, 7
        %v1373 = vsub.s32 %v1370, %v1372
        %v1374 = vrot.slane %v1366, %v1373
        %v1376 = vunpack.c.l.s4 1934713408
        %v1377 = vunpack.c.0.s8 %v1376
        %v1378 = vlaneseq
        %v1379 = vshrl.u32 %v1378, 7
        %v1380 = vsub.s32 %v1377, %v1379
        %v1381 = vrot.slane %v1367, %v1380
        %v1382 = vcombine.low %v1349, %v1365
        %v1383 = vcombine.high %v1349, %v1365
        %v1385 = vunpack.c.l.s4 1934713408
        %v1386 = vunpack.c.0.s8 %v1385
        %v1387 = vlaneseq
        %v1388 = vshrl.u32 %v1387, 7
        %v1389 = vsub.s32 %v1386, %v1388
        %v1390 = vrot.slane %v1382, %v1389
        %v1392 = vunpack.c.l.s4 1934713408
        %v1393 = vunpack.c.0.s8 %v1392
        %v1394 = vlaneseq
        %v1395 = vshrl.u32 %v1394, 7
        %v1396 = vsub.s32 %v1393, %v1395
        %v1397 = vrot.slane %v1383, %v1396
        %v1398 = vcombine.high %v1374, 0.0
        %v1399 = vcombine.high %v1381, 0.0
        %v1400 = vcombine.high %v1390, 0.0
        %v1401 = vcombine.high %v1397, 0.0
        %1403 = vrot.lane.b32.xlu0 %v1398, 16
        %v1404 = vpop.permute.xlu0 %1403
        %1407 = vrot.lane.b32.xlu0 %v1381, 32
        %v1408 = vpop.permute.xlu0 %1407
        %1411 = vrot.lane.b32.xlu0 %v1399, 48
        %v1412 = vpop.permute.xlu0 %1411
        %1415 = vrot.lane.b32.xlu0 %v1390, 64
        %v1416 = vpop.permute.xlu0 %1415
        %1419 = vrot.lane.b32.xlu0 %v1400, 80
        %v1420 = vpop.permute.xlu0 %1419
        %1423 = vrot.lane.b32.xlu0 %v1397, 96
        %v1424 = vpop.permute.xlu0 %1423
        %1427 = vrot.lane.b32.xlu0 %v1401, 112
        %v1428 = vpop.permute.xlu0 %1427
        %v1430 = vsel %vm349, %v1374, %v1404
        %v1431 = vsel %vm351, %v1430, %v1408
        %v1432 = vsel %vm353, %v1431, %v1412
        %v1433 = vsel %vm355, %v1432, %v1416
        %v1434 = vsel %vm357, %v1433, %v1420
        %v1435 = vsel %vm359, %v1434, %v1424
        %v1436 = vsel %vm361, %v1435, %v1428
        %1437 = vrot.lane.b32.xlu0 %v1312, 126
        %v1438 = vpop.permute.xlu0 %1437
        %1439 = vrot.lane.b32.xlu0 %v1315, 126
        %v1440 = vpop.permute.xlu0 %1439
        %1441 = vrot.lane.b32.xlu0 %v1318, 126
        %v1442 = vpop.permute.xlu0 %1441
        %1443 = vrot.lane.b32.xlu0 %v1321, 126
        %v1444 = vpop.permute.xlu0 %1443
        %v1449 = vcombine.low %v1438, %v1442
        %v1450 = vcombine.high %v1438, %v1442
        %v1452 = vunpack.c.l.s4 1983009808
        %v1453 = vunpack.c.0.s8 %v1452
        %v1454 = vlaneseq
        %v1455 = vshrl.u32 %v1454, 7
        %v1456 = vsub.s32 %v1453, %v1455
        %v1457 = vrot.slane %v1449, %v1456
        %v1459 = vunpack.c.l.s4 1983009808
        %v1460 = vunpack.c.0.s8 %v1459
        %v1461 = vlaneseq
        %v1462 = vshrl.u32 %v1461, 7
        %v1463 = vsub.s32 %v1460, %v1462
        %v1464 = vrot.slane %v1450, %v1463
        %v1465 = vcombine.low %v1440, %v1444
        %v1466 = vcombine.high %v1440, %v1444
        %v1468 = vunpack.c.l.s4 1983009808
        %v1469 = vunpack.c.0.s8 %v1468
        %v1470 = vlaneseq
        %v1471 = vshrl.u32 %v1470, 7
        %v1472 = vsub.s32 %v1469, %v1471
        %v1473 = vrot.slane %v1465, %v1472
        %v1475 = vunpack.c.l.s4 1983009808
        %v1476 = vunpack.c.0.s8 %v1475
        %v1477 = vlaneseq
        %v1478 = vshrl.u32 %v1477, 7
        %v1479 = vsub.s32 %v1476, %v1478
        %v1480 = vrot.slane %v1466, %v1479
        %v1481 = vcombine.low %v1457, %v1473
        %v1482 = vcombine.high %v1457, %v1473
        %v1484 = vunpack.c.l.s4 1934713408
        %v1485 = vunpack.c.0.s8 %v1484
        %v1486 = vlaneseq
        %v1487 = vshrl.u32 %v1486, 7
        %v1488 = vsub.s32 %v1485, %v1487
        %v1489 = vrot.slane %v1481, %v1488
        %v1491 = vunpack.c.l.s4 1934713408
        %v1492 = vunpack.c.0.s8 %v1491
        %v1493 = vlaneseq
        %v1494 = vshrl.u32 %v1493, 7
        %v1495 = vsub.s32 %v1492, %v1494
        %v1496 = vrot.slane %v1482, %v1495
        %v1497 = vcombine.low %v1464, %v1480
        %v1498 = vcombine.high %v1464, %v1480
        %v1500 = vunpack.c.l.s4 1934713408
        %v1501 = vunpack.c.0.s8 %v1500
        %v1502 = vlaneseq
        %v1503 = vshrl.u32 %v1502, 7
        %v1504 = vsub.s32 %v1501, %v1503
        %v1505 = vrot.slane %v1497, %v1504
        %v1507 = vunpack.c.l.s4 1934713408
        %v1508 = vunpack.c.0.s8 %v1507
        %v1509 = vlaneseq
        %v1510 = vshrl.u32 %v1509, 7
        %v1511 = vsub.s32 %v1508, %v1510
        %v1512 = vrot.slane %v1498, %v1511
        %v1513 = vcombine.high %v1489, 0.0
        %v1514 = vcombine.high %v1496, 0.0
        %v1515 = vcombine.high %v1505, 0.0
        %v1516 = vcombine.high %v1512, 0.0
        %1518 = vrot.lane.b32.xlu0 %v1513, 16
        %v1519 = vpop.permute.xlu0 %1518
        %1522 = vrot.lane.b32.xlu0 %v1496, 32
        %v1523 = vpop.permute.xlu0 %1522
        %1526 = vrot.lane.b32.xlu0 %v1514, 48
        %v1527 = vpop.permute.xlu0 %1526
        %1530 = vrot.lane.b32.xlu0 %v1505, 64
        %v1531 = vpop.permute.xlu0 %1530
        %1534 = vrot.lane.b32.xlu0 %v1515, 80
        %v1535 = vpop.permute.xlu0 %1534
        %1538 = vrot.lane.b32.xlu0 %v1512, 96
        %v1539 = vpop.permute.xlu0 %1538
        %1542 = vrot.lane.b32.xlu0 %v1516, 112
        %v1543 = vpop.permute.xlu0 %1542
        %v1545 = vsel %vm349, %v1489, %v1519
        %v1546 = vsel %vm351, %v1545, %v1523
        %v1547 = vsel %vm353, %v1546, %v1527
        %v1548 = vsel %vm355, %v1547, %v1531
        %v1549 = vsel %vm357, %v1548, %v1535
        %v1550 = vsel %vm359, %v1549, %v1539
        %v1551 = vsel %vm361, %v1550, %v1543
        %1552 = vrot.lane.b32.xlu0 %v1312, 125
        %v1553 = vpop.permute.xlu0 %1552
        %1554 = vrot.lane.b32.xlu0 %v1315, 125
        %v1555 = vpop.permute.xlu0 %1554
        %1556 = vrot.lane.b32.xlu0 %v1318, 125
        %v1557 = vpop.permute.xlu0 %1556
        %1558 = vrot.lane.b32.xlu0 %v1321, 125
        %v1559 = vpop.permute.xlu0 %1558
        %v1564 = vcombine.low %v1553, %v1557
        %v1565 = vcombine.high %v1553, %v1557
        %v1567 = vunpack.c.l.s4 1983009808
        %v1568 = vunpack.c.0.s8 %v1567
        %v1569 = vlaneseq
        %v1570 = vshrl.u32 %v1569, 7
        %v1571 = vsub.s32 %v1568, %v1570
        %v1572 = vrot.slane %v1564, %v1571
        %v1574 = vunpack.c.l.s4 1983009808
        %v1575 = vunpack.c.0.s8 %v1574
        %v1576 = vlaneseq
        %v1577 = vshrl.u32 %v1576, 7
        %v1578 = vsub.s32 %v1575, %v1577
        %v1579 = vrot.slane %v1565, %v1578
        %v1580 = vcombine.low %v1555, %v1559
        %v1581 = vcombine.high %v1555, %v1559
        %v1583 = vunpack.c.l.s4 1983009808
        %v1584 = vunpack.c.0.s8 %v1583
        %v1585 = vlaneseq
        %v1586 = vshrl.u32 %v1585, 7
        %v1587 = vsub.s32 %v1584, %v1586
        %v1588 = vrot.slane %v1580, %v1587
        %v1590 = vunpack.c.l.s4 1983009808
        %v1591 = vunpack.c.0.s8 %v1590
        %v1592 = vlaneseq
        %v1593 = vshrl.u32 %v1592, 7
        %v1594 = vsub.s32 %v1591, %v1593
        %v1595 = vrot.slane %v1581, %v1594
        %v1596 = vcombine.low %v1572, %v1588
        %v1597 = vcombine.high %v1572, %v1588
        %v1599 = vunpack.c.l.s4 1934713408
        %v1600 = vunpack.c.0.s8 %v1599
        %v1601 = vlaneseq
        %v1602 = vshrl.u32 %v1601, 7
        %v1603 = vsub.s32 %v1600, %v1602
        %v1604 = vrot.slane %v1596, %v1603
        %v1606 = vunpack.c.l.s4 1934713408
        %v1607 = vunpack.c.0.s8 %v1606
        %v1608 = vlaneseq
        %v1609 = vshrl.u32 %v1608, 7
        %v1610 = vsub.s32 %v1607, %v1609
        %v1611 = vrot.slane %v1597, %v1610
        %v1612 = vcombine.low %v1579, %v1595
        %v1613 = vcombine.high %v1579, %v1595
        %v1615 = vunpack.c.l.s4 1934713408
        %v1616 = vunpack.c.0.s8 %v1615
        %v1617 = vlaneseq
        %v1618 = vshrl.u32 %v1617, 7
        %v1619 = vsub.s32 %v1616, %v1618
        %v1620 = vrot.slane %v1612, %v1619
        %v1622 = vunpack.c.l.s4 1934713408
        %v1623 = vunpack.c.0.s8 %v1622
        %v1624 = vlaneseq
        %v1625 = vshrl.u32 %v1624, 7
        %v1626 = vsub.s32 %v1623, %v1625
        %v1627 = vrot.slane %v1613, %v1626
        %v1628 = vcombine.high %v1604, 0.0
        %v1629 = vcombine.high %v1611, 0.0
        %v1630 = vcombine.high %v1620, 0.0
        %v1631 = vcombine.high %v1627, 0.0
        %1633 = vrot.lane.b32.xlu0 %v1628, 16
        %v1634 = vpop.permute.xlu0 %1633
        %1637 = vrot.lane.b32.xlu0 %v1611, 32
        %v1638 = vpop.permute.xlu0 %1637
        %1641 = vrot.lane.b32.xlu0 %v1629, 48
        %v1642 = vpop.permute.xlu0 %1641
        %1645 = vrot.lane.b32.xlu0 %v1620, 64
        %v1646 = vpop.permute.xlu0 %1645
        %1649 = vrot.lane.b32.xlu0 %v1630, 80
        %v1650 = vpop.permute.xlu0 %1649
        %1653 = vrot.lane.b32.xlu0 %v1627, 96
        %v1654 = vpop.permute.xlu0 %1653
        %1657 = vrot.lane.b32.xlu0 %v1631, 112
        %v1658 = vpop.permute.xlu0 %1657
        %v1660 = vsel %vm349, %v1604, %v1634
        %v1661 = vsel %vm351, %v1660, %v1638
        %v1662 = vsel %vm353, %v1661, %v1642
        %v1663 = vsel %vm355, %v1662, %v1646
        %v1664 = vsel %vm357, %v1663, %v1650
        %v1665 = vsel %vm359, %v1664, %v1654
        %v1666 = vsel %vm361, %v1665, %v1658
        %1667 = vrot.lane.b32.xlu0 %v1312, 124
        %v1668 = vpop.permute.xlu0 %1667
        %1669 = vrot.lane.b32.xlu0 %v1315, 124
        %v1670 = vpop.permute.xlu0 %1669
        %1671 = vrot.lane.b32.xlu0 %v1318, 124
        %v1672 = vpop.permute.xlu0 %1671
        %1673 = vrot.lane.b32.xlu0 %v1321, 124
        %v1674 = vpop.permute.xlu0 %1673
        %v1679 = vcombine.low %v1668, %v1672
        %v1680 = vcombine.high %v1668, %v1672
        %v1682 = vunpack.c.l.s4 1983009808
        %v1683 = vunpack.c.0.s8 %v1682
        %v1684 = vlaneseq
        %v1685 = vshrl.u32 %v1684, 7
        %v1686 = vsub.s32 %v1683, %v1685
        %v1687 = vrot.slane %v1679, %v1686
        %v1689 = vunpack.c.l.s4 1983009808
        %v1690 = vunpack.c.0.s8 %v1689
        %v1691 = vlaneseq
        %v1692 = vshrl.u32 %v1691, 7
        %v1693 = vsub.s32 %v1690, %v1692
        %v1694 = vrot.slane %v1680, %v1693
        %v1695 = vcombine.low %v1670, %v1674
        %v1696 = vcombine.high %v1670, %v1674
        %v1698 = vunpack.c.l.s4 1983009808
        %v1699 = vunpack.c.0.s8 %v1698
        %v1700 = vlaneseq
        %v1701 = vshrl.u32 %v1700, 7
        %v1702 = vsub.s32 %v1699, %v1701
        %v1703 = vrot.slane %v1695, %v1702
        %v1705 = vunpack.c.l.s4 1983009808
        %v1706 = vunpack.c.0.s8 %v1705
        %v1707 = vlaneseq
        %v1708 = vshrl.u32 %v1707, 7
        %v1709 = vsub.s32 %v1706, %v1708
        %v1710 = vrot.slane %v1696, %v1709
        %v1711 = vcombine.low %v1687, %v1703
        %v1712 = vcombine.high %v1687, %v1703
        %v1714 = vunpack.c.l.s4 1934713408
        %v1715 = vunpack.c.0.s8 %v1714
        %v1716 = vlaneseq
        %v1717 = vshrl.u32 %v1716, 7
        %v1718 = vsub.s32 %v1715, %v1717
        %v1719 = vrot.slane %v1711, %v1718
        %v1721 = vunpack.c.l.s4 1934713408
        %v1722 = vunpack.c.0.s8 %v1721
        %v1723 = vlaneseq
        %v1724 = vshrl.u32 %v1723, 7
        %v1725 = vsub.s32 %v1722, %v1724
        %v1726 = vrot.slane %v1712, %v1725
        %v1727 = vcombine.low %v1694, %v1710
        %v1728 = vcombine.high %v1694, %v1710
        %v1730 = vunpack.c.l.s4 1934713408
        %v1731 = vunpack.c.0.s8 %v1730
        %v1732 = vlaneseq
        %v1733 = vshrl.u32 %v1732, 7
        %v1734 = vsub.s32 %v1731, %v1733
        %v1735 = vrot.slane %v1727, %v1734
        %v1737 = vunpack.c.l.s4 1934713408
        %v1738 = vunpack.c.0.s8 %v1737
        %v1739 = vlaneseq
        %v1740 = vshrl.u32 %v1739, 7
        %v1741 = vsub.s32 %v1738, %v1740
        %v1742 = vrot.slane %v1728, %v1741
        %v1743 = vcombine.high %v1719, 0.0
        %v1744 = vcombine.high %v1726, 0.0
        %v1745 = vcombine.high %v1735, 0.0
        %v1746 = vcombine.high %v1742, 0.0
        %1748 = vrot.lane.b32.xlu0 %v1743, 16
        %v1749 = vpop.permute.xlu0 %1748
        %1752 = vrot.lane.b32.xlu0 %v1726, 32
        %v1753 = vpop.permute.xlu0 %1752
        %1756 = vrot.lane.b32.xlu0 %v1744, 48
        %v1757 = vpop.permute.xlu0 %1756
        %1760 = vrot.lane.b32.xlu0 %v1735, 64
        %v1761 = vpop.permute.xlu0 %1760
        %1764 = vrot.lane.b32.xlu0 %v1745, 80
        %v1765 = vpop.permute.xlu0 %1764
        %1768 = vrot.lane.b32.xlu0 %v1742, 96
        %v1769 = vpop.permute.xlu0 %1768
        %1772 = vrot.lane.b32.xlu0 %v1746, 112
        %v1773 = vpop.permute.xlu0 %1772
        %v1775 = vsel %vm349, %v1719, %v1749
        %v1776 = vsel %vm351, %v1775, %v1753
        %v1777 = vsel %vm353, %v1776, %v1757
        %v1778 = vsel %vm355, %v1777, %v1761
        %v1779 = vsel %vm357, %v1778, %v1765
        %v1780 = vsel %vm359, %v1779, %v1769
        %v1781 = vsel %vm361, %v1780, %v1773
        %1782 = vrot.lane.b32.xlu0 %v1312, 123
        %v1783 = vpop.permute.xlu0 %1782
        %1784 = vrot.lane.b32.xlu0 %v1315, 123
        %v1785 = vpop.permute.xlu0 %1784
        %1786 = vrot.lane.b32.xlu0 %v1318, 123
        %v1787 = vpop.permute.xlu0 %1786
        %1788 = vrot.lane.b32.xlu0 %v1321, 123
        %v1789 = vpop.permute.xlu0 %1788
        %v1794 = vcombine.low %v1783, %v1787
        %v1795 = vcombine.high %v1783, %v1787
        %v1797 = vunpack.c.l.s4 1983009808
        %v1798 = vunpack.c.0.s8 %v1797
        %v1799 = vlaneseq
        %v1800 = vshrl.u32 %v1799, 7
        %v1801 = vsub.s32 %v1798, %v1800
        %v1802 = vrot.slane %v1794, %v1801
        %v1804 = vunpack.c.l.s4 1983009808
        %v1805 = vunpack.c.0.s8 %v1804
        %v1806 = vlaneseq
        %v1807 = vshrl.u32 %v1806, 7
        %v1808 = vsub.s32 %v1805, %v1807
        %v1809 = vrot.slane %v1795, %v1808
        %v1810 = vcombine.low %v1785, %v1789
        %v1811 = vcombine.high %v1785, %v1789
        %v1813 = vunpack.c.l.s4 1983009808
        %v1814 = vunpack.c.0.s8 %v1813
        %v1815 = vlaneseq
        %v1816 = vshrl.u32 %v1815, 7
        %v1817 = vsub.s32 %v1814, %v1816
        %v1818 = vrot.slane %v1810, %v1817
        %v1820 = vunpack.c.l.s4 1983009808
        %v1821 = vunpack.c.0.s8 %v1820
        %v1822 = vlaneseq
        %v1823 = vshrl.u32 %v1822, 7
        %v1824 = vsub.s32 %v1821, %v1823
        %v1825 = vrot.slane %v1811, %v1824
        %v1826 = vcombine.low %v1802, %v1818
        %v1827 = vcombine.high %v1802, %v1818
        %v1829 = vunpack.c.l.s4 1934713408
        %v1830 = vunpack.c.0.s8 %v1829
        %v1831 = vlaneseq
        %v1832 = vshrl.u32 %v1831, 7
        %v1833 = vsub.s32 %v1830, %v1832
        %v1834 = vrot.slane %v1826, %v1833
        %v1836 = vunpack.c.l.s4 1934713408
        %v1837 = vunpack.c.0.s8 %v1836
        %v1838 = vlaneseq
        %v1839 = vshrl.u32 %v1838, 7
        %v1840 = vsub.s32 %v1837, %v1839
        %v1841 = vrot.slane %v1827, %v1840
        %v1842 = vcombine.low %v1809, %v1825
        %v1843 = vcombine.high %v1809, %v1825
        %v1845 = vunpack.c.l.s4 1934713408
        %v1846 = vunpack.c.0.s8 %v1845
        %v1847 = vlaneseq
        %v1848 = vshrl.u32 %v1847, 7
        %v1849 = vsub.s32 %v1846, %v1848
        %v1850 = vrot.slane %v1842, %v1849
        %v1852 = vunpack.c.l.s4 1934713408
        %v1853 = vunpack.c.0.s8 %v1852
        %v1854 = vlaneseq
        %v1855 = vshrl.u32 %v1854, 7
        %v1856 = vsub.s32 %v1853, %v1855
        %v1857 = vrot.slane %v1843, %v1856
        %v1858 = vcombine.high %v1834, 0.0
        %v1859 = vcombine.high %v1841, 0.0
        %v1860 = vcombine.high %v1850, 0.0
        %v1861 = vcombine.high %v1857, 0.0
        %1863 = vrot.lane.b32.xlu0 %v1858, 16
        %v1864 = vpop.permute.xlu0 %1863
        %1867 = vrot.lane.b32.xlu0 %v1841, 32
        %v1868 = vpop.permute.xlu0 %1867
        %1871 = vrot.lane.b32.xlu0 %v1859, 48
        %v1872 = vpop.permute.xlu0 %1871
        %1875 = vrot.lane.b32.xlu0 %v1850, 64
        %v1876 = vpop.permute.xlu0 %1875
        %1879 = vrot.lane.b32.xlu0 %v1860, 80
        %v1880 = vpop.permute.xlu0 %1879
        %1883 = vrot.lane.b32.xlu0 %v1857, 96
        %v1884 = vpop.permute.xlu0 %1883
        %1887 = vrot.lane.b32.xlu0 %v1861, 112
        %v1888 = vpop.permute.xlu0 %1887
        %v1890 = vsel %vm349, %v1834, %v1864
        %v1891 = vsel %vm351, %v1890, %v1868
        %v1892 = vsel %vm353, %v1891, %v1872
        %v1893 = vsel %vm355, %v1892, %v1876
        %v1894 = vsel %vm357, %v1893, %v1880
        %v1895 = vsel %vm359, %v1894, %v1884
        %v1896 = vsel %vm361, %v1895, %v1888
        %1897 = vrot.lane.b32.xlu0 %v231, 127
        %v1898 = vpop.permute.xlu0 %1897
        %1899 = vrot.lane.b32.xlu0 %v234, 127
        %v1900 = vpop.permute.xlu0 %1899
        %1901 = vrot.lane.b32.xlu0 %v237, 127
        %v1902 = vpop.permute.xlu0 %1901
        %1903 = vrot.lane.b32.xlu0 %v240, 127
        %v1904 = vpop.permute.xlu0 %1903
        %v1909 = vcombine.low %v1898, %v1902
        %v1910 = vcombine.high %v1898, %v1902
        %v1912 = vunpack.c.l.s4 1983009808
        %v1913 = vunpack.c.0.s8 %v1912
        %v1914 = vlaneseq
        %v1915 = vshrl.u32 %v1914, 7
        %v1916 = vsub.s32 %v1913, %v1915
        %v1917 = vrot.slane %v1909, %v1916
        %v1919 = vunpack.c.l.s4 1983009808
        %v1920 = vunpack.c.0.s8 %v1919
        %v1921 = vlaneseq
        %v1922 = vshrl.u32 %v1921, 7
        %v1923 = vsub.s32 %v1920, %v1922
        %v1924 = vrot.slane %v1910, %v1923
        %v1925 = vcombine.low %v1900, %v1904
        %v1926 = vcombine.high %v1900, %v1904
        %v1928 = vunpack.c.l.s4 1983009808
        %v1929 = vunpack.c.0.s8 %v1928
        %v1930 = vlaneseq
        %v1931 = vshrl.u32 %v1930, 7
        %v1932 = vsub.s32 %v1929, %v1931
        %v1933 = vrot.slane %v1925, %v1932
        %v1935 = vunpack.c.l.s4 1983009808
        %v1936 = vunpack.c.0.s8 %v1935
        %v1937 = vlaneseq
        %v1938 = vshrl.u32 %v1937, 7
        %v1939 = vsub.s32 %v1936, %v1938
        %v1940 = vrot.slane %v1926, %v1939
        %v1941 = vcombine.low %v1917, %v1933
        %v1942 = vcombine.high %v1917, %v1933
        %v1944 = vunpack.c.l.s4 1934713408
        %v1945 = vunpack.c.0.s8 %v1944
        %v1946 = vlaneseq
        %v1947 = vshrl.u32 %v1946, 7
        %v1948 = vsub.s32 %v1945, %v1947
        %v1949 = vrot.slane %v1941, %v1948
        %v1951 = vunpack.c.l.s4 1934713408
        %v1952 = vunpack.c.0.s8 %v1951
        %v1953 = vlaneseq
        %v1954 = vshrl.u32 %v1953, 7
        %v1955 = vsub.s32 %v1952, %v1954
        %v1956 = vrot.slane %v1942, %v1955
        %v1957 = vcombine.low %v1924, %v1940
        %v1958 = vcombine.high %v1924, %v1940
        %v1960 = vunpack.c.l.s4 1934713408
        %v1961 = vunpack.c.0.s8 %v1960
        %v1962 = vlaneseq
        %v1963 = vshrl.u32 %v1962, 7
        %v1964 = vsub.s32 %v1961, %v1963
        %v1965 = vrot.slane %v1957, %v1964
        %v1967 = vunpack.c.l.s4 1934713408
        %v1968 = vunpack.c.0.s8 %v1967
        %v1969 = vlaneseq
        %v1970 = vshrl.u32 %v1969, 7
        %v1971 = vsub.s32 %v1968, %v1970
        %v1972 = vrot.slane %v1958, %v1971
        %v1973 = vcombine.high %v1949, 0.0
        %v1974 = vcombine.high %v1956, 0.0
        %v1975 = vcombine.high %v1965, 0.0
        %v1976 = vcombine.high %v1972, 0.0
        %1978 = vrot.lane.b32.xlu0 %v1973, 16
        %v1979 = vpop.permute.xlu0 %1978
        %1982 = vrot.lane.b32.xlu0 %v1956, 32
        %v1983 = vpop.permute.xlu0 %1982
        %1986 = vrot.lane.b32.xlu0 %v1974, 48
        %v1987 = vpop.permute.xlu0 %1986
        %1990 = vrot.lane.b32.xlu0 %v1965, 64
        %v1991 = vpop.permute.xlu0 %1990
        %1994 = vrot.lane.b32.xlu0 %v1975, 80
        %v1995 = vpop.permute.xlu0 %1994
        %1998 = vrot.lane.b32.xlu0 %v1972, 96
        %v1999 = vpop.permute.xlu0 %1998
        %2002 = vrot.lane.b32.xlu0 %v1976, 112
        %v2003 = vpop.permute.xlu0 %2002
        %v2005 = vsel %vm349, %v1949, %v1979
        %v2006 = vsel %vm351, %v2005, %v1983
        %v2007 = vsel %vm353, %v2006, %v1987
        %v2008 = vsel %vm355, %v2007, %v1991
        %v2009 = vsel %vm357, %v2008, %v1995
        %v2010 = vsel %vm359, %v2009, %v1999
        %v2011 = vsel %vm361, %v2010, %v2003
        %2012 = vrot.lane.b32.xlu0 %v231, 123
        %v2013 = vpop.permute.xlu0 %2012
        %2014 = vrot.lane.b32.xlu0 %v234, 123
        %v2015 = vpop.permute.xlu0 %2014
        %2016 = vrot.lane.b32.xlu0 %v237, 123
        %v2017 = vpop.permute.xlu0 %2016
        %2018 = vrot.lane.b32.xlu0 %v240, 123
        %v2019 = vpop.permute.xlu0 %2018
        %v2024 = vcombine.low %v2013, %v2017
        %v2025 = vcombine.high %v2013, %v2017
        %v2027 = vunpack.c.l.s4 1983009808
        %v2028 = vunpack.c.0.s8 %v2027
        %v2029 = vlaneseq
        %v2030 = vshrl.u32 %v2029, 7
        %v2031 = vsub.s32 %v2028, %v2030
        %v2032 = vrot.slane %v2024, %v2031
        %v2034 = vunpack.c.l.s4 1983009808
        %v2035 = vunpack.c.0.s8 %v2034
        %v2036 = vlaneseq
        %v2037 = vshrl.u32 %v2036, 7
        %v2038 = vsub.s32 %v2035, %v2037
        %v2039 = vrot.slane %v2025, %v2038
        %v2040 = vcombine.low %v2015, %v2019
        %v2041 = vcombine.high %v2015, %v2019
        %v2043 = vunpack.c.l.s4 1983009808
        %v2044 = vunpack.c.0.s8 %v2043
        %v2045 = vlaneseq
        %v2046 = vshrl.u32 %v2045, 7
        %v2047 = vsub.s32 %v2044, %v2046
        %v2048 = vrot.slane %v2040, %v2047
        %v2050 = vunpack.c.l.s4 1983009808
        %v2051 = vunpack.c.0.s8 %v2050
        %v2052 = vlaneseq
        %v2053 = vshrl.u32 %v2052, 7
        %v2054 = vsub.s32 %v2051, %v2053
        %v2055 = vrot.slane %v2041, %v2054
        %v2056 = vcombine.low %v2032, %v2048
        %v2057 = vcombine.high %v2032, %v2048
        %v2059 = vunpack.c.l.s4 1934713408
        %v2060 = vunpack.c.0.s8 %v2059
        %v2061 = vlaneseq
        %v2062 = vshrl.u32 %v2061, 7
        %v2063 = vsub.s32 %v2060, %v2062
        %v2064 = vrot.slane %v2056, %v2063
        %v2066 = vunpack.c.l.s4 1934713408
        %v2067 = vunpack.c.0.s8 %v2066
        %v2068 = vlaneseq
        %v2069 = vshrl.u32 %v2068, 7
        %v2070 = vsub.s32 %v2067, %v2069
        %v2071 = vrot.slane %v2057, %v2070
        %v2072 = vcombine.low %v2039, %v2055
        %v2073 = vcombine.high %v2039, %v2055
        %v2075 = vunpack.c.l.s4 1934713408
        %v2076 = vunpack.c.0.s8 %v2075
        %v2077 = vlaneseq
        %v2078 = vshrl.u32 %v2077, 7
        %v2079 = vsub.s32 %v2076, %v2078
        %v2080 = vrot.slane %v2072, %v2079
        %v2082 = vunpack.c.l.s4 1934713408
        %v2083 = vunpack.c.0.s8 %v2082
        %v2084 = vlaneseq
        %v2085 = vshrl.u32 %v2084, 7
        %v2086 = vsub.s32 %v2083, %v2085
        %v2087 = vrot.slane %v2073, %v2086
        %v2088 = vcombine.high %v2064, 0.0
        %v2089 = vcombine.high %v2071, 0.0
        %v2090 = vcombine.high %v2080, 0.0
        %v2091 = vcombine.high %v2087, 0.0
        %2093 = vrot.lane.b32.xlu0 %v2088, 16
        %v2094 = vpop.permute.xlu0 %2093
        %2097 = vrot.lane.b32.xlu0 %v2071, 32
        %v2098 = vpop.permute.xlu0 %2097
        %2101 = vrot.lane.b32.xlu0 %v2089, 48
        %v2102 = vpop.permute.xlu0 %2101
        %2105 = vrot.lane.b32.xlu0 %v2080, 64
        %v2106 = vpop.permute.xlu0 %2105
        %2109 = vrot.lane.b32.xlu0 %v2090, 80
        %v2110 = vpop.permute.xlu0 %2109
        %2113 = vrot.lane.b32.xlu0 %v2087, 96
        %v2114 = vpop.permute.xlu0 %2113
        %2117 = vrot.lane.b32.xlu0 %v2091, 112
        %v2118 = vpop.permute.xlu0 %2117
        %v2120 = vsel %vm349, %v2064, %v2094
        %v2121 = vsel %vm351, %v2120, %v2098
        %v2122 = vsel %vm353, %v2121, %v2102
        %v2123 = vsel %vm355, %v2122, %v2106
        %v2124 = vsel %vm357, %v2123, %v2110
        %v2125 = vsel %vm359, %v2124, %v2114
        %v2126 = vsel %vm361, %v2125, %v2118
        %2127 = vrot.lane.b32.xlu0 %v596, 127
        %v2128 = vpop.permute.xlu0 %2127
        %2129 = vrot.lane.b32.xlu0 %v599, 127
        %v2130 = vpop.permute.xlu0 %2129
        %2131 = vrot.lane.b32.xlu0 %v602, 127
        %v2132 = vpop.permute.xlu0 %2131
        %2133 = vrot.lane.b32.xlu0 %v605, 127
        %v2134 = vpop.permute.xlu0 %2133
        %v2139 = vcombine.low %v2128, %v2132
        %v2140 = vcombine.high %v2128, %v2132
        %v2142 = vunpack.c.l.s4 1983009808
        %v2143 = vunpack.c.0.s8 %v2142
        %v2144 = vlaneseq
        %v2145 = vshrl.u32 %v2144, 7
        %v2146 = vsub.s32 %v2143, %v2145
        %v2147 = vrot.slane %v2139, %v2146
        %v2149 = vunpack.c.l.s4 1983009808
        %v2150 = vunpack.c.0.s8 %v2149
        %v2151 = vlaneseq
        %v2152 = vshrl.u32 %v2151, 7
        %v2153 = vsub.s32 %v2150, %v2152
        %v2154 = vrot.slane %v2140, %v2153
        %v2155 = vcombine.low %v2130, %v2134
        %v2156 = vcombine.high %v2130, %v2134
        %v2158 = vunpack.c.l.s4 1983009808
        %v2159 = vunpack.c.0.s8 %v2158
        %v2160 = vlaneseq
        %v2161 = vshrl.u32 %v2160, 7
        %v2162 = vsub.s32 %v2159, %v2161
        %v2163 = vrot.slane %v2155, %v2162
        %v2165 = vunpack.c.l.s4 1983009808
        %v2166 = vunpack.c.0.s8 %v2165
        %v2167 = vlaneseq
        %v2168 = vshrl.u32 %v2167, 7
        %v2169 = vsub.s32 %v2166, %v2168
        %v2170 = vrot.slane %v2156, %v2169
        %v2171 = vcombine.low %v2147, %v2163
        %v2172 = vcombine.high %v2147, %v2163
        %v2174 = vunpack.c.l.s4 1934713408
        %v2175 = vunpack.c.0.s8 %v2174
        %v2176 = vlaneseq
        %v2177 = vshrl.u32 %v2176, 7
        %v2178 = vsub.s32 %v2175, %v2177
        %v2179 = vrot.slane %v2171, %v2178
        %v2181 = vunpack.c.l.s4 1934713408
        %v2182 = vunpack.c.0.s8 %v2181
        %v2183 = vlaneseq
        %v2184 = vshrl.u32 %v2183, 7
        %v2185 = vsub.s32 %v2182, %v2184
        %v2186 = vrot.slane %v2172, %v2185
        %v2187 = vcombine.low %v2154, %v2170
        %v2188 = vcombine.high %v2154, %v2170
        %v2190 = vunpack.c.l.s4 1934713408
        %v2191 = vunpack.c.0.s8 %v2190
        %v2192 = vlaneseq
        %v2193 = vshrl.u32 %v2192, 7
        %v2194 = vsub.s32 %v2191, %v2193
        %v2195 = vrot.slane %v2187, %v2194
        %v2197 = vunpack.c.l.s4 1934713408
        %v2198 = vunpack.c.0.s8 %v2197
        %v2199 = vlaneseq
        %v2200 = vshrl.u32 %v2199, 7
        %v2201 = vsub.s32 %v2198, %v2200
        %v2202 = vrot.slane %v2188, %v2201
        %v2203 = vcombine.high %v2179, 0.0
        %v2204 = vcombine.high %v2186, 0.0
        %v2205 = vcombine.high %v2195, 0.0
        %v2206 = vcombine.high %v2202, 0.0
        %2208 = vrot.lane.b32.xlu0 %v2203, 16
        %v2209 = vpop.permute.xlu0 %2208
        %2212 = vrot.lane.b32.xlu0 %v2186, 32
        %v2213 = vpop.permute.xlu0 %2212
        %2216 = vrot.lane.b32.xlu0 %v2204, 48
        %v2217 = vpop.permute.xlu0 %2216
        %2220 = vrot.lane.b32.xlu0 %v2195, 64
        %v2221 = vpop.permute.xlu0 %2220
        %2224 = vrot.lane.b32.xlu0 %v2205, 80
        %v2225 = vpop.permute.xlu0 %2224
        %2228 = vrot.lane.b32.xlu0 %v2202, 96
        %v2229 = vpop.permute.xlu0 %2228
        %2232 = vrot.lane.b32.xlu0 %v2206, 112
        %v2233 = vpop.permute.xlu0 %2232
        %v2235 = vsel %vm349, %v2179, %v2209
        %v2236 = vsel %vm351, %v2235, %v2213
        %v2237 = vsel %vm353, %v2236, %v2217
        %v2238 = vsel %vm355, %v2237, %v2221
        %v2239 = vsel %vm357, %v2238, %v2225
        %v2240 = vsel %vm359, %v2239, %v2229
        %v2241 = vsel %vm361, %v2240, %v2233
        %2242 = vrot.lane.b32.xlu0 %v596, 123
        %v2243 = vpop.permute.xlu0 %2242
        %2244 = vrot.lane.b32.xlu0 %v599, 123
        %v2245 = vpop.permute.xlu0 %2244
        %2246 = vrot.lane.b32.xlu0 %v602, 123
        %v2247 = vpop.permute.xlu0 %2246
        %2248 = vrot.lane.b32.xlu0 %v605, 123
        %v2249 = vpop.permute.xlu0 %2248
        %v2254 = vcombine.low %v2243, %v2247
        %v2255 = vcombine.high %v2243, %v2247
        %v2257 = vunpack.c.l.s4 1983009808
        %v2258 = vunpack.c.0.s8 %v2257
        %v2259 = vlaneseq
        %v2260 = vshrl.u32 %v2259, 7
        %v2261 = vsub.s32 %v2258, %v2260
        %v2262 = vrot.slane %v2254, %v2261
        %v2264 = vunpack.c.l.s4 1983009808
        %v2265 = vunpack.c.0.s8 %v2264
        %v2266 = vlaneseq
        %v2267 = vshrl.u32 %v2266, 7
        %v2268 = vsub.s32 %v2265, %v2267
        %v2269 = vrot.slane %v2255, %v2268
        %v2270 = vcombine.low %v2245, %v2249
        %v2271 = vcombine.high %v2245, %v2249
        %v2273 = vunpack.c.l.s4 1983009808
        %v2274 = vunpack.c.0.s8 %v2273
        %v2275 = vlaneseq
        %v2276 = vshrl.u32 %v2275, 7
        %v2277 = vsub.s32 %v2274, %v2276
        %v2278 = vrot.slane %v2270, %v2277
        %v2280 = vunpack.c.l.s4 1983009808
        %v2281 = vunpack.c.0.s8 %v2280
        %v2282 = vlaneseq
        %v2283 = vshrl.u32 %v2282, 7
        %v2284 = vsub.s32 %v2281, %v2283
        %v2285 = vrot.slane %v2271, %v2284
        %v2286 = vcombine.low %v2262, %v2278
        %v2287 = vcombine.high %v2262, %v2278
        %v2289 = vunpack.c.l.s4 1934713408
        %v2290 = vunpack.c.0.s8 %v2289
        %v2291 = vlaneseq
        %v2292 = vshrl.u32 %v2291, 7
        %v2293 = vsub.s32 %v2290, %v2292
        %v2294 = vrot.slane %v2286, %v2293
        %v2296 = vunpack.c.l.s4 1934713408
        %v2297 = vunpack.c.0.s8 %v2296
        %v2298 = vlaneseq
        %v2299 = vshrl.u32 %v2298, 7
        %v2300 = vsub.s32 %v2297, %v2299
        %v2301 = vrot.slane %v2287, %v2300
        %v2302 = vcombine.low %v2269, %v2285
        %v2303 = vcombine.high %v2269, %v2285
        %v2305 = vunpack.c.l.s4 1934713408
        %v2306 = vunpack.c.0.s8 %v2305
        %v2307 = vlaneseq
        %v2308 = vshrl.u32 %v2307, 7
        %v2309 = vsub.s32 %v2306, %v2308
        %v2310 = vrot.slane %v2302, %v2309
        %v2312 = vunpack.c.l.s4 1934713408
        %v2313 = vunpack.c.0.s8 %v2312
        %v2314 = vlaneseq
        %v2315 = vshrl.u32 %v2314, 7
        %v2316 = vsub.s32 %v2313, %v2315
        %v2317 = vrot.slane %v2303, %v2316
        %v2318 = vcombine.high %v2294, 0.0
        %v2319 = vcombine.high %v2301, 0.0
        %v2320 = vcombine.high %v2310, 0.0
        %v2321 = vcombine.high %v2317, 0.0
        %2323 = vrot.lane.b32.xlu0 %v2318, 16
        %v2324 = vpop.permute.xlu0 %2323
        %2327 = vrot.lane.b32.xlu0 %v2301, 32
        %v2328 = vpop.permute.xlu0 %2327
        %2331 = vrot.lane.b32.xlu0 %v2319, 48
        %v2332 = vpop.permute.xlu0 %2331
        %2335 = vrot.lane.b32.xlu0 %v2310, 64
        %v2336 = vpop.permute.xlu0 %2335
        %2339 = vrot.lane.b32.xlu0 %v2320, 80
        %v2340 = vpop.permute.xlu0 %2339
        %2343 = vrot.lane.b32.xlu0 %v2317, 96
        %v2344 = vpop.permute.xlu0 %2343
        %2347 = vrot.lane.b32.xlu0 %v2321, 112
        %v2348 = vpop.permute.xlu0 %2347
        %v2350 = vsel %vm349, %v2294, %v2324
        %v2351 = vsel %vm351, %v2350, %v2328
        %v2352 = vsel %vm353, %v2351, %v2332
        %v2353 = vsel %vm355, %v2352, %v2336
        %v2354 = vsel %vm357, %v2353, %v2340
        %v2355 = vsel %vm359, %v2354, %v2344
        %v2356 = vsel %vm361, %v2355, %v2348
        %2357 = vrot.lane.b32.xlu0 %v954, 127
        %v2358 = vpop.permute.xlu0 %2357
        %2359 = vrot.lane.b32.xlu0 %v957, 127
        %v2360 = vpop.permute.xlu0 %2359
        %2361 = vrot.lane.b32.xlu0 %v960, 127
        %v2362 = vpop.permute.xlu0 %2361
        %2363 = vrot.lane.b32.xlu0 %v963, 127
        %v2364 = vpop.permute.xlu0 %2363
        %v2369 = vcombine.low %v2358, %v2362
        %v2370 = vcombine.high %v2358, %v2362
        %v2372 = vunpack.c.l.s4 1983009808
        %v2373 = vunpack.c.0.s8 %v2372
        %v2374 = vlaneseq
        %v2375 = vshrl.u32 %v2374, 7
        %v2376 = vsub.s32 %v2373, %v2375
        %v2377 = vrot.slane %v2369, %v2376
        %v2379 = vunpack.c.l.s4 1983009808
        %v2380 = vunpack.c.0.s8 %v2379
        %v2381 = vlaneseq
        %v2382 = vshrl.u32 %v2381, 7
        %v2383 = vsub.s32 %v2380, %v2382
        %v2384 = vrot.slane %v2370, %v2383
        %v2385 = vcombine.low %v2360, %v2364
        %v2386 = vcombine.high %v2360, %v2364
        %v2388 = vunpack.c.l.s4 1983009808
        %v2389 = vunpack.c.0.s8 %v2388
        %v2390 = vlaneseq
        %v2391 = vshrl.u32 %v2390, 7
        %v2392 = vsub.s32 %v2389, %v2391
        %v2393 = vrot.slane %v2385, %v2392
        %v2395 = vunpack.c.l.s4 1983009808
        %v2396 = vunpack.c.0.s8 %v2395
        %v2397 = vlaneseq
        %v2398 = vshrl.u32 %v2397, 7
        %v2399 = vsub.s32 %v2396, %v2398
        %v2400 = vrot.slane %v2386, %v2399
        %v2401 = vcombine.low %v2377, %v2393
        %v2402 = vcombine.high %v2377, %v2393
        %v2404 = vunpack.c.l.s4 1934713408
        %v2405 = vunpack.c.0.s8 %v2404
        %v2406 = vlaneseq
        %v2407 = vshrl.u32 %v2406, 7
        %v2408 = vsub.s32 %v2405, %v2407
        %v2409 = vrot.slane %v2401, %v2408
        %v2411 = vunpack.c.l.s4 1934713408
        %v2412 = vunpack.c.0.s8 %v2411
        %v2413 = vlaneseq
        %v2414 = vshrl.u32 %v2413, 7
        %v2415 = vsub.s32 %v2412, %v2414
        %v2416 = vrot.slane %v2402, %v2415
        %v2417 = vcombine.low %v2384, %v2400
        %v2418 = vcombine.high %v2384, %v2400
        %v2420 = vunpack.c.l.s4 1934713408
        %v2421 = vunpack.c.0.s8 %v2420
        %v2422 = vlaneseq
        %v2423 = vshrl.u32 %v2422, 7
        %v2424 = vsub.s32 %v2421, %v2423
        %v2425 = vrot.slane %v2417, %v2424
        %v2427 = vunpack.c.l.s4 1934713408
        %v2428 = vunpack.c.0.s8 %v2427
        %v2429 = vlaneseq
        %v2430 = vshrl.u32 %v2429, 7
        %v2431 = vsub.s32 %v2428, %v2430
        %v2432 = vrot.slane %v2418, %v2431
        %v2433 = vcombine.high %v2409, 0.0
        %v2434 = vcombine.high %v2416, 0.0
        %v2435 = vcombine.high %v2425, 0.0
        %v2436 = vcombine.high %v2432, 0.0
        %2438 = vrot.lane.b32.xlu0 %v2433, 16
        %v2439 = vpop.permute.xlu0 %2438
        %2442 = vrot.lane.b32.xlu0 %v2416, 32
        %v2443 = vpop.permute.xlu0 %2442
        %2446 = vrot.lane.b32.xlu0 %v2434, 48
        %v2447 = vpop.permute.xlu0 %2446
        %2450 = vrot.lane.b32.xlu0 %v2425, 64
        %v2451 = vpop.permute.xlu0 %2450
        %2454 = vrot.lane.b32.xlu0 %v2435, 80
        %v2455 = vpop.permute.xlu0 %2454
        %2458 = vrot.lane.b32.xlu0 %v2432, 96
        %v2459 = vpop.permute.xlu0 %2458
        %2462 = vrot.lane.b32.xlu0 %v2436, 112
        %v2463 = vpop.permute.xlu0 %2462
        %v2465 = vsel %vm349, %v2409, %v2439
        %v2466 = vsel %vm351, %v2465, %v2443
        %v2467 = vsel %vm353, %v2466, %v2447
        %v2468 = vsel %vm355, %v2467, %v2451
        %v2469 = vsel %vm357, %v2468, %v2455
        %v2470 = vsel %vm359, %v2469, %v2459
        %v2471 = vsel %vm361, %v2470, %v2463
        %2472 = vrot.lane.b32.xlu0 %v954, 123
        %v2473 = vpop.permute.xlu0 %2472
        %2474 = vrot.lane.b32.xlu0 %v957, 123
        %v2475 = vpop.permute.xlu0 %2474
        %2476 = vrot.lane.b32.xlu0 %v960, 123
        %v2477 = vpop.permute.xlu0 %2476
        %2478 = vrot.lane.b32.xlu0 %v963, 123
        %v2479 = vpop.permute.xlu0 %2478
        %v2484 = vcombine.low %v2473, %v2477
        %v2485 = vcombine.high %v2473, %v2477
        %v2487 = vunpack.c.l.s4 1983009808
        %v2488 = vunpack.c.0.s8 %v2487
        %v2489 = vlaneseq
        %v2490 = vshrl.u32 %v2489, 7
        %v2491 = vsub.s32 %v2488, %v2490
        %v2492 = vrot.slane %v2484, %v2491
        %v2494 = vunpack.c.l.s4 1983009808
        %v2495 = vunpack.c.0.s8 %v2494
        %v2496 = vlaneseq
        %v2497 = vshrl.u32 %v2496, 7
        %v2498 = vsub.s32 %v2495, %v2497
        %v2499 = vrot.slane %v2485, %v2498
        %v2500 = vcombine.low %v2475, %v2479
        %v2501 = vcombine.high %v2475, %v2479
        %v2503 = vunpack.c.l.s4 1983009808
        %v2504 = vunpack.c.0.s8 %v2503
        %v2505 = vlaneseq
        %v2506 = vshrl.u32 %v2505, 7
        %v2507 = vsub.s32 %v2504, %v2506
        %v2508 = vrot.slane %v2500, %v2507
        %v2510 = vunpack.c.l.s4 1983009808
        %v2511 = vunpack.c.0.s8 %v2510
        %v2512 = vlaneseq
        %v2513 = vshrl.u32 %v2512, 7
        %v2514 = vsub.s32 %v2511, %v2513
        %v2515 = vrot.slane %v2501, %v2514
        %v2516 = vcombine.low %v2492, %v2508
        %v2517 = vcombine.high %v2492, %v2508
        %v2519 = vunpack.c.l.s4 1934713408
        %v2520 = vunpack.c.0.s8 %v2519
        %v2521 = vlaneseq
        %v2522 = vshrl.u32 %v2521, 7
        %v2523 = vsub.s32 %v2520, %v2522
        %v2524 = vrot.slane %v2516, %v2523
        %v2526 = vunpack.c.l.s4 1934713408
        %v2527 = vunpack.c.0.s8 %v2526
        %v2528 = vlaneseq
        %v2529 = vshrl.u32 %v2528, 7
        %v2530 = vsub.s32 %v2527, %v2529
        %v2531 = vrot.slane %v2517, %v2530
        %v2532 = vcombine.low %v2499, %v2515
        %v2533 = vcombine.high %v2499, %v2515
        %v2535 = vunpack.c.l.s4 1934713408
        %v2536 = vunpack.c.0.s8 %v2535
        %v2537 = vlaneseq
        %v2538 = vshrl.u32 %v2537, 7
        %v2539 = vsub.s32 %v2536, %v2538
        %v2540 = vrot.slane %v2532, %v2539
        %v2542 = vunpack.c.l.s4 1934713408
        %v2543 = vunpack.c.0.s8 %v2542
        %v2544 = vlaneseq
        %v2545 = vshrl.u32 %v2544, 7
        %v2546 = vsub.s32 %v2543, %v2545
        %v2547 = vrot.slane %v2533, %v2546
        %v2548 = vcombine.high %v2524, 0.0
        %v2549 = vcombine.high %v2531, 0.0
        %v2550 = vcombine.high %v2540, 0.0
        %v2551 = vcombine.high %v2547, 0.0
        %2553 = vrot.lane.b32.xlu0 %v2548, 16
        %v2554 = vpop.permute.xlu0 %2553
        %2557 = vrot.lane.b32.xlu0 %v2531, 32
        %v2558 = vpop.permute.xlu0 %2557
        %2561 = vrot.lane.b32.xlu0 %v2549, 48
        %v2562 = vpop.permute.xlu0 %2561
        %2565 = vrot.lane.b32.xlu0 %v2540, 64
        %v2566 = vpop.permute.xlu0 %2565
        %2569 = vrot.lane.b32.xlu0 %v2550, 80
        %v2570 = vpop.permute.xlu0 %2569
        %2573 = vrot.lane.b32.xlu0 %v2547, 96
        %v2574 = vpop.permute.xlu0 %2573
        %2577 = vrot.lane.b32.xlu0 %v2551, 112
        %v2578 = vpop.permute.xlu0 %2577
        %v2580 = vsel %vm349, %v2524, %v2554
        %v2581 = vsel %vm351, %v2580, %v2558
        %v2582 = vsel %vm353, %v2581, %v2562
        %v2583 = vsel %vm355, %v2582, %v2566
        %v2584 = vsel %vm357, %v2583, %v2570
        %v2585 = vsel %vm359, %v2584, %v2574
        %v2586 = vsel %vm361, %v2585, %v2578
        %vm2587 = vcmask 1042432
        %v2588 = vrot.slane %v212, 5
        %v2589 = vrot.slane %v213, 5
        %v2590 = vsel %vm2587, %v2588, %v2589
        %v2591 = vrot.slane %v214, 5
        %v2592 = vrot.slane %v215, 5
        %v2593 = vsel %vm2587, %v2591, %v2592
        %v2594 = vrot.slane %v216, 5
        %v2595 = vrot.slane %v217, 5
        %v2596 = vsel %vm2587, %v2594, %v2595
        %v2597 = vrot.slane %v218, 5
        %v2598 = vrot.slane %v219, 5
        %v2599 = vsel %vm2587, %v2597, %v2598
        %2600 = vrot.lane.b32.xlu0 %v2590, 127
        %v2601 = vpop.permute.xlu0 %2600
        %2602 = vrot.lane.b32.xlu0 %v2593, 127
        %v2603 = vpop.permute.xlu0 %2602
        %2604 = vrot.lane.b32.xlu0 %v2596, 127
        %v2605 = vpop.permute.xlu0 %2604
        %2606 = vrot.lane.b32.xlu0 %v2599, 127
        %v2607 = vpop.permute.xlu0 %2606
        %v2612 = vcombine.low %v2601, %v2605
        %v2613 = vcombine.high %v2601, %v2605
        %v2615 = vunpack.c.l.s4 1983009808
        %v2616 = vunpack.c.0.s8 %v2615
        %v2617 = vlaneseq
        %v2618 = vshrl.u32 %v2617, 7
        %v2619 = vsub.s32 %v2616, %v2618
        %v2620 = vrot.slane %v2612, %v2619
        %v2622 = vunpack.c.l.s4 1983009808
        %v2623 = vunpack.c.0.s8 %v2622
        %v2624 = vlaneseq
        %v2625 = vshrl.u32 %v2624, 7
        %v2626 = vsub.s32 %v2623, %v2625
        %v2627 = vrot.slane %v2613, %v2626
        %v2628 = vcombine.low %v2603, %v2607
        %v2629 = vcombine.high %v2603, %v2607
        %v2631 = vunpack.c.l.s4 1983009808
        %v2632 = vunpack.c.0.s8 %v2631
        %v2633 = vlaneseq
        %v2634 = vshrl.u32 %v2633, 7
        %v2635 = vsub.s32 %v2632, %v2634
        %v2636 = vrot.slane %v2628, %v2635
        %v2638 = vunpack.c.l.s4 1983009808
        %v2639 = vunpack.c.0.s8 %v2638
        %v2640 = vlaneseq
        %v2641 = vshrl.u32 %v2640, 7
        %v2642 = vsub.s32 %v2639, %v2641
        %v2643 = vrot.slane %v2629, %v2642
        %v2644 = vcombine.low %v2620, %v2636
        %v2645 = vcombine.high %v2620, %v2636
        %v2647 = vunpack.c.l.s4 1934713408
        %v2648 = vunpack.c.0.s8 %v2647
        %v2649 = vlaneseq
        %v2650 = vshrl.u32 %v2649, 7
        %v2651 = vsub.s32 %v2648, %v2650
        %v2652 = vrot.slane %v2644, %v2651
        %v2654 = vunpack.c.l.s4 1934713408
        %v2655 = vunpack.c.0.s8 %v2654
        %v2656 = vlaneseq
        %v2657 = vshrl.u32 %v2656, 7
        %v2658 = vsub.s32 %v2655, %v2657
        %v2659 = vrot.slane %v2645, %v2658
        %v2660 = vcombine.low %v2627, %v2643
        %v2661 = vcombine.high %v2627, %v2643
        %v2663 = vunpack.c.l.s4 1934713408
        %v2664 = vunpack.c.0.s8 %v2663
        %v2665 = vlaneseq
        %v2666 = vshrl.u32 %v2665, 7
        %v2667 = vsub.s32 %v2664, %v2666
        %v2668 = vrot.slane %v2660, %v2667
        %v2670 = vunpack.c.l.s4 1934713408
        %v2671 = vunpack.c.0.s8 %v2670
        %v2672 = vlaneseq
        %v2673 = vshrl.u32 %v2672, 7
        %v2674 = vsub.s32 %v2671, %v2673
        %v2675 = vrot.slane %v2661, %v2674
        %v2676 = vcombine.high %v2652, 0.0
        %v2677 = vcombine.high %v2659, 0.0
        %v2678 = vcombine.high %v2668, 0.0
        %v2679 = vcombine.high %v2675, 0.0
        %2681 = vrot.lane.b32.xlu0 %v2676, 16
        %v2682 = vpop.permute.xlu0 %2681
        %2685 = vrot.lane.b32.xlu0 %v2659, 32
        %v2686 = vpop.permute.xlu0 %2685
        %2689 = vrot.lane.b32.xlu0 %v2677, 48
        %v2690 = vpop.permute.xlu0 %2689
        %2693 = vrot.lane.b32.xlu0 %v2668, 64
        %v2694 = vpop.permute.xlu0 %2693
        %2697 = vrot.lane.b32.xlu0 %v2678, 80
        %v2698 = vpop.permute.xlu0 %2697
        %2701 = vrot.lane.b32.xlu0 %v2675, 96
        %v2702 = vpop.permute.xlu0 %2701
        %2705 = vrot.lane.b32.xlu0 %v2679, 112
        %v2706 = vpop.permute.xlu0 %2705
        %v2708 = vsel %vm349, %v2652, %v2682
        %v2709 = vsel %vm351, %v2708, %v2686
        %v2710 = vsel %vm353, %v2709, %v2690
        %v2711 = vsel %vm355, %v2710, %v2694
        %v2712 = vsel %vm357, %v2711, %v2698
        %v2713 = vsel %vm359, %v2712, %v2702
        %v2714 = vsel %vm361, %v2713, %v2706
        %2715 = vrot.lane.b32.xlu0 %v2590, 126
        %v2716 = vpop.permute.xlu0 %2715
        %2717 = vrot.lane.b32.xlu0 %v2593, 126
        %v2718 = vpop.permute.xlu0 %2717
        %2719 = vrot.lane.b32.xlu0 %v2596, 126
        %v2720 = vpop.permute.xlu0 %2719
        %2721 = vrot.lane.b32.xlu0 %v2599, 126
        %v2722 = vpop.permute.xlu0 %2721
        %v2727 = vcombine.low %v2716, %v2720
        %v2728 = vcombine.high %v2716, %v2720
        %v2730 = vunpack.c.l.s4 1983009808
        %v2731 = vunpack.c.0.s8 %v2730
        %v2732 = vlaneseq
        %v2733 = vshrl.u32 %v2732, 7
        %v2734 = vsub.s32 %v2731, %v2733
        %v2735 = vrot.slane %v2727, %v2734
        %v2737 = vunpack.c.l.s4 1983009808
        %v2738 = vunpack.c.0.s8 %v2737
        %v2739 = vlaneseq
        %v2740 = vshrl.u32 %v2739, 7
        %v2741 = vsub.s32 %v2738, %v2740
        %v2742 = vrot.slane %v2728, %v2741
        %v2743 = vcombine.low %v2718, %v2722
        %v2744 = vcombine.high %v2718, %v2722
        %v2746 = vunpack.c.l.s4 1983009808
        %v2747 = vunpack.c.0.s8 %v2746
        %v2748 = vlaneseq
        %v2749 = vshrl.u32 %v2748, 7
        %v2750 = vsub.s32 %v2747, %v2749
        %v2751 = vrot.slane %v2743, %v2750
        %v2753 = vunpack.c.l.s4 1983009808
        %v2754 = vunpack.c.0.s8 %v2753
        %v2755 = vlaneseq
        %v2756 = vshrl.u32 %v2755, 7
        %v2757 = vsub.s32 %v2754, %v2756
        %v2758 = vrot.slane %v2744, %v2757
        %v2759 = vcombine.low %v2735, %v2751
        %v2760 = vcombine.high %v2735, %v2751
        %v2762 = vunpack.c.l.s4 1934713408
        %v2763 = vunpack.c.0.s8 %v2762
        %v2764 = vlaneseq
        %v2765 = vshrl.u32 %v2764, 7
        %v2766 = vsub.s32 %v2763, %v2765
        %v2767 = vrot.slane %v2759, %v2766
        %v2769 = vunpack.c.l.s4 1934713408
        %v2770 = vunpack.c.0.s8 %v2769
        %v2771 = vlaneseq
        %v2772 = vshrl.u32 %v2771, 7
        %v2773 = vsub.s32 %v2770, %v2772
        %v2774 = vrot.slane %v2760, %v2773
        %v2775 = vcombine.low %v2742, %v2758
        %v2776 = vcombine.high %v2742, %v2758
        %v2778 = vunpack.c.l.s4 1934713408
        %v2779 = vunpack.c.0.s8 %v2778
        %v2780 = vlaneseq
        %v2781 = vshrl.u32 %v2780, 7
        %v2782 = vsub.s32 %v2779, %v2781
        %v2783 = vrot.slane %v2775, %v2782
        %v2785 = vunpack.c.l.s4 1934713408
        %v2786 = vunpack.c.0.s8 %v2785
        %v2787 = vlaneseq
        %v2788 = vshrl.u32 %v2787, 7
        %v2789 = vsub.s32 %v2786, %v2788
        %v2790 = vrot.slane %v2776, %v2789
        %v2791 = vcombine.high %v2767, 0.0
        %v2792 = vcombine.high %v2774, 0.0
        %v2793 = vcombine.high %v2783, 0.0
        %v2794 = vcombine.high %v2790, 0.0
        %2796 = vrot.lane.b32.xlu0 %v2791, 16
        %v2797 = vpop.permute.xlu0 %2796
        %2800 = vrot.lane.b32.xlu0 %v2774, 32
        %v2801 = vpop.permute.xlu0 %2800
        %2804 = vrot.lane.b32.xlu0 %v2792, 48
        %v2805 = vpop.permute.xlu0 %2804
        %2808 = vrot.lane.b32.xlu0 %v2783, 64
        %v2809 = vpop.permute.xlu0 %2808
        %2812 = vrot.lane.b32.xlu0 %v2793, 80
        %v2813 = vpop.permute.xlu0 %2812
        %2816 = vrot.lane.b32.xlu0 %v2790, 96
        %v2817 = vpop.permute.xlu0 %2816
        %2820 = vrot.lane.b32.xlu0 %v2794, 112
        %v2821 = vpop.permute.xlu0 %2820
        %v2823 = vsel %vm349, %v2767, %v2797
        %v2824 = vsel %vm351, %v2823, %v2801
        %v2825 = vsel %vm353, %v2824, %v2805
        %v2826 = vsel %vm355, %v2825, %v2809
        %v2827 = vsel %vm357, %v2826, %v2813
        %v2828 = vsel %vm359, %v2827, %v2817
        %v2829 = vsel %vm361, %v2828, %v2821
        %2830 = vrot.lane.b32.xlu0 %v2590, 125
        %v2831 = vpop.permute.xlu0 %2830
        %2832 = vrot.lane.b32.xlu0 %v2593, 125
        %v2833 = vpop.permute.xlu0 %2832
        %2834 = vrot.lane.b32.xlu0 %v2596, 125
        %v2835 = vpop.permute.xlu0 %2834
        %2836 = vrot.lane.b32.xlu0 %v2599, 125
        %v2837 = vpop.permute.xlu0 %2836
        %v2842 = vcombine.low %v2831, %v2835
        %v2843 = vcombine.high %v2831, %v2835
        %v2845 = vunpack.c.l.s4 1983009808
        %v2846 = vunpack.c.0.s8 %v2845
        %v2847 = vlaneseq
        %v2848 = vshrl.u32 %v2847, 7
        %v2849 = vsub.s32 %v2846, %v2848
        %v2850 = vrot.slane %v2842, %v2849
        %v2852 = vunpack.c.l.s4 1983009808
        %v2853 = vunpack.c.0.s8 %v2852
        %v2854 = vlaneseq
        %v2855 = vshrl.u32 %v2854, 7
        %v2856 = vsub.s32 %v2853, %v2855
        %v2857 = vrot.slane %v2843, %v2856
        %v2858 = vcombine.low %v2833, %v2837
        %v2859 = vcombine.high %v2833, %v2837
        %v2861 = vunpack.c.l.s4 1983009808
        %v2862 = vunpack.c.0.s8 %v2861
        %v2863 = vlaneseq
        %v2864 = vshrl.u32 %v2863, 7
        %v2865 = vsub.s32 %v2862, %v2864
        %v2866 = vrot.slane %v2858, %v2865
        %v2868 = vunpack.c.l.s4 1983009808
        %v2869 = vunpack.c.0.s8 %v2868
        %v2870 = vlaneseq
        %v2871 = vshrl.u32 %v2870, 7
        %v2872 = vsub.s32 %v2869, %v2871
        %v2873 = vrot.slane %v2859, %v2872
        %v2874 = vcombine.low %v2850, %v2866
        %v2875 = vcombine.high %v2850, %v2866
        %v2877 = vunpack.c.l.s4 1934713408
        %v2878 = vunpack.c.0.s8 %v2877
        %v2879 = vlaneseq
        %v2880 = vshrl.u32 %v2879, 7
        %v2881 = vsub.s32 %v2878, %v2880
        %v2882 = vrot.slane %v2874, %v2881
        %v2884 = vunpack.c.l.s4 1934713408
        %v2885 = vunpack.c.0.s8 %v2884
        %v2886 = vlaneseq
        %v2887 = vshrl.u32 %v2886, 7
        %v2888 = vsub.s32 %v2885, %v2887
        %v2889 = vrot.slane %v2875, %v2888
        %v2890 = vcombine.low %v2857, %v2873
        %v2891 = vcombine.high %v2857, %v2873
        %v2893 = vunpack.c.l.s4 1934713408
        %v2894 = vunpack.c.0.s8 %v2893
        %v2895 = vlaneseq
        %v2896 = vshrl.u32 %v2895, 7
        %v2897 = vsub.s32 %v2894, %v2896
        %v2898 = vrot.slane %v2890, %v2897
        %v2900 = vunpack.c.l.s4 1934713408
        %v2901 = vunpack.c.0.s8 %v2900
        %v2902 = vlaneseq
        %v2903 = vshrl.u32 %v2902, 7
        %v2904 = vsub.s32 %v2901, %v2903
        %v2905 = vrot.slane %v2891, %v2904
        %v2906 = vcombine.high %v2882, 0.0
        %v2907 = vcombine.high %v2889, 0.0
        %v2908 = vcombine.high %v2898, 0.0
        %v2909 = vcombine.high %v2905, 0.0
        %2911 = vrot.lane.b32.xlu0 %v2906, 16
        %v2912 = vpop.permute.xlu0 %2911
        %2915 = vrot.lane.b32.xlu0 %v2889, 32
        %v2916 = vpop.permute.xlu0 %2915
        %2919 = vrot.lane.b32.xlu0 %v2907, 48
        %v2920 = vpop.permute.xlu0 %2919
        %2923 = vrot.lane.b32.xlu0 %v2898, 64
        %v2924 = vpop.permute.xlu0 %2923
        %2927 = vrot.lane.b32.xlu0 %v2908, 80
        %v2928 = vpop.permute.xlu0 %2927
        %2931 = vrot.lane.b32.xlu0 %v2905, 96
        %v2932 = vpop.permute.xlu0 %2931
        %2935 = vrot.lane.b32.xlu0 %v2909, 112
        %v2936 = vpop.permute.xlu0 %2935
        %v2938 = vsel %vm349, %v2882, %v2912
        %v2939 = vsel %vm351, %v2938, %v2916
        %v2940 = vsel %vm353, %v2939, %v2920
        %v2941 = vsel %vm355, %v2940, %v2924
        %v2942 = vsel %vm357, %v2941, %v2928
        %v2943 = vsel %vm359, %v2942, %v2932
        %v2944 = vsel %vm361, %v2943, %v2936
        %2945 = vrot.lane.b32.xlu0 %v2590, 124
        %v2946 = vpop.permute.xlu0 %2945
        %2947 = vrot.lane.b32.xlu0 %v2593, 124
        %v2948 = vpop.permute.xlu0 %2947
        %2949 = vrot.lane.b32.xlu0 %v2596, 124
        %v2950 = vpop.permute.xlu0 %2949
        %2951 = vrot.lane.b32.xlu0 %v2599, 124
        %v2952 = vpop.permute.xlu0 %2951
        %v2957 = vcombine.low %v2946, %v2950
        %v2958 = vcombine.high %v2946, %v2950
        %v2960 = vunpack.c.l.s4 1983009808
        %v2961 = vunpack.c.0.s8 %v2960
        %v2962 = vlaneseq
        %v2963 = vshrl.u32 %v2962, 7
        %v2964 = vsub.s32 %v2961, %v2963
        %v2965 = vrot.slane %v2957, %v2964
        %v2967 = vunpack.c.l.s4 1983009808
        %v2968 = vunpack.c.0.s8 %v2967
        %v2969 = vlaneseq
        %v2970 = vshrl.u32 %v2969, 7
        %v2971 = vsub.s32 %v2968, %v2970
        %v2972 = vrot.slane %v2958, %v2971
        %v2973 = vcombine.low %v2948, %v2952
        %v2974 = vcombine.high %v2948, %v2952
        %v2976 = vunpack.c.l.s4 1983009808
        %v2977 = vunpack.c.0.s8 %v2976
        %v2978 = vlaneseq
        %v2979 = vshrl.u32 %v2978, 7
        %v2980 = vsub.s32 %v2977, %v2979
        %v2981 = vrot.slane %v2973, %v2980
        %v2983 = vunpack.c.l.s4 1983009808
        %v2984 = vunpack.c.0.s8 %v2983
        %v2985 = vlaneseq
        %v2986 = vshrl.u32 %v2985, 7
        %v2987 = vsub.s32 %v2984, %v2986
        %v2988 = vrot.slane %v2974, %v2987
        %v2989 = vcombine.low %v2965, %v2981
        %v2990 = vcombine.high %v2965, %v2981
        %v2992 = vunpack.c.l.s4 1934713408
        %v2993 = vunpack.c.0.s8 %v2992
        %v2994 = vlaneseq
        %v2995 = vshrl.u32 %v2994, 7
        %v2996 = vsub.s32 %v2993, %v2995
        %v2997 = vrot.slane %v2989, %v2996
        %v2999 = vunpack.c.l.s4 1934713408
        %v3000 = vunpack.c.0.s8 %v2999
        %v3001 = vlaneseq
        %v3002 = vshrl.u32 %v3001, 7
        %v3003 = vsub.s32 %v3000, %v3002
        %v3004 = vrot.slane %v2990, %v3003
        %v3005 = vcombine.low %v2972, %v2988
        %v3006 = vcombine.high %v2972, %v2988
        %v3008 = vunpack.c.l.s4 1934713408
        %v3009 = vunpack.c.0.s8 %v3008
        %v3010 = vlaneseq
        %v3011 = vshrl.u32 %v3010, 7
        %v3012 = vsub.s32 %v3009, %v3011
        %v3013 = vrot.slane %v3005, %v3012
        %v3015 = vunpack.c.l.s4 1934713408
        %v3016 = vunpack.c.0.s8 %v3015
        %v3017 = vlaneseq
        %v3018 = vshrl.u32 %v3017, 7
        %v3019 = vsub.s32 %v3016, %v3018
        %v3020 = vrot.slane %v3006, %v3019
        %v3021 = vcombine.high %v2997, 0.0
        %v3022 = vcombine.high %v3004, 0.0
        %v3023 = vcombine.high %v3013, 0.0
        %v3024 = vcombine.high %v3020, 0.0
        %3026 = vrot.lane.b32.xlu0 %v3021, 16
        %v3027 = vpop.permute.xlu0 %3026
        %3030 = vrot.lane.b32.xlu0 %v3004, 32
        %v3031 = vpop.permute.xlu0 %3030
        %3034 = vrot.lane.b32.xlu0 %v3022, 48
        %v3035 = vpop.permute.xlu0 %3034
        %3038 = vrot.lane.b32.xlu0 %v3013, 64
        %v3039 = vpop.permute.xlu0 %3038
        %3042 = vrot.lane.b32.xlu0 %v3023, 80
        %v3043 = vpop.permute.xlu0 %3042
        %3046 = vrot.lane.b32.xlu0 %v3020, 96
        %v3047 = vpop.permute.xlu0 %3046
        %3050 = vrot.lane.b32.xlu0 %v3024, 112
        %v3051 = vpop.permute.xlu0 %3050
        %v3053 = vsel %vm349, %v2997, %v3027
        %v3054 = vsel %vm351, %v3053, %v3031
        %v3055 = vsel %vm353, %v3054, %v3035
        %v3056 = vsel %vm355, %v3055, %v3039
        %v3057 = vsel %vm357, %v3056, %v3043
        %v3058 = vsel %vm359, %v3057, %v3047
        %v3059 = vsel %vm361, %v3058, %v3051
        %3060 = vrot.lane.b32.xlu0 %v2590, 123
        %v3061 = vpop.permute.xlu0 %3060
        %3062 = vrot.lane.b32.xlu0 %v2593, 123
        %v3063 = vpop.permute.xlu0 %3062
        %3064 = vrot.lane.b32.xlu0 %v2596, 123
        %v3065 = vpop.permute.xlu0 %3064
        %3066 = vrot.lane.b32.xlu0 %v2599, 123
        %v3067 = vpop.permute.xlu0 %3066
        %v3072 = vcombine.low %v3061, %v3065
        %v3073 = vcombine.high %v3061, %v3065
        %v3075 = vunpack.c.l.s4 1983009808
        %v3076 = vunpack.c.0.s8 %v3075
        %v3077 = vlaneseq
        %v3078 = vshrl.u32 %v3077, 7
        %v3079 = vsub.s32 %v3076, %v3078
        %v3080 = vrot.slane %v3072, %v3079
        %v3082 = vunpack.c.l.s4 1983009808
        %v3083 = vunpack.c.0.s8 %v3082
        %v3084 = vlaneseq
        %v3085 = vshrl.u32 %v3084, 7
        %v3086 = vsub.s32 %v3083, %v3085
        %v3087 = vrot.slane %v3073, %v3086
        %v3088 = vcombine.low %v3063, %v3067
        %v3089 = vcombine.high %v3063, %v3067
        %v3091 = vunpack.c.l.s4 1983009808
        %v3092 = vunpack.c.0.s8 %v3091
        %v3093 = vlaneseq
        %v3094 = vshrl.u32 %v3093, 7
        %v3095 = vsub.s32 %v3092, %v3094
        %v3096 = vrot.slane %v3088, %v3095
        %v3098 = vunpack.c.l.s4 1983009808
        %v3099 = vunpack.c.0.s8 %v3098
        %v3100 = vlaneseq
        %v3101 = vshrl.u32 %v3100, 7
        %v3102 = vsub.s32 %v3099, %v3101
        %v3103 = vrot.slane %v3089, %v3102
        %v3104 = vcombine.low %v3080, %v3096
        %v3105 = vcombine.high %v3080, %v3096
        %v3107 = vunpack.c.l.s4 1934713408
        %v3108 = vunpack.c.0.s8 %v3107
        %v3109 = vlaneseq
        %v3110 = vshrl.u32 %v3109, 7
        %v3111 = vsub.s32 %v3108, %v3110
        %v3112 = vrot.slane %v3104, %v3111
        %v3114 = vunpack.c.l.s4 1934713408
        %v3115 = vunpack.c.0.s8 %v3114
        %v3116 = vlaneseq
        %v3117 = vshrl.u32 %v3116, 7
        %v3118 = vsub.s32 %v3115, %v3117
        %v3119 = vrot.slane %v3105, %v3118
        %v3120 = vcombine.low %v3087, %v3103
        %v3121 = vcombine.high %v3087, %v3103
        %v3123 = vunpack.c.l.s4 1934713408
        %v3124 = vunpack.c.0.s8 %v3123
        %v3125 = vlaneseq
        %v3126 = vshrl.u32 %v3125, 7
        %v3127 = vsub.s32 %v3124, %v3126
        %v3128 = vrot.slane %v3120, %v3127
        %v3130 = vunpack.c.l.s4 1934713408
        %v3131 = vunpack.c.0.s8 %v3130
        %v3132 = vlaneseq
        %v3133 = vshrl.u32 %v3132, 7
        %v3134 = vsub.s32 %v3131, %v3133
        %v3135 = vrot.slane %v3121, %v3134
        %v3136 = vcombine.high %v3112, 0.0
        %v3137 = vcombine.high %v3119, 0.0
        %v3138 = vcombine.high %v3128, 0.0
        %v3139 = vcombine.high %v3135, 0.0
        %3141 = vrot.lane.b32.xlu0 %v3136, 16
        %v3142 = vpop.permute.xlu0 %3141
        %3145 = vrot.lane.b32.xlu0 %v3119, 32
        %v3146 = vpop.permute.xlu0 %3145
        %3149 = vrot.lane.b32.xlu0 %v3137, 48
        %v3150 = vpop.permute.xlu0 %3149
        %3153 = vrot.lane.b32.xlu0 %v3128, 64
        %v3154 = vpop.permute.xlu0 %3153
        %3157 = vrot.lane.b32.xlu0 %v3138, 80
        %v3158 = vpop.permute.xlu0 %3157
        %3161 = vrot.lane.b32.xlu0 %v3135, 96
        %v3162 = vpop.permute.xlu0 %3161
        %3165 = vrot.lane.b32.xlu0 %v3139, 112
        %v3166 = vpop.permute.xlu0 %3165
        %v3168 = vsel %vm349, %v3112, %v3142
        %v3169 = vsel %vm351, %v3168, %v3146
        %v3170 = vsel %vm353, %v3169, %v3150
        %v3171 = vsel %vm355, %v3170, %v3154
        %v3172 = vsel %vm357, %v3171, %v3158
        %v3173 = vsel %vm359, %v3172, %v3162
        %v3174 = vsel %vm361, %v3173, %v3166
        %v3175 = vcombine.low %v212, %v216
        %v3176 = vcombine.high %v212, %v216
        %v3178 = vunpack.c.l.s4 1983009808
        %v3179 = vunpack.c.0.s8 %v3178
        %v3180 = vlaneseq
        %v3181 = vshrl.u32 %v3180, 7
        %v3182 = vsub.s32 %v3179, %v3181
        %v3183 = vrot.slane %v3175, %v3182
        %v3185 = vunpack.c.l.s4 1983009808
        %v3186 = vunpack.c.0.s8 %v3185
        %v3187 = vlaneseq
        %v3188 = vshrl.u32 %v3187, 7
        %v3189 = vsub.s32 %v3186, %v3188
        %v3190 = vrot.slane %v3176, %v3189
        %v3191 = vcombine.low %v214, %v218
        %v3192 = vcombine.high %v214, %v218
        %v3194 = vunpack.c.l.s4 1983009808
        %v3195 = vunpack.c.0.s8 %v3194
        %v3196 = vlaneseq
        %v3197 = vshrl.u32 %v3196, 7
        %v3198 = vsub.s32 %v3195, %v3197
        %v3199 = vrot.slane %v3191, %v3198
        %v3201 = vunpack.c.l.s4 1983009808
        %v3202 = vunpack.c.0.s8 %v3201
        %v3203 = vlaneseq
        %v3204 = vshrl.u32 %v3203, 7
        %v3205 = vsub.s32 %v3202, %v3204
        %v3206 = vrot.slane %v3192, %v3205
        %v3207 = vcombine.low %v3183, %v3199
        %v3208 = vcombine.high %v3183, %v3199
        %v3210 = vunpack.c.l.s4 1934713408
        %v3211 = vunpack.c.0.s8 %v3210
        %v3212 = vlaneseq
        %v3213 = vshrl.u32 %v3212, 7
        %v3214 = vsub.s32 %v3211, %v3213
        %v3215 = vrot.slane %v3207, %v3214
        %v3217 = vunpack.c.l.s4 1934713408
        %v3218 = vunpack.c.0.s8 %v3217
        %v3219 = vlaneseq
        %v3220 = vshrl.u32 %v3219, 7
        %v3221 = vsub.s32 %v3218, %v3220
        %v3222 = vrot.slane %v3208, %v3221
        %v3223 = vcombine.low %v3190, %v3206
        %v3224 = vcombine.high %v3190, %v3206
        %v3226 = vunpack.c.l.s4 1934713408
        %v3227 = vunpack.c.0.s8 %v3226
        %v3228 = vlaneseq
        %v3229 = vshrl.u32 %v3228, 7
        %v3230 = vsub.s32 %v3227, %v3229
        %v3231 = vrot.slane %v3223, %v3230
        %v3233 = vunpack.c.l.s4 1934713408
        %v3234 = vunpack.c.0.s8 %v3233
        %v3235 = vlaneseq
        %v3236 = vshrl.u32 %v3235, 7
        %v3237 = vsub.s32 %v3234, %v3236
        %v3238 = vrot.slane %v3224, %v3237
        %v3239 = vcombine.high %v3215, 0.0
        %v3240 = vcombine.high %v3222, 0.0
        %v3241 = vcombine.high %v3231, 0.0
        %v3242 = vcombine.high %v3238, 0.0
        %3244 = vrot.lane.b32.xlu0 %v3239, 16
        %v3245 = vpop.permute.xlu0 %3244
        %3248 = vrot.lane.b32.xlu0 %v3222, 32
        %v3249 = vpop.permute.xlu0 %3248
        %3252 = vrot.lane.b32.xlu0 %v3240, 48
        %v3253 = vpop.permute.xlu0 %3252
        %3256 = vrot.lane.b32.xlu0 %v3231, 64
        %v3257 = vpop.permute.xlu0 %3256
        %3260 = vrot.lane.b32.xlu0 %v3241, 80
        %v3261 = vpop.permute.xlu0 %3260
        %3264 = vrot.lane.b32.xlu0 %v3238, 96
        %v3265 = vpop.permute.xlu0 %3264
        %3268 = vrot.lane.b32.xlu0 %v3242, 112
        %v3269 = vpop.permute.xlu0 %3268
        %v3271 = vsel %vm349, %v3215, %v3245
        %v3272 = vsel %vm351, %v3271, %v3249
        %v3273 = vsel %vm353, %v3272, %v3253
        %v3274 = vsel %vm355, %v3273, %v3257
        %v3275 = vsel %vm357, %v3274, %v3261
        %v3276 = vsel %vm359, %v3275, %v3265
        %v3277 = vsel %vm361, %v3276, %v3269
        %3278 = vrot.lane.b32.xlu0 %v212, 127
        %v3279 = vpop.permute.xlu0 %3278
        %3280 = vrot.lane.b32.xlu0 %v214, 127
        %v3281 = vpop.permute.xlu0 %3280
        %3282 = vrot.lane.b32.xlu0 %v216, 127
        %v3283 = vpop.permute.xlu0 %3282
        %3284 = vrot.lane.b32.xlu0 %v218, 127
        %v3285 = vpop.permute.xlu0 %3284
        %v3290 = vcombine.low %v3279, %v3283
        %v3291 = vcombine.high %v3279, %v3283
        %v3293 = vunpack.c.l.s4 1983009808
        %v3294 = vunpack.c.0.s8 %v3293
        %v3295 = vlaneseq
        %v3296 = vshrl.u32 %v3295, 7
        %v3297 = vsub.s32 %v3294, %v3296
        %v3298 = vrot.slane %v3290, %v3297
        %v3300 = vunpack.c.l.s4 1983009808
        %v3301 = vunpack.c.0.s8 %v3300
        %v3302 = vlaneseq
        %v3303 = vshrl.u32 %v3302, 7
        %v3304 = vsub.s32 %v3301, %v3303
        %v3305 = vrot.slane %v3291, %v3304
        %v3306 = vcombine.low %v3281, %v3285
        %v3307 = vcombine.high %v3281, %v3285
        %v3309 = vunpack.c.l.s4 1983009808
        %v3310 = vunpack.c.0.s8 %v3309
        %v3311 = vlaneseq
        %v3312 = vshrl.u32 %v3311, 7
        %v3313 = vsub.s32 %v3310, %v3312
        %v3314 = vrot.slane %v3306, %v3313
        %v3316 = vunpack.c.l.s4 1983009808
        %v3317 = vunpack.c.0.s8 %v3316
        %v3318 = vlaneseq
        %v3319 = vshrl.u32 %v3318, 7
        %v3320 = vsub.s32 %v3317, %v3319
        %v3321 = vrot.slane %v3307, %v3320
        %v3322 = vcombine.low %v3298, %v3314
        %v3323 = vcombine.high %v3298, %v3314
        %v3325 = vunpack.c.l.s4 1934713408
        %v3326 = vunpack.c.0.s8 %v3325
        %v3327 = vlaneseq
        %v3328 = vshrl.u32 %v3327, 7
        %v3329 = vsub.s32 %v3326, %v3328
        %v3330 = vrot.slane %v3322, %v3329
        %v3332 = vunpack.c.l.s4 1934713408
        %v3333 = vunpack.c.0.s8 %v3332
        %v3334 = vlaneseq
        %v3335 = vshrl.u32 %v3334, 7
        %v3336 = vsub.s32 %v3333, %v3335
        %v3337 = vrot.slane %v3323, %v3336
        %v3338 = vcombine.low %v3305, %v3321
        %v3339 = vcombine.high %v3305, %v3321
        %v3341 = vunpack.c.l.s4 1934713408
        %v3342 = vunpack.c.0.s8 %v3341
        %v3343 = vlaneseq
        %v3344 = vshrl.u32 %v3343, 7
        %v3345 = vsub.s32 %v3342, %v3344
        %v3346 = vrot.slane %v3338, %v3345
        %v3348 = vunpack.c.l.s4 1934713408
        %v3349 = vunpack.c.0.s8 %v3348
        %v3350 = vlaneseq
        %v3351 = vshrl.u32 %v3350, 7
        %v3352 = vsub.s32 %v3349, %v3351
        %v3353 = vrot.slane %v3339, %v3352
        %v3354 = vcombine.high %v3330, 0.0
        %v3355 = vcombine.high %v3337, 0.0
        %v3356 = vcombine.high %v3346, 0.0
        %v3357 = vcombine.high %v3353, 0.0
        %3359 = vrot.lane.b32.xlu0 %v3354, 16
        %v3360 = vpop.permute.xlu0 %3359
        %3363 = vrot.lane.b32.xlu0 %v3337, 32
        %v3364 = vpop.permute.xlu0 %3363
        %3367 = vrot.lane.b32.xlu0 %v3355, 48
        %v3368 = vpop.permute.xlu0 %3367
        %3371 = vrot.lane.b32.xlu0 %v3346, 64
        %v3372 = vpop.permute.xlu0 %3371
        %3375 = vrot.lane.b32.xlu0 %v3356, 80
        %v3376 = vpop.permute.xlu0 %3375
        %3379 = vrot.lane.b32.xlu0 %v3353, 96
        %v3380 = vpop.permute.xlu0 %3379
        %3383 = vrot.lane.b32.xlu0 %v3357, 112
        %v3384 = vpop.permute.xlu0 %3383
        %v3386 = vsel %vm349, %v3330, %v3360
        %v3387 = vsel %vm351, %v3386, %v3364
        %v3388 = vsel %vm353, %v3387, %v3368
        %v3389 = vsel %vm355, %v3388, %v3372
        %v3390 = vsel %vm357, %v3389, %v3376
        %v3391 = vsel %vm359, %v3390, %v3380
        %v3392 = vsel %vm361, %v3391, %v3384
        %3393 = vrot.lane.b32.xlu0 %v212, 126
        %v3394 = vpop.permute.xlu0 %3393
        %3395 = vrot.lane.b32.xlu0 %v214, 126
        %v3396 = vpop.permute.xlu0 %3395
        %3397 = vrot.lane.b32.xlu0 %v216, 126
        %v3398 = vpop.permute.xlu0 %3397
        %3399 = vrot.lane.b32.xlu0 %v218, 126
        %v3400 = vpop.permute.xlu0 %3399
        %v3405 = vcombine.low %v3394, %v3398
        %v3406 = vcombine.high %v3394, %v3398
        %v3408 = vunpack.c.l.s4 1983009808
        %v3409 = vunpack.c.0.s8 %v3408
        %v3410 = vlaneseq
        %v3411 = vshrl.u32 %v3410, 7
        %v3412 = vsub.s32 %v3409, %v3411
        %v3413 = vrot.slane %v3405, %v3412
        %v3415 = vunpack.c.l.s4 1983009808
        %v3416 = vunpack.c.0.s8 %v3415
        %v3417 = vlaneseq
        %v3418 = vshrl.u32 %v3417, 7
        %v3419 = vsub.s32 %v3416, %v3418
        %v3420 = vrot.slane %v3406, %v3419
        %v3421 = vcombine.low %v3396, %v3400
        %v3422 = vcombine.high %v3396, %v3400
        %v3424 = vunpack.c.l.s4 1983009808
        %v3425 = vunpack.c.0.s8 %v3424
        %v3426 = vlaneseq
        %v3427 = vshrl.u32 %v3426, 7
        %v3428 = vsub.s32 %v3425, %v3427
        %v3429 = vrot.slane %v3421, %v3428
        %v3431 = vunpack.c.l.s4 1983009808
        %v3432 = vunpack.c.0.s8 %v3431
        %v3433 = vlaneseq
        %v3434 = vshrl.u32 %v3433, 7
        %v3435 = vsub.s32 %v3432, %v3434
        %v3436 = vrot.slane %v3422, %v3435
        %v3437 = vcombine.low %v3413, %v3429
        %v3438 = vcombine.high %v3413, %v3429
        %v3440 = vunpack.c.l.s4 1934713408
        %v3441 = vunpack.c.0.s8 %v3440
        %v3442 = vlaneseq
        %v3443 = vshrl.u32 %v3442, 7
        %v3444 = vsub.s32 %v3441, %v3443
        %v3445 = vrot.slane %v3437, %v3444
        %v3447 = vunpack.c.l.s4 1934713408
        %v3448 = vunpack.c.0.s8 %v3447
        %v3449 = vlaneseq
        %v3450 = vshrl.u32 %v3449, 7
        %v3451 = vsub.s32 %v3448, %v3450
        %v3452 = vrot.slane %v3438, %v3451
        %v3453 = vcombine.low %v3420, %v3436
        %v3454 = vcombine.high %v3420, %v3436
        %v3456 = vunpack.c.l.s4 1934713408
        %v3457 = vunpack.c.0.s8 %v3456
        %v3458 = vlaneseq
        %v3459 = vshrl.u32 %v3458, 7
        %v3460 = vsub.s32 %v3457, %v3459
        %v3461 = vrot.slane %v3453, %v3460
        %v3463 = vunpack.c.l.s4 1934713408
        %v3464 = vunpack.c.0.s8 %v3463
        %v3465 = vlaneseq
        %v3466 = vshrl.u32 %v3465, 7
        %v3467 = vsub.s32 %v3464, %v3466
        %v3468 = vrot.slane %v3454, %v3467
        %v3469 = vcombine.high %v3445, 0.0
        %v3470 = vcombine.high %v3452, 0.0
        %v3471 = vcombine.high %v3461, 0.0
        %v3472 = vcombine.high %v3468, 0.0
        %3474 = vrot.lane.b32.xlu0 %v3469, 16
        %v3475 = vpop.permute.xlu0 %3474
        %3478 = vrot.lane.b32.xlu0 %v3452, 32
        %v3479 = vpop.permute.xlu0 %3478
        %3482 = vrot.lane.b32.xlu0 %v3470, 48
        %v3483 = vpop.permute.xlu0 %3482
        %3486 = vrot.lane.b32.xlu0 %v3461, 64
        %v3487 = vpop.permute.xlu0 %3486
        %3490 = vrot.lane.b32.xlu0 %v3471, 80
        %v3491 = vpop.permute.xlu0 %3490
        %3494 = vrot.lane.b32.xlu0 %v3468, 96
        %v3495 = vpop.permute.xlu0 %3494
        %3498 = vrot.lane.b32.xlu0 %v3472, 112
        %v3499 = vpop.permute.xlu0 %3498
        %v3501 = vsel %vm349, %v3445, %v3475
        %v3502 = vsel %vm351, %v3501, %v3479
        %v3503 = vsel %vm353, %v3502, %v3483
        %v3504 = vsel %vm355, %v3503, %v3487
        %v3505 = vsel %vm357, %v3504, %v3491
        %v3506 = vsel %vm359, %v3505, %v3495
        %v3507 = vsel %vm361, %v3506, %v3499
        %3508 = vrot.lane.b32.xlu0 %v212, 125
        %v3509 = vpop.permute.xlu0 %3508
        %3510 = vrot.lane.b32.xlu0 %v214, 125
        %v3511 = vpop.permute.xlu0 %3510
        %3512 = vrot.lane.b32.xlu0 %v216, 125
        %v3513 = vpop.permute.xlu0 %3512
        %3514 = vrot.lane.b32.xlu0 %v218, 125
        %v3515 = vpop.permute.xlu0 %3514
        %v3520 = vcombine.low %v3509, %v3513
        %v3521 = vcombine.high %v3509, %v3513
        %v3523 = vunpack.c.l.s4 1983009808
        %v3524 = vunpack.c.0.s8 %v3523
        %v3525 = vlaneseq
        %v3526 = vshrl.u32 %v3525, 7
        %v3527 = vsub.s32 %v3524, %v3526
        %v3528 = vrot.slane %v3520, %v3527
        %v3530 = vunpack.c.l.s4 1983009808
        %v3531 = vunpack.c.0.s8 %v3530
        %v3532 = vlaneseq
        %v3533 = vshrl.u32 %v3532, 7
        %v3534 = vsub.s32 %v3531, %v3533
        %v3535 = vrot.slane %v3521, %v3534
        %v3536 = vcombine.low %v3511, %v3515
        %v3537 = vcombine.high %v3511, %v3515
        %v3539 = vunpack.c.l.s4 1983009808
        %v3540 = vunpack.c.0.s8 %v3539
        %v3541 = vlaneseq
        %v3542 = vshrl.u32 %v3541, 7
        %v3543 = vsub.s32 %v3540, %v3542
        %v3544 = vrot.slane %v3536, %v3543
        %v3546 = vunpack.c.l.s4 1983009808
        %v3547 = vunpack.c.0.s8 %v3546
        %v3548 = vlaneseq
        %v3549 = vshrl.u32 %v3548, 7
        %v3550 = vsub.s32 %v3547, %v3549
        %v3551 = vrot.slane %v3537, %v3550
        %v3552 = vcombine.low %v3528, %v3544
        %v3553 = vcombine.high %v3528, %v3544
        %v3555 = vunpack.c.l.s4 1934713408
        %v3556 = vunpack.c.0.s8 %v3555
        %v3557 = vlaneseq
        %v3558 = vshrl.u32 %v3557, 7
        %v3559 = vsub.s32 %v3556, %v3558
        %v3560 = vrot.slane %v3552, %v3559
        %v3562 = vunpack.c.l.s4 1934713408
        %v3563 = vunpack.c.0.s8 %v3562
        %v3564 = vlaneseq
        %v3565 = vshrl.u32 %v3564, 7
        %v3566 = vsub.s32 %v3563, %v3565
        %v3567 = vrot.slane %v3553, %v3566
        %v3568 = vcombine.low %v3535, %v3551
        %v3569 = vcombine.high %v3535, %v3551
        %v3571 = vunpack.c.l.s4 1934713408
        %v3572 = vunpack.c.0.s8 %v3571
        %v3573 = vlaneseq
        %v3574 = vshrl.u32 %v3573, 7
        %v3575 = vsub.s32 %v3572, %v3574
        %v3576 = vrot.slane %v3568, %v3575
        %v3578 = vunpack.c.l.s4 1934713408
        %v3579 = vunpack.c.0.s8 %v3578
        %v3580 = vlaneseq
        %v3581 = vshrl.u32 %v3580, 7
        %v3582 = vsub.s32 %v3579, %v3581
        %v3583 = vrot.slane %v3569, %v3582
        %v3584 = vcombine.high %v3560, 0.0
        %v3585 = vcombine.high %v3567, 0.0
        %v3586 = vcombine.high %v3576, 0.0
        %v3587 = vcombine.high %v3583, 0.0
        %3589 = vrot.lane.b32.xlu0 %v3584, 16
        %v3590 = vpop.permute.xlu0 %3589
        %3593 = vrot.lane.b32.xlu0 %v3567, 32
        %v3594 = vpop.permute.xlu0 %3593
        %3597 = vrot.lane.b32.xlu0 %v3585, 48
        %v3598 = vpop.permute.xlu0 %3597
        %3601 = vrot.lane.b32.xlu0 %v3576, 64
        %v3602 = vpop.permute.xlu0 %3601
        %3605 = vrot.lane.b32.xlu0 %v3586, 80
        %v3606 = vpop.permute.xlu0 %3605
        %3609 = vrot.lane.b32.xlu0 %v3583, 96
        %v3610 = vpop.permute.xlu0 %3609
        %3613 = vrot.lane.b32.xlu0 %v3587, 112
        %v3614 = vpop.permute.xlu0 %3613
        %v3616 = vsel %vm349, %v3560, %v3590
        %v3617 = vsel %vm351, %v3616, %v3594
        %v3618 = vsel %vm353, %v3617, %v3598
        %v3619 = vsel %vm355, %v3618, %v3602
        %v3620 = vsel %vm357, %v3619, %v3606
        %v3621 = vsel %vm359, %v3620, %v3610
        %v3622 = vsel %vm361, %v3621, %v3614
        %3623 = vrot.lane.b32.xlu0 %v212, 124
        %v3624 = vpop.permute.xlu0 %3623
        %3625 = vrot.lane.b32.xlu0 %v214, 124
        %v3626 = vpop.permute.xlu0 %3625
        %3627 = vrot.lane.b32.xlu0 %v216, 124
        %v3628 = vpop.permute.xlu0 %3627
        %3629 = vrot.lane.b32.xlu0 %v218, 124
        %v3630 = vpop.permute.xlu0 %3629
        %v3635 = vcombine.low %v3624, %v3628
        %v3636 = vcombine.high %v3624, %v3628
        %v3638 = vunpack.c.l.s4 1983009808
        %v3639 = vunpack.c.0.s8 %v3638
        %v3640 = vlaneseq
        %v3641 = vshrl.u32 %v3640, 7
        %v3642 = vsub.s32 %v3639, %v3641
        %v3643 = vrot.slane %v3635, %v3642
        %v3645 = vunpack.c.l.s4 1983009808
        %v3646 = vunpack.c.0.s8 %v3645
        %v3647 = vlaneseq
        %v3648 = vshrl.u32 %v3647, 7
        %v3649 = vsub.s32 %v3646, %v3648
        %v3650 = vrot.slane %v3636, %v3649
        %v3651 = vcombine.low %v3626, %v3630
        %v3652 = vcombine.high %v3626, %v3630
        %v3654 = vunpack.c.l.s4 1983009808
        %v3655 = vunpack.c.0.s8 %v3654
        %v3656 = vlaneseq
        %v3657 = vshrl.u32 %v3656, 7
        %v3658 = vsub.s32 %v3655, %v3657
        %v3659 = vrot.slane %v3651, %v3658
        %v3661 = vunpack.c.l.s4 1983009808
        %v3662 = vunpack.c.0.s8 %v3661
        %v3663 = vlaneseq
        %v3664 = vshrl.u32 %v3663, 7
        %v3665 = vsub.s32 %v3662, %v3664
        %v3666 = vrot.slane %v3652, %v3665
        %v3667 = vcombine.low %v3643, %v3659
        %v3668 = vcombine.high %v3643, %v3659
        %v3670 = vunpack.c.l.s4 1934713408
        %v3671 = vunpack.c.0.s8 %v3670
        %v3672 = vlaneseq
        %v3673 = vshrl.u32 %v3672, 7
        %v3674 = vsub.s32 %v3671, %v3673
        %v3675 = vrot.slane %v3667, %v3674
        %v3677 = vunpack.c.l.s4 1934713408
        %v3678 = vunpack.c.0.s8 %v3677
        %v3679 = vlaneseq
        %v3680 = vshrl.u32 %v3679, 7
        %v3681 = vsub.s32 %v3678, %v3680
        %v3682 = vrot.slane %v3668, %v3681
        %v3683 = vcombine.low %v3650, %v3666
        %v3684 = vcombine.high %v3650, %v3666
        %v3686 = vunpack.c.l.s4 1934713408
        %v3687 = vunpack.c.0.s8 %v3686
        %v3688 = vlaneseq
        %v3689 = vshrl.u32 %v3688, 7
        %v3690 = vsub.s32 %v3687, %v3689
        %v3691 = vrot.slane %v3683, %v3690
        %v3693 = vunpack.c.l.s4 1934713408
        %v3694 = vunpack.c.0.s8 %v3693
        %v3695 = vlaneseq
        %v3696 = vshrl.u32 %v3695, 7
        %v3697 = vsub.s32 %v3694, %v3696
        %v3698 = vrot.slane %v3684, %v3697
        %v3699 = vcombine.high %v3675, 0.0
        %v3700 = vcombine.high %v3682, 0.0
        %v3701 = vcombine.high %v3691, 0.0
        %v3702 = vcombine.high %v3698, 0.0
        %3704 = vrot.lane.b32.xlu0 %v3699, 16
        %v3705 = vpop.permute.xlu0 %3704
        %3708 = vrot.lane.b32.xlu0 %v3682, 32
        %v3709 = vpop.permute.xlu0 %3708
        %3712 = vrot.lane.b32.xlu0 %v3700, 48
        %v3713 = vpop.permute.xlu0 %3712
        %3716 = vrot.lane.b32.xlu0 %v3691, 64
        %v3717 = vpop.permute.xlu0 %3716
        %3720 = vrot.lane.b32.xlu0 %v3701, 80
        %v3721 = vpop.permute.xlu0 %3720
        %3724 = vrot.lane.b32.xlu0 %v3698, 96
        %v3725 = vpop.permute.xlu0 %3724
        %3728 = vrot.lane.b32.xlu0 %v3702, 112
        %v3729 = vpop.permute.xlu0 %3728
        %v3731 = vsel %vm349, %v3675, %v3705
        %v3732 = vsel %vm351, %v3731, %v3709
        %v3733 = vsel %vm353, %v3732, %v3713
        %v3734 = vsel %vm355, %v3733, %v3717
        %v3735 = vsel %vm357, %v3734, %v3721
        %v3736 = vsel %vm359, %v3735, %v3725
        %v3737 = vsel %vm361, %v3736, %v3729
        %3738 = vrot.lane.b32.xlu0 %v212, 123
        %v3739 = vpop.permute.xlu0 %3738
        %3740 = vrot.lane.b32.xlu0 %v214, 123
        %v3741 = vpop.permute.xlu0 %3740
        %3742 = vrot.lane.b32.xlu0 %v216, 123
        %v3743 = vpop.permute.xlu0 %3742
        %3744 = vrot.lane.b32.xlu0 %v218, 123
        %v3745 = vpop.permute.xlu0 %3744
        %v3750 = vcombine.low %v3739, %v3743
        %v3751 = vcombine.high %v3739, %v3743
        %v3753 = vunpack.c.l.s4 1983009808
        %v3754 = vunpack.c.0.s8 %v3753
        %v3755 = vlaneseq
        %v3756 = vshrl.u32 %v3755, 7
        %v3757 = vsub.s32 %v3754, %v3756
        %v3758 = vrot.slane %v3750, %v3757
        %v3760 = vunpack.c.l.s4 1983009808
        %v3761 = vunpack.c.0.s8 %v3760
        %v3762 = vlaneseq
        %v3763 = vshrl.u32 %v3762, 7
        %v3764 = vsub.s32 %v3761, %v3763
        %v3765 = vrot.slane %v3751, %v3764
        %v3766 = vcombine.low %v3741, %v3745
        %v3767 = vcombine.high %v3741, %v3745
        %v3769 = vunpack.c.l.s4 1983009808
        %v3770 = vunpack.c.0.s8 %v3769
        %v3771 = vlaneseq
        %v3772 = vshrl.u32 %v3771, 7
        %v3773 = vsub.s32 %v3770, %v3772
        %v3774 = vrot.slane %v3766, %v3773
        %v3776 = vunpack.c.l.s4 1983009808
        %v3777 = vunpack.c.0.s8 %v3776
        %v3778 = vlaneseq
        %v3779 = vshrl.u32 %v3778, 7
        %v3780 = vsub.s32 %v3777, %v3779
        %v3781 = vrot.slane %v3767, %v3780
        %v3782 = vcombine.low %v3758, %v3774
        %v3783 = vcombine.high %v3758, %v3774
        %v3785 = vunpack.c.l.s4 1934713408
        %v3786 = vunpack.c.0.s8 %v3785
        %v3787 = vlaneseq
        %v3788 = vshrl.u32 %v3787, 7
        %v3789 = vsub.s32 %v3786, %v3788
        %v3790 = vrot.slane %v3782, %v3789
        %v3792 = vunpack.c.l.s4 1934713408
        %v3793 = vunpack.c.0.s8 %v3792
        %v3794 = vlaneseq
        %v3795 = vshrl.u32 %v3794, 7
        %v3796 = vsub.s32 %v3793, %v3795
        %v3797 = vrot.slane %v3783, %v3796
        %v3798 = vcombine.low %v3765, %v3781
        %v3799 = vcombine.high %v3765, %v3781
        %v3801 = vunpack.c.l.s4 1934713408
        %v3802 = vunpack.c.0.s8 %v3801
        %v3803 = vlaneseq
        %v3804 = vshrl.u32 %v3803, 7
        %v3805 = vsub.s32 %v3802, %v3804
        %v3806 = vrot.slane %v3798, %v3805
        %v3808 = vunpack.c.l.s4 1934713408
        %v3809 = vunpack.c.0.s8 %v3808
        %v3810 = vlaneseq
        %v3811 = vshrl.u32 %v3810, 7
        %v3812 = vsub.s32 %v3809, %v3811
        %v3813 = vrot.slane %v3799, %v3812
        %v3814 = vcombine.high %v3790, 0.0
        %v3815 = vcombine.high %v3797, 0.0
        %v3816 = vcombine.high %v3806, 0.0
        %v3817 = vcombine.high %v3813, 0.0
        %3819 = vrot.lane.b32.xlu0 %v3814, 16
        %v3820 = vpop.permute.xlu0 %3819
        %3823 = vrot.lane.b32.xlu0 %v3797, 32
        %v3824 = vpop.permute.xlu0 %3823
        %3827 = vrot.lane.b32.xlu0 %v3815, 48
        %v3828 = vpop.permute.xlu0 %3827
        %3831 = vrot.lane.b32.xlu0 %v3806, 64
        %v3832 = vpop.permute.xlu0 %3831
        %3835 = vrot.lane.b32.xlu0 %v3816, 80
        %v3836 = vpop.permute.xlu0 %3835
        %3839 = vrot.lane.b32.xlu0 %v3813, 96
        %v3840 = vpop.permute.xlu0 %3839
        %3843 = vrot.lane.b32.xlu0 %v3817, 112
        %v3844 = vpop.permute.xlu0 %3843
        %v3846 = vsel %vm349, %v3790, %v3820
        %v3847 = vsel %vm351, %v3846, %v3824
        %v3848 = vsel %vm353, %v3847, %v3828
        %v3849 = vsel %vm355, %v3848, %v3832
        %v3850 = vsel %vm357, %v3849, %v3836
        %v3851 = vsel %vm359, %v3850, %v3840
        %v3852 = vsel %vm361, %v3851, %v3844
        %3853 = vrot.lane.b32.xlu0 %v212, 122
        %v3854 = vpop.permute.xlu0 %3853
        %3855 = vrot.lane.b32.xlu0 %v214, 122
        %v3856 = vpop.permute.xlu0 %3855
        %3857 = vrot.lane.b32.xlu0 %v216, 122
        %v3858 = vpop.permute.xlu0 %3857
        %3859 = vrot.lane.b32.xlu0 %v218, 122
        %v3860 = vpop.permute.xlu0 %3859
        %v3865 = vcombine.low %v3854, %v3858
        %v3866 = vcombine.high %v3854, %v3858
        %v3868 = vunpack.c.l.s4 1983009808
        %v3869 = vunpack.c.0.s8 %v3868
        %v3870 = vlaneseq
        %v3871 = vshrl.u32 %v3870, 7
        %v3872 = vsub.s32 %v3869, %v3871
        %v3873 = vrot.slane %v3865, %v3872
        %v3875 = vunpack.c.l.s4 1983009808
        %v3876 = vunpack.c.0.s8 %v3875
        %v3877 = vlaneseq
        %v3878 = vshrl.u32 %v3877, 7
        %v3879 = vsub.s32 %v3876, %v3878
        %v3880 = vrot.slane %v3866, %v3879
        %v3881 = vcombine.low %v3856, %v3860
        %v3882 = vcombine.high %v3856, %v3860
        %v3884 = vunpack.c.l.s4 1983009808
        %v3885 = vunpack.c.0.s8 %v3884
        %v3886 = vlaneseq
        %v3887 = vshrl.u32 %v3886, 7
        %v3888 = vsub.s32 %v3885, %v3887
        %v3889 = vrot.slane %v3881, %v3888
        %v3891 = vunpack.c.l.s4 1983009808
        %v3892 = vunpack.c.0.s8 %v3891
        %v3893 = vlaneseq
        %v3894 = vshrl.u32 %v3893, 7
        %v3895 = vsub.s32 %v3892, %v3894
        %v3896 = vrot.slane %v3882, %v3895
        %v3897 = vcombine.low %v3873, %v3889
        %v3898 = vcombine.high %v3873, %v3889
        %v3900 = vunpack.c.l.s4 1934713408
        %v3901 = vunpack.c.0.s8 %v3900
        %v3902 = vlaneseq
        %v3903 = vshrl.u32 %v3902, 7
        %v3904 = vsub.s32 %v3901, %v3903
        %v3905 = vrot.slane %v3897, %v3904
        %v3907 = vunpack.c.l.s4 1934713408
        %v3908 = vunpack.c.0.s8 %v3907
        %v3909 = vlaneseq
        %v3910 = vshrl.u32 %v3909, 7
        %v3911 = vsub.s32 %v3908, %v3910
        %v3912 = vrot.slane %v3898, %v3911
        %v3913 = vcombine.low %v3880, %v3896
        %v3914 = vcombine.high %v3880, %v3896
        %v3916 = vunpack.c.l.s4 1934713408
        %v3917 = vunpack.c.0.s8 %v3916
        %v3918 = vlaneseq
        %v3919 = vshrl.u32 %v3918, 7
        %v3920 = vsub.s32 %v3917, %v3919
        %v3921 = vrot.slane %v3913, %v3920
        %v3923 = vunpack.c.l.s4 1934713408
        %v3924 = vunpack.c.0.s8 %v3923
        %v3925 = vlaneseq
        %v3926 = vshrl.u32 %v3925, 7
        %v3927 = vsub.s32 %v3924, %v3926
        %v3928 = vrot.slane %v3914, %v3927
        %v3929 = vcombine.high %v3905, 0.0
        %v3930 = vcombine.high %v3912, 0.0
        %v3931 = vcombine.high %v3921, 0.0
        %v3932 = vcombine.high %v3928, 0.0
        %3934 = vrot.lane.b32.xlu0 %v3929, 16
        %v3935 = vpop.permute.xlu0 %3934
        %3938 = vrot.lane.b32.xlu0 %v3912, 32
        %v3939 = vpop.permute.xlu0 %3938
        %3942 = vrot.lane.b32.xlu0 %v3930, 48
        %v3943 = vpop.permute.xlu0 %3942
        %3946 = vrot.lane.b32.xlu0 %v3921, 64
        %v3947 = vpop.permute.xlu0 %3946
        %3950 = vrot.lane.b32.xlu0 %v3931, 80
        %v3951 = vpop.permute.xlu0 %3950
        %3954 = vrot.lane.b32.xlu0 %v3928, 96
        %v3955 = vpop.permute.xlu0 %3954
        %3958 = vrot.lane.b32.xlu0 %v3932, 112
        %v3959 = vpop.permute.xlu0 %3958
        %v3961 = vsel %vm349, %v3905, %v3935
        %v3962 = vsel %vm351, %v3961, %v3939
        %v3963 = vsel %vm353, %v3962, %v3943
        %v3964 = vsel %vm355, %v3963, %v3947
        %v3965 = vsel %vm357, %v3964, %v3951
        %v3966 = vsel %vm359, %v3965, %v3955
        %v3967 = vsel %vm361, %v3966, %v3959
        %v3972 = vcombine.low %v1312, %v1318
        %v3973 = vcombine.high %v1312, %v1318
        %v3975 = vunpack.c.l.s4 1983009808
        %v3976 = vunpack.c.0.s8 %v3975
        %v3977 = vlaneseq
        %v3978 = vshrl.u32 %v3977, 7
        %v3979 = vsub.s32 %v3976, %v3978
        %v3980 = vrot.slane %v3972, %v3979
        %v3982 = vunpack.c.l.s4 1983009808
        %v3983 = vunpack.c.0.s8 %v3982
        %v3984 = vlaneseq
        %v3985 = vshrl.u32 %v3984, 7
        %v3986 = vsub.s32 %v3983, %v3985
        %v3987 = vrot.slane %v3973, %v3986
        %v3988 = vcombine.low %v1315, %v1321
        %v3989 = vcombine.high %v1315, %v1321
        %v3991 = vunpack.c.l.s4 1983009808
        %v3992 = vunpack.c.0.s8 %v3991
        %v3993 = vlaneseq
        %v3994 = vshrl.u32 %v3993, 7
        %v3995 = vsub.s32 %v3992, %v3994
        %v3996 = vrot.slane %v3988, %v3995
        %v3998 = vunpack.c.l.s4 1983009808
        %v3999 = vunpack.c.0.s8 %v3998
        %v4000 = vlaneseq
        %v4001 = vshrl.u32 %v4000, 7
        %v4002 = vsub.s32 %v3999, %v4001
        %v4003 = vrot.slane %v3989, %v4002
        %v4004 = vcombine.low %v3980, %v3996
        %v4005 = vcombine.high %v3980, %v3996
        %v4007 = vunpack.c.l.s4 1934713408
        %v4008 = vunpack.c.0.s8 %v4007
        %v4009 = vlaneseq
        %v4010 = vshrl.u32 %v4009, 7
        %v4011 = vsub.s32 %v4008, %v4010
        %v4012 = vrot.slane %v4004, %v4011
        %v4014 = vunpack.c.l.s4 1934713408
        %v4015 = vunpack.c.0.s8 %v4014
        %v4016 = vlaneseq
        %v4017 = vshrl.u32 %v4016, 7
        %v4018 = vsub.s32 %v4015, %v4017
        %v4019 = vrot.slane %v4005, %v4018
        %v4020 = vcombine.low %v3987, %v4003
        %v4021 = vcombine.high %v3987, %v4003
        %v4023 = vunpack.c.l.s4 1934713408
        %v4024 = vunpack.c.0.s8 %v4023
        %v4025 = vlaneseq
        %v4026 = vshrl.u32 %v4025, 7
        %v4027 = vsub.s32 %v4024, %v4026
        %v4028 = vrot.slane %v4020, %v4027
        %v4030 = vunpack.c.l.s4 1934713408
        %v4031 = vunpack.c.0.s8 %v4030
        %v4032 = vlaneseq
        %v4033 = vshrl.u32 %v4032, 7
        %v4034 = vsub.s32 %v4031, %v4033
        %v4035 = vrot.slane %v4021, %v4034
        %v4036 = vcombine.high %v4012, 0.0
        %v4037 = vcombine.high %v4019, 0.0
        %v4038 = vcombine.high %v4028, 0.0
        %v4039 = vcombine.high %v4035, 0.0
        %4041 = vrot.lane.b32.xlu0 %v4036, 16
        %v4042 = vpop.permute.xlu0 %4041
        %4045 = vrot.lane.b32.xlu0 %v4019, 32
        %v4046 = vpop.permute.xlu0 %4045
        %4049 = vrot.lane.b32.xlu0 %v4037, 48
        %v4050 = vpop.permute.xlu0 %4049
        %4053 = vrot.lane.b32.xlu0 %v4028, 64
        %v4054 = vpop.permute.xlu0 %4053
        %4057 = vrot.lane.b32.xlu0 %v4038, 80
        %v4058 = vpop.permute.xlu0 %4057
        %4061 = vrot.lane.b32.xlu0 %v4035, 96
        %v4062 = vpop.permute.xlu0 %4061
        %4065 = vrot.lane.b32.xlu0 %v4039, 112
        %v4066 = vpop.permute.xlu0 %4065
        %v4068 = vsel %vm349, %v4012, %v4042
        %v4069 = vsel %vm351, %v4068, %v4046
        %v4070 = vsel %vm353, %v4069, %v4050
        %v4071 = vsel %vm355, %v4070, %v4054
        %v4072 = vsel %vm357, %v4071, %v4058
        %v4073 = vsel %vm359, %v4072, %v4062
        %v4074 = vsel %vm361, %v4073, %v4066
        %4075 = vrot.lane.b32.xlu0 %v1312, 122
        %v4076 = vpop.permute.xlu0 %4075
        %4077 = vrot.lane.b32.xlu0 %v1315, 122
        %v4078 = vpop.permute.xlu0 %4077
        %4079 = vrot.lane.b32.xlu0 %v1318, 122
        %v4080 = vpop.permute.xlu0 %4079
        %4081 = vrot.lane.b32.xlu0 %v1321, 122
        %v4082 = vpop.permute.xlu0 %4081
        %v4087 = vcombine.low %v4076, %v4080
        %v4088 = vcombine.high %v4076, %v4080
        %v4090 = vunpack.c.l.s4 1983009808
        %v4091 = vunpack.c.0.s8 %v4090
        %v4092 = vlaneseq
        %v4093 = vshrl.u32 %v4092, 7
        %v4094 = vsub.s32 %v4091, %v4093
        %v4095 = vrot.slane %v4087, %v4094
        %v4097 = vunpack.c.l.s4 1983009808
        %v4098 = vunpack.c.0.s8 %v4097
        %v4099 = vlaneseq
        %v4100 = vshrl.u32 %v4099, 7
        %v4101 = vsub.s32 %v4098, %v4100
        %v4102 = vrot.slane %v4088, %v4101
        %v4103 = vcombine.low %v4078, %v4082
        %v4104 = vcombine.high %v4078, %v4082
        %v4106 = vunpack.c.l.s4 1983009808
        %v4107 = vunpack.c.0.s8 %v4106
        %v4108 = vlaneseq
        %v4109 = vshrl.u32 %v4108, 7
        %v4110 = vsub.s32 %v4107, %v4109
        %v4111 = vrot.slane %v4103, %v4110
        %v4113 = vunpack.c.l.s4 1983009808
        %v4114 = vunpack.c.0.s8 %v4113
        %v4115 = vlaneseq
        %v4116 = vshrl.u32 %v4115, 7
        %v4117 = vsub.s32 %v4114, %v4116
        %v4118 = vrot.slane %v4104, %v4117
        %v4119 = vcombine.low %v4095, %v4111
        %v4120 = vcombine.high %v4095, %v4111
        %v4122 = vunpack.c.l.s4 1934713408
        %v4123 = vunpack.c.0.s8 %v4122
        %v4124 = vlaneseq
        %v4125 = vshrl.u32 %v4124, 7
        %v4126 = vsub.s32 %v4123, %v4125
        %v4127 = vrot.slane %v4119, %v4126
        %v4129 = vunpack.c.l.s4 1934713408
        %v4130 = vunpack.c.0.s8 %v4129
        %v4131 = vlaneseq
        %v4132 = vshrl.u32 %v4131, 7
        %v4133 = vsub.s32 %v4130, %v4132
        %v4134 = vrot.slane %v4120, %v4133
        %v4135 = vcombine.low %v4102, %v4118
        %v4136 = vcombine.high %v4102, %v4118
        %v4138 = vunpack.c.l.s4 1934713408
        %v4139 = vunpack.c.0.s8 %v4138
        %v4140 = vlaneseq
        %v4141 = vshrl.u32 %v4140, 7
        %v4142 = vsub.s32 %v4139, %v4141
        %v4143 = vrot.slane %v4135, %v4142
        %v4145 = vunpack.c.l.s4 1934713408
        %v4146 = vunpack.c.0.s8 %v4145
        %v4147 = vlaneseq
        %v4148 = vshrl.u32 %v4147, 7
        %v4149 = vsub.s32 %v4146, %v4148
        %v4150 = vrot.slane %v4136, %v4149
        %v4151 = vcombine.high %v4127, 0.0
        %v4152 = vcombine.high %v4134, 0.0
        %v4153 = vcombine.high %v4143, 0.0
        %v4154 = vcombine.high %v4150, 0.0
        %4156 = vrot.lane.b32.xlu0 %v4151, 16
        %v4157 = vpop.permute.xlu0 %4156
        %4160 = vrot.lane.b32.xlu0 %v4134, 32
        %v4161 = vpop.permute.xlu0 %4160
        %4164 = vrot.lane.b32.xlu0 %v4152, 48
        %v4165 = vpop.permute.xlu0 %4164
        %4168 = vrot.lane.b32.xlu0 %v4143, 64
        %v4169 = vpop.permute.xlu0 %4168
        %4172 = vrot.lane.b32.xlu0 %v4153, 80
        %v4173 = vpop.permute.xlu0 %4172
        %4176 = vrot.lane.b32.xlu0 %v4150, 96
        %v4177 = vpop.permute.xlu0 %4176
        %4180 = vrot.lane.b32.xlu0 %v4154, 112
        %v4181 = vpop.permute.xlu0 %4180
        %v4183 = vsel %vm349, %v4127, %v4157
        %v4184 = vsel %vm351, %v4183, %v4161
        %v4185 = vsel %vm353, %v4184, %v4165
        %v4186 = vsel %vm355, %v4185, %v4169
        %v4187 = vsel %vm357, %v4186, %v4173
        %v4188 = vsel %vm359, %v4187, %v4177
        %v4189 = vsel %vm361, %v4188, %v4181
        %v4194 = vcombine.low %v231, %v237
        %v4195 = vcombine.high %v231, %v237
        %v4197 = vunpack.c.l.s4 1983009808
        %v4198 = vunpack.c.0.s8 %v4197
        %v4199 = vlaneseq
        %v4200 = vshrl.u32 %v4199, 7
        %v4201 = vsub.s32 %v4198, %v4200
        %v4202 = vrot.slane %v4194, %v4201
        %v4204 = vunpack.c.l.s4 1983009808
        %v4205 = vunpack.c.0.s8 %v4204
        %v4206 = vlaneseq
        %v4207 = vshrl.u32 %v4206, 7
        %v4208 = vsub.s32 %v4205, %v4207
        %v4209 = vrot.slane %v4195, %v4208
        %v4210 = vcombine.low %v234, %v240
        %v4211 = vcombine.high %v234, %v240
        %v4213 = vunpack.c.l.s4 1983009808
        %v4214 = vunpack.c.0.s8 %v4213
        %v4215 = vlaneseq
        %v4216 = vshrl.u32 %v4215, 7
        %v4217 = vsub.s32 %v4214, %v4216
        %v4218 = vrot.slane %v4210, %v4217
        %v4220 = vunpack.c.l.s4 1983009808
        %v4221 = vunpack.c.0.s8 %v4220
        %v4222 = vlaneseq
        %v4223 = vshrl.u32 %v4222, 7
        %v4224 = vsub.s32 %v4221, %v4223
        %v4225 = vrot.slane %v4211, %v4224
        %v4226 = vcombine.low %v4202, %v4218
        %v4227 = vcombine.high %v4202, %v4218
        %v4229 = vunpack.c.l.s4 1934713408
        %v4230 = vunpack.c.0.s8 %v4229
        %v4231 = vlaneseq
        %v4232 = vshrl.u32 %v4231, 7
        %v4233 = vsub.s32 %v4230, %v4232
        %v4234 = vrot.slane %v4226, %v4233
        %v4236 = vunpack.c.l.s4 1934713408
        %v4237 = vunpack.c.0.s8 %v4236
        %v4238 = vlaneseq
        %v4239 = vshrl.u32 %v4238, 7
        %v4240 = vsub.s32 %v4237, %v4239
        %v4241 = vrot.slane %v4227, %v4240
        %v4242 = vcombine.low %v4209, %v4225
        %v4243 = vcombine.high %v4209, %v4225
        %v4245 = vunpack.c.l.s4 1934713408
        %v4246 = vunpack.c.0.s8 %v4245
        %v4247 = vlaneseq
        %v4248 = vshrl.u32 %v4247, 7
        %v4249 = vsub.s32 %v4246, %v4248
        %v4250 = vrot.slane %v4242, %v4249
        %v4252 = vunpack.c.l.s4 1934713408
        %v4253 = vunpack.c.0.s8 %v4252
        %v4254 = vlaneseq
        %v4255 = vshrl.u32 %v4254, 7
        %v4256 = vsub.s32 %v4253, %v4255
        %v4257 = vrot.slane %v4243, %v4256
        %v4258 = vcombine.high %v4234, 0.0
        %v4259 = vcombine.high %v4241, 0.0
        %v4260 = vcombine.high %v4250, 0.0
        %v4261 = vcombine.high %v4257, 0.0
        %4263 = vrot.lane.b32.xlu0 %v4258, 16
        %v4264 = vpop.permute.xlu0 %4263
        %4267 = vrot.lane.b32.xlu0 %v4241, 32
        %v4268 = vpop.permute.xlu0 %4267
        %4271 = vrot.lane.b32.xlu0 %v4259, 48
        %v4272 = vpop.permute.xlu0 %4271
        %4275 = vrot.lane.b32.xlu0 %v4250, 64
        %v4276 = vpop.permute.xlu0 %4275
        %4279 = vrot.lane.b32.xlu0 %v4260, 80
        %v4280 = vpop.permute.xlu0 %4279
        %4283 = vrot.lane.b32.xlu0 %v4257, 96
        %v4284 = vpop.permute.xlu0 %4283
        %4287 = vrot.lane.b32.xlu0 %v4261, 112
        %v4288 = vpop.permute.xlu0 %4287
        %v4290 = vsel %vm349, %v4234, %v4264
        %v4291 = vsel %vm351, %v4290, %v4268
        %v4292 = vsel %vm353, %v4291, %v4272
        %v4293 = vsel %vm355, %v4292, %v4276
        %v4294 = vsel %vm357, %v4293, %v4280
        %v4295 = vsel %vm359, %v4294, %v4284
        %v4296 = vsel %vm361, %v4295, %v4288
        %4297 = vrot.lane.b32.xlu0 %v231, 122
        %v4298 = vpop.permute.xlu0 %4297
        %4299 = vrot.lane.b32.xlu0 %v234, 122
        %v4300 = vpop.permute.xlu0 %4299
        %4301 = vrot.lane.b32.xlu0 %v237, 122
        %v4302 = vpop.permute.xlu0 %4301
        %4303 = vrot.lane.b32.xlu0 %v240, 122
        %v4304 = vpop.permute.xlu0 %4303
        %v4309 = vcombine.low %v4298, %v4302
        %v4310 = vcombine.high %v4298, %v4302
        %v4312 = vunpack.c.l.s4 1983009808
        %v4313 = vunpack.c.0.s8 %v4312
        %v4314 = vlaneseq
        %v4315 = vshrl.u32 %v4314, 7
        %v4316 = vsub.s32 %v4313, %v4315
        %v4317 = vrot.slane %v4309, %v4316
        %v4319 = vunpack.c.l.s4 1983009808
        %v4320 = vunpack.c.0.s8 %v4319
        %v4321 = vlaneseq
        %v4322 = vshrl.u32 %v4321, 7
        %v4323 = vsub.s32 %v4320, %v4322
        %v4324 = vrot.slane %v4310, %v4323
        %v4325 = vcombine.low %v4300, %v4304
        %v4326 = vcombine.high %v4300, %v4304
        %v4328 = vunpack.c.l.s4 1983009808
        %v4329 = vunpack.c.0.s8 %v4328
        %v4330 = vlaneseq
        %v4331 = vshrl.u32 %v4330, 7
        %v4332 = vsub.s32 %v4329, %v4331
        %v4333 = vrot.slane %v4325, %v4332
        %v4335 = vunpack.c.l.s4 1983009808
        %v4336 = vunpack.c.0.s8 %v4335
        %v4337 = vlaneseq
        %v4338 = vshrl.u32 %v4337, 7
        %v4339 = vsub.s32 %v4336, %v4338
        %v4340 = vrot.slane %v4326, %v4339
        %v4341 = vcombine.low %v4317, %v4333
        %v4342 = vcombine.high %v4317, %v4333
        %v4344 = vunpack.c.l.s4 1934713408
        %v4345 = vunpack.c.0.s8 %v4344
        %v4346 = vlaneseq
        %v4347 = vshrl.u32 %v4346, 7
        %v4348 = vsub.s32 %v4345, %v4347
        %v4349 = vrot.slane %v4341, %v4348
        %v4351 = vunpack.c.l.s4 1934713408
        %v4352 = vunpack.c.0.s8 %v4351
        %v4353 = vlaneseq
        %v4354 = vshrl.u32 %v4353, 7
        %v4355 = vsub.s32 %v4352, %v4354
        %v4356 = vrot.slane %v4342, %v4355
        %v4357 = vcombine.low %v4324, %v4340
        %v4358 = vcombine.high %v4324, %v4340
        %v4360 = vunpack.c.l.s4 1934713408
        %v4361 = vunpack.c.0.s8 %v4360
        %v4362 = vlaneseq
        %v4363 = vshrl.u32 %v4362, 7
        %v4364 = vsub.s32 %v4361, %v4363
        %v4365 = vrot.slane %v4357, %v4364
        %v4367 = vunpack.c.l.s4 1934713408
        %v4368 = vunpack.c.0.s8 %v4367
        %v4369 = vlaneseq
        %v4370 = vshrl.u32 %v4369, 7
        %v4371 = vsub.s32 %v4368, %v4370
        %v4372 = vrot.slane %v4358, %v4371
        %v4373 = vcombine.high %v4349, 0.0
        %v4374 = vcombine.high %v4356, 0.0
        %v4375 = vcombine.high %v4365, 0.0
        %v4376 = vcombine.high %v4372, 0.0
        %4378 = vrot.lane.b32.xlu0 %v4373, 16
        %v4379 = vpop.permute.xlu0 %4378
        %4382 = vrot.lane.b32.xlu0 %v4356, 32
        %v4383 = vpop.permute.xlu0 %4382
        %4386 = vrot.lane.b32.xlu0 %v4374, 48
        %v4387 = vpop.permute.xlu0 %4386
        %4390 = vrot.lane.b32.xlu0 %v4365, 64
        %v4391 = vpop.permute.xlu0 %4390
        %4394 = vrot.lane.b32.xlu0 %v4375, 80
        %v4395 = vpop.permute.xlu0 %4394
        %4398 = vrot.lane.b32.xlu0 %v4372, 96
        %v4399 = vpop.permute.xlu0 %4398
        %4402 = vrot.lane.b32.xlu0 %v4376, 112
        %v4403 = vpop.permute.xlu0 %4402
        %v4405 = vsel %vm349, %v4349, %v4379
        %v4406 = vsel %vm351, %v4405, %v4383
        %v4407 = vsel %vm353, %v4406, %v4387
        %v4408 = vsel %vm355, %v4407, %v4391
        %v4409 = vsel %vm357, %v4408, %v4395
        %v4410 = vsel %vm359, %v4409, %v4399
        %v4411 = vsel %vm361, %v4410, %v4403
        %v4416 = vcombine.low %v596, %v602
        %v4417 = vcombine.high %v596, %v602
        %v4419 = vunpack.c.l.s4 1983009808
        %v4420 = vunpack.c.0.s8 %v4419
        %v4421 = vlaneseq
        %v4422 = vshrl.u32 %v4421, 7
        %v4423 = vsub.s32 %v4420, %v4422
        %v4424 = vrot.slane %v4416, %v4423
        %v4426 = vunpack.c.l.s4 1983009808
        %v4427 = vunpack.c.0.s8 %v4426
        %v4428 = vlaneseq
        %v4429 = vshrl.u32 %v4428, 7
        %v4430 = vsub.s32 %v4427, %v4429
        %v4431 = vrot.slane %v4417, %v4430
        %v4432 = vcombine.low %v599, %v605
        %v4433 = vcombine.high %v599, %v605
        %v4435 = vunpack.c.l.s4 1983009808
        %v4436 = vunpack.c.0.s8 %v4435
        %v4437 = vlaneseq
        %v4438 = vshrl.u32 %v4437, 7
        %v4439 = vsub.s32 %v4436, %v4438
        %v4440 = vrot.slane %v4432, %v4439
        %v4442 = vunpack.c.l.s4 1983009808
        %v4443 = vunpack.c.0.s8 %v4442
        %v4444 = vlaneseq
        %v4445 = vshrl.u32 %v4444, 7
        %v4446 = vsub.s32 %v4443, %v4445
        %v4447 = vrot.slane %v4433, %v4446
        %v4448 = vcombine.low %v4424, %v4440
        %v4449 = vcombine.high %v4424, %v4440
        %v4451 = vunpack.c.l.s4 1934713408
        %v4452 = vunpack.c.0.s8 %v4451
        %v4453 = vlaneseq
        %v4454 = vshrl.u32 %v4453, 7
        %v4455 = vsub.s32 %v4452, %v4454
        %v4456 = vrot.slane %v4448, %v4455
        %v4458 = vunpack.c.l.s4 1934713408
        %v4459 = vunpack.c.0.s8 %v4458
        %v4460 = vlaneseq
        %v4461 = vshrl.u32 %v4460, 7
        %v4462 = vsub.s32 %v4459, %v4461
        %v4463 = vrot.slane %v4449, %v4462
        %v4464 = vcombine.low %v4431, %v4447
        %v4465 = vcombine.high %v4431, %v4447
        %v4467 = vunpack.c.l.s4 1934713408
        %v4468 = vunpack.c.0.s8 %v4467
        %v4469 = vlaneseq
        %v4470 = vshrl.u32 %v4469, 7
        %v4471 = vsub.s32 %v4468, %v4470
        %v4472 = vrot.slane %v4464, %v4471
        %v4474 = vunpack.c.l.s4 1934713408
        %v4475 = vunpack.c.0.s8 %v4474
        %v4476 = vlaneseq
        %v4477 = vshrl.u32 %v4476, 7
        %v4478 = vsub.s32 %v4475, %v4477
        %v4479 = vrot.slane %v4465, %v4478
        %v4480 = vcombine.high %v4456, 0.0
        %v4481 = vcombine.high %v4463, 0.0
        %v4482 = vcombine.high %v4472, 0.0
        %v4483 = vcombine.high %v4479, 0.0
        %4485 = vrot.lane.b32.xlu0 %v4480, 16
        %v4486 = vpop.permute.xlu0 %4485
        %4489 = vrot.lane.b32.xlu0 %v4463, 32
        %v4490 = vpop.permute.xlu0 %4489
        %4493 = vrot.lane.b32.xlu0 %v4481, 48
        %v4494 = vpop.permute.xlu0 %4493
        %4497 = vrot.lane.b32.xlu0 %v4472, 64
        %v4498 = vpop.permute.xlu0 %4497
        %4501 = vrot.lane.b32.xlu0 %v4482, 80
        %v4502 = vpop.permute.xlu0 %4501
        %4505 = vrot.lane.b32.xlu0 %v4479, 96
        %v4506 = vpop.permute.xlu0 %4505
        %4509 = vrot.lane.b32.xlu0 %v4483, 112
        %v4510 = vpop.permute.xlu0 %4509
        %v4512 = vsel %vm349, %v4456, %v4486
        %v4513 = vsel %vm351, %v4512, %v4490
        %v4514 = vsel %vm353, %v4513, %v4494
        %v4515 = vsel %vm355, %v4514, %v4498
        %v4516 = vsel %vm357, %v4515, %v4502
        %v4517 = vsel %vm359, %v4516, %v4506
        %v4518 = vsel %vm361, %v4517, %v4510
        %4519 = vrot.lane.b32.xlu0 %v596, 122
        %v4520 = vpop.permute.xlu0 %4519
        %4521 = vrot.lane.b32.xlu0 %v599, 122
        %v4522 = vpop.permute.xlu0 %4521
        %4523 = vrot.lane.b32.xlu0 %v602, 122
        %v4524 = vpop.permute.xlu0 %4523
        %4525 = vrot.lane.b32.xlu0 %v605, 122
        %v4526 = vpop.permute.xlu0 %4525
        %v4531 = vcombine.low %v4520, %v4524
        %v4532 = vcombine.high %v4520, %v4524
        %v4534 = vunpack.c.l.s4 1983009808
        %v4535 = vunpack.c.0.s8 %v4534
        %v4536 = vlaneseq
        %v4537 = vshrl.u32 %v4536, 7
        %v4538 = vsub.s32 %v4535, %v4537
        %v4539 = vrot.slane %v4531, %v4538
        %v4541 = vunpack.c.l.s4 1983009808
        %v4542 = vunpack.c.0.s8 %v4541
        %v4543 = vlaneseq
        %v4544 = vshrl.u32 %v4543, 7
        %v4545 = vsub.s32 %v4542, %v4544
        %v4546 = vrot.slane %v4532, %v4545
        %v4547 = vcombine.low %v4522, %v4526
        %v4548 = vcombine.high %v4522, %v4526
        %v4550 = vunpack.c.l.s4 1983009808
        %v4551 = vunpack.c.0.s8 %v4550
        %v4552 = vlaneseq
        %v4553 = vshrl.u32 %v4552, 7
        %v4554 = vsub.s32 %v4551, %v4553
        %v4555 = vrot.slane %v4547, %v4554
        %v4557 = vunpack.c.l.s4 1983009808
        %v4558 = vunpack.c.0.s8 %v4557
        %v4559 = vlaneseq
        %v4560 = vshrl.u32 %v4559, 7
        %v4561 = vsub.s32 %v4558, %v4560
        %v4562 = vrot.slane %v4548, %v4561
        %v4563 = vcombine.low %v4539, %v4555
        %v4564 = vcombine.high %v4539, %v4555
        %v4566 = vunpack.c.l.s4 1934713408
        %v4567 = vunpack.c.0.s8 %v4566
        %v4568 = vlaneseq
        %v4569 = vshrl.u32 %v4568, 7
        %v4570 = vsub.s32 %v4567, %v4569
        %v4571 = vrot.slane %v4563, %v4570
        %v4573 = vunpack.c.l.s4 1934713408
        %v4574 = vunpack.c.0.s8 %v4573
        %v4575 = vlaneseq
        %v4576 = vshrl.u32 %v4575, 7
        %v4577 = vsub.s32 %v4574, %v4576
        %v4578 = vrot.slane %v4564, %v4577
        %v4579 = vcombine.low %v4546, %v4562
        %v4580 = vcombine.high %v4546, %v4562
        %v4582 = vunpack.c.l.s4 1934713408
        %v4583 = vunpack.c.0.s8 %v4582
        %v4584 = vlaneseq
        %v4585 = vshrl.u32 %v4584, 7
        %v4586 = vsub.s32 %v4583, %v4585
        %v4587 = vrot.slane %v4579, %v4586
        %v4589 = vunpack.c.l.s4 1934713408
        %v4590 = vunpack.c.0.s8 %v4589
        %v4591 = vlaneseq
        %v4592 = vshrl.u32 %v4591, 7
        %v4593 = vsub.s32 %v4590, %v4592
        %v4594 = vrot.slane %v4580, %v4593
        %v4595 = vcombine.high %v4571, 0.0
        %v4596 = vcombine.high %v4578, 0.0
        %v4597 = vcombine.high %v4587, 0.0
        %v4598 = vcombine.high %v4594, 0.0
        %4600 = vrot.lane.b32.xlu0 %v4595, 16
        %v4601 = vpop.permute.xlu0 %4600
        %4604 = vrot.lane.b32.xlu0 %v4578, 32
        %v4605 = vpop.permute.xlu0 %4604
        %4608 = vrot.lane.b32.xlu0 %v4596, 48
        %v4609 = vpop.permute.xlu0 %4608
        %4612 = vrot.lane.b32.xlu0 %v4587, 64
        %v4613 = vpop.permute.xlu0 %4612
        %4616 = vrot.lane.b32.xlu0 %v4597, 80
        %v4617 = vpop.permute.xlu0 %4616
        %4620 = vrot.lane.b32.xlu0 %v4594, 96
        %v4621 = vpop.permute.xlu0 %4620
        %4624 = vrot.lane.b32.xlu0 %v4598, 112
        %v4625 = vpop.permute.xlu0 %4624
        %v4627 = vsel %vm349, %v4571, %v4601
        %v4628 = vsel %vm351, %v4627, %v4605
        %v4629 = vsel %vm353, %v4628, %v4609
        %v4630 = vsel %vm355, %v4629, %v4613
        %v4631 = vsel %vm357, %v4630, %v4617
        %v4632 = vsel %vm359, %v4631, %v4621
        %v4633 = vsel %vm361, %v4632, %v4625
        %v4638 = vcombine.low %v954, %v960
        %v4639 = vcombine.high %v954, %v960
        %v4641 = vunpack.c.l.s4 1983009808
        %v4642 = vunpack.c.0.s8 %v4641
        %v4643 = vlaneseq
        %v4644 = vshrl.u32 %v4643, 7
        %v4645 = vsub.s32 %v4642, %v4644
        %v4646 = vrot.slane %v4638, %v4645
        %v4648 = vunpack.c.l.s4 1983009808
        %v4649 = vunpack.c.0.s8 %v4648
        %v4650 = vlaneseq
        %v4651 = vshrl.u32 %v4650, 7
        %v4652 = vsub.s32 %v4649, %v4651
        %v4653 = vrot.slane %v4639, %v4652
        %v4654 = vcombine.low %v957, %v963
        %v4655 = vcombine.high %v957, %v963
        %v4657 = vunpack.c.l.s4 1983009808
        %v4658 = vunpack.c.0.s8 %v4657
        %v4659 = vlaneseq
        %v4660 = vshrl.u32 %v4659, 7
        %v4661 = vsub.s32 %v4658, %v4660
        %v4662 = vrot.slane %v4654, %v4661
        %v4664 = vunpack.c.l.s4 1983009808
        %v4665 = vunpack.c.0.s8 %v4664
        %v4666 = vlaneseq
        %v4667 = vshrl.u32 %v4666, 7
        %v4668 = vsub.s32 %v4665, %v4667
        %v4669 = vrot.slane %v4655, %v4668
        %v4670 = vcombine.low %v4646, %v4662
        %v4671 = vcombine.high %v4646, %v4662
        %v4673 = vunpack.c.l.s4 1934713408
        %v4674 = vunpack.c.0.s8 %v4673
        %v4675 = vlaneseq
        %v4676 = vshrl.u32 %v4675, 7
        %v4677 = vsub.s32 %v4674, %v4676
        %v4678 = vrot.slane %v4670, %v4677
        %v4680 = vunpack.c.l.s4 1934713408
        %v4681 = vunpack.c.0.s8 %v4680
        %v4682 = vlaneseq
        %v4683 = vshrl.u32 %v4682, 7
        %v4684 = vsub.s32 %v4681, %v4683
        %v4685 = vrot.slane %v4671, %v4684
        %v4686 = vcombine.low %v4653, %v4669
        %v4687 = vcombine.high %v4653, %v4669
        %v4689 = vunpack.c.l.s4 1934713408
        %v4690 = vunpack.c.0.s8 %v4689
        %v4691 = vlaneseq
        %v4692 = vshrl.u32 %v4691, 7
        %v4693 = vsub.s32 %v4690, %v4692
        %v4694 = vrot.slane %v4686, %v4693
        %v4696 = vunpack.c.l.s4 1934713408
        %v4697 = vunpack.c.0.s8 %v4696
        %v4698 = vlaneseq
        %v4699 = vshrl.u32 %v4698, 7
        %v4700 = vsub.s32 %v4697, %v4699
        %v4701 = vrot.slane %v4687, %v4700
        %v4702 = vcombine.high %v4678, 0.0
        %v4703 = vcombine.high %v4685, 0.0
        %v4704 = vcombine.high %v4694, 0.0
        %v4705 = vcombine.high %v4701, 0.0
        %4707 = vrot.lane.b32.xlu0 %v4702, 16
        %v4708 = vpop.permute.xlu0 %4707
        %4711 = vrot.lane.b32.xlu0 %v4685, 32
        %v4712 = vpop.permute.xlu0 %4711
        %4715 = vrot.lane.b32.xlu0 %v4703, 48
        %v4716 = vpop.permute.xlu0 %4715
        %4719 = vrot.lane.b32.xlu0 %v4694, 64
        %v4720 = vpop.permute.xlu0 %4719
        %4723 = vrot.lane.b32.xlu0 %v4704, 80
        %v4724 = vpop.permute.xlu0 %4723
        %4727 = vrot.lane.b32.xlu0 %v4701, 96
        %v4728 = vpop.permute.xlu0 %4727
        %4731 = vrot.lane.b32.xlu0 %v4705, 112
        %v4732 = vpop.permute.xlu0 %4731
        %v4734 = vsel %vm349, %v4678, %v4708
        %v4735 = vsel %vm351, %v4734, %v4712
        %v4736 = vsel %vm353, %v4735, %v4716
        %v4737 = vsel %vm355, %v4736, %v4720
        %v4738 = vsel %vm357, %v4737, %v4724
        %v4739 = vsel %vm359, %v4738, %v4728
        %v4740 = vsel %vm361, %v4739, %v4732
        %4741 = vrot.lane.b32.xlu0 %v954, 122
        %v4742 = vpop.permute.xlu0 %4741
        %4743 = vrot.lane.b32.xlu0 %v957, 122
        %v4744 = vpop.permute.xlu0 %4743
        %4745 = vrot.lane.b32.xlu0 %v960, 122
        %v4746 = vpop.permute.xlu0 %4745
        %4747 = vrot.lane.b32.xlu0 %v963, 122
        %v4748 = vpop.permute.xlu0 %4747
        %v4753 = vcombine.low %v4742, %v4746
        %v4754 = vcombine.high %v4742, %v4746
        %v4756 = vunpack.c.l.s4 1983009808
        %v4757 = vunpack.c.0.s8 %v4756
        %v4758 = vlaneseq
        %v4759 = vshrl.u32 %v4758, 7
        %v4760 = vsub.s32 %v4757, %v4759
        %v4761 = vrot.slane %v4753, %v4760
        %v4763 = vunpack.c.l.s4 1983009808
        %v4764 = vunpack.c.0.s8 %v4763
        %v4765 = vlaneseq
        %v4766 = vshrl.u32 %v4765, 7
        %v4767 = vsub.s32 %v4764, %v4766
        %v4768 = vrot.slane %v4754, %v4767
        %v4769 = vcombine.low %v4744, %v4748
        %v4770 = vcombine.high %v4744, %v4748
        %v4772 = vunpack.c.l.s4 1983009808
        %v4773 = vunpack.c.0.s8 %v4772
        %v4774 = vlaneseq
        %v4775 = vshrl.u32 %v4774, 7
        %v4776 = vsub.s32 %v4773, %v4775
        %v4777 = vrot.slane %v4769, %v4776
        %v4779 = vunpack.c.l.s4 1983009808
        %v4780 = vunpack.c.0.s8 %v4779
        %v4781 = vlaneseq
        %v4782 = vshrl.u32 %v4781, 7
        %v4783 = vsub.s32 %v4780, %v4782
        %v4784 = vrot.slane %v4770, %v4783
        %v4785 = vcombine.low %v4761, %v4777
        %v4786 = vcombine.high %v4761, %v4777
        %v4788 = vunpack.c.l.s4 1934713408
        %v4789 = vunpack.c.0.s8 %v4788
        %v4790 = vlaneseq
        %v4791 = vshrl.u32 %v4790, 7
        %v4792 = vsub.s32 %v4789, %v4791
        %v4793 = vrot.slane %v4785, %v4792
        %v4795 = vunpack.c.l.s4 1934713408
        %v4796 = vunpack.c.0.s8 %v4795
        %v4797 = vlaneseq
        %v4798 = vshrl.u32 %v4797, 7
        %v4799 = vsub.s32 %v4796, %v4798
        %v4800 = vrot.slane %v4786, %v4799
        %v4801 = vcombine.low %v4768, %v4784
        %v4802 = vcombine.high %v4768, %v4784
        %v4804 = vunpack.c.l.s4 1934713408
        %v4805 = vunpack.c.0.s8 %v4804
        %v4806 = vlaneseq
        %v4807 = vshrl.u32 %v4806, 7
        %v4808 = vsub.s32 %v4805, %v4807
        %v4809 = vrot.slane %v4801, %v4808
        %v4811 = vunpack.c.l.s4 1934713408
        %v4812 = vunpack.c.0.s8 %v4811
        %v4813 = vlaneseq
        %v4814 = vshrl.u32 %v4813, 7
        %v4815 = vsub.s32 %v4812, %v4814
        %v4816 = vrot.slane %v4802, %v4815
        %v4817 = vcombine.high %v4793, 0.0
        %v4818 = vcombine.high %v4800, 0.0
        %v4819 = vcombine.high %v4809, 0.0
        %v4820 = vcombine.high %v4816, 0.0
        %4822 = vrot.lane.b32.xlu0 %v4817, 16
        %v4823 = vpop.permute.xlu0 %4822
        %4826 = vrot.lane.b32.xlu0 %v4800, 32
        %v4827 = vpop.permute.xlu0 %4826
        %4830 = vrot.lane.b32.xlu0 %v4818, 48
        %v4831 = vpop.permute.xlu0 %4830
        %4834 = vrot.lane.b32.xlu0 %v4809, 64
        %v4835 = vpop.permute.xlu0 %4834
        %4838 = vrot.lane.b32.xlu0 %v4819, 80
        %v4839 = vpop.permute.xlu0 %4838
        %4842 = vrot.lane.b32.xlu0 %v4816, 96
        %v4843 = vpop.permute.xlu0 %4842
        %4846 = vrot.lane.b32.xlu0 %v4820, 112
        %v4847 = vpop.permute.xlu0 %4846
        %v4849 = vsel %vm349, %v4793, %v4823
        %v4850 = vsel %vm351, %v4849, %v4827
        %v4851 = vsel %vm353, %v4850, %v4831
        %v4852 = vsel %vm355, %v4851, %v4835
        %v4853 = vsel %vm357, %v4852, %v4839
        %v4854 = vsel %vm359, %v4853, %v4843
        %v4855 = vsel %vm361, %v4854, %v4847
        %v4860 = vcombine.low %v2590, %v2596
        %v4861 = vcombine.high %v2590, %v2596
        %v4863 = vunpack.c.l.s4 1983009808
        %v4864 = vunpack.c.0.s8 %v4863
        %v4865 = vlaneseq
        %v4866 = vshrl.u32 %v4865, 7
        %v4867 = vsub.s32 %v4864, %v4866
        %v4868 = vrot.slane %v4860, %v4867
        %v4870 = vunpack.c.l.s4 1983009808
        %v4871 = vunpack.c.0.s8 %v4870
        %v4872 = vlaneseq
        %v4873 = vshrl.u32 %v4872, 7
        %v4874 = vsub.s32 %v4871, %v4873
        %v4875 = vrot.slane %v4861, %v4874
        %v4876 = vcombine.low %v2593, %v2599
        %v4877 = vcombine.high %v2593, %v2599
        %v4879 = vunpack.c.l.s4 1983009808
        %v4880 = vunpack.c.0.s8 %v4879
        %v4881 = vlaneseq
        %v4882 = vshrl.u32 %v4881, 7
        %v4883 = vsub.s32 %v4880, %v4882
        %v4884 = vrot.slane %v4876, %v4883
        %v4886 = vunpack.c.l.s4 1983009808
        %v4887 = vunpack.c.0.s8 %v4886
        %v4888 = vlaneseq
        %v4889 = vshrl.u32 %v4888, 7
        %v4890 = vsub.s32 %v4887, %v4889
        %v4891 = vrot.slane %v4877, %v4890
        %v4892 = vcombine.low %v4868, %v4884
        %v4893 = vcombine.high %v4868, %v4884
        %v4895 = vunpack.c.l.s4 1934713408
        %v4896 = vunpack.c.0.s8 %v4895
        %v4897 = vlaneseq
        %v4898 = vshrl.u32 %v4897, 7
        %v4899 = vsub.s32 %v4896, %v4898
        %v4900 = vrot.slane %v4892, %v4899
        %v4902 = vunpack.c.l.s4 1934713408
        %v4903 = vunpack.c.0.s8 %v4902
        %v4904 = vlaneseq
        %v4905 = vshrl.u32 %v4904, 7
        %v4906 = vsub.s32 %v4903, %v4905
        %v4907 = vrot.slane %v4893, %v4906
        %v4908 = vcombine.low %v4875, %v4891
        %v4909 = vcombine.high %v4875, %v4891
        %v4911 = vunpack.c.l.s4 1934713408
        %v4912 = vunpack.c.0.s8 %v4911
        %v4913 = vlaneseq
        %v4914 = vshrl.u32 %v4913, 7
        %v4915 = vsub.s32 %v4912, %v4914
        %v4916 = vrot.slane %v4908, %v4915
        %v4918 = vunpack.c.l.s4 1934713408
        %v4919 = vunpack.c.0.s8 %v4918
        %v4920 = vlaneseq
        %v4921 = vshrl.u32 %v4920, 7
        %v4922 = vsub.s32 %v4919, %v4921
        %v4923 = vrot.slane %v4909, %v4922
        %v4924 = vcombine.high %v4900, 0.0
        %v4925 = vcombine.high %v4907, 0.0
        %v4926 = vcombine.high %v4916, 0.0
        %v4927 = vcombine.high %v4923, 0.0
        %4929 = vrot.lane.b32.xlu0 %v4924, 16
        %v4930 = vpop.permute.xlu0 %4929
        %4933 = vrot.lane.b32.xlu0 %v4907, 32
        %v4934 = vpop.permute.xlu0 %4933
        %4937 = vrot.lane.b32.xlu0 %v4925, 48
        %v4938 = vpop.permute.xlu0 %4937
        %4941 = vrot.lane.b32.xlu0 %v4916, 64
        %v4942 = vpop.permute.xlu0 %4941
        %4945 = vrot.lane.b32.xlu0 %v4926, 80
        %v4946 = vpop.permute.xlu0 %4945
        %4949 = vrot.lane.b32.xlu0 %v4923, 96
        %v4950 = vpop.permute.xlu0 %4949
        %4953 = vrot.lane.b32.xlu0 %v4927, 112
        %v4954 = vpop.permute.xlu0 %4953
        %v4956 = vsel %vm349, %v4900, %v4930
        %v4957 = vsel %vm351, %v4956, %v4934
        %v4958 = vsel %vm353, %v4957, %v4938
        %v4959 = vsel %vm355, %v4958, %v4942
        %v4960 = vsel %vm357, %v4959, %v4946
        %v4961 = vsel %vm359, %v4960, %v4950
        %v4962 = vsel %vm361, %v4961, %v4954
        %4963 = vrot.lane.b32.xlu0 %v2590, 122
        %v4964 = vpop.permute.xlu0 %4963
        %4965 = vrot.lane.b32.xlu0 %v2593, 122
        %v4966 = vpop.permute.xlu0 %4965
        %4967 = vrot.lane.b32.xlu0 %v2596, 122
        %v4968 = vpop.permute.xlu0 %4967
        %4969 = vrot.lane.b32.xlu0 %v2599, 122
        %v4970 = vpop.permute.xlu0 %4969
        %v4975 = vcombine.low %v4964, %v4968
        %v4976 = vcombine.high %v4964, %v4968
        %v4978 = vunpack.c.l.s4 1983009808
        %v4979 = vunpack.c.0.s8 %v4978
        %v4980 = vlaneseq
        %v4981 = vshrl.u32 %v4980, 7
        %v4982 = vsub.s32 %v4979, %v4981
        %v4983 = vrot.slane %v4975, %v4982
        %v4985 = vunpack.c.l.s4 1983009808
        %v4986 = vunpack.c.0.s8 %v4985
        %v4987 = vlaneseq
        %v4988 = vshrl.u32 %v4987, 7
        %v4989 = vsub.s32 %v4986, %v4988
        %v4990 = vrot.slane %v4976, %v4989
        %v4991 = vcombine.low %v4966, %v4970
        %v4992 = vcombine.high %v4966, %v4970
        %v4994 = vunpack.c.l.s4 1983009808
        %v4995 = vunpack.c.0.s8 %v4994
        %v4996 = vlaneseq
        %v4997 = vshrl.u32 %v4996, 7
        %v4998 = vsub.s32 %v4995, %v4997
        %v4999 = vrot.slane %v4991, %v4998
        %v5001 = vunpack.c.l.s4 1983009808
        %v5002 = vunpack.c.0.s8 %v5001
        %v5003 = vlaneseq
        %v5004 = vshrl.u32 %v5003, 7
        %v5005 = vsub.s32 %v5002, %v5004
        %v5006 = vrot.slane %v4992, %v5005
        %v5007 = vcombine.low %v4983, %v4999
        %v5008 = vcombine.high %v4983, %v4999
        %v5010 = vunpack.c.l.s4 1934713408
        %v5011 = vunpack.c.0.s8 %v5010
        %v5012 = vlaneseq
        %v5013 = vshrl.u32 %v5012, 7
        %v5014 = vsub.s32 %v5011, %v5013
        %v5015 = vrot.slane %v5007, %v5014
        %v5017 = vunpack.c.l.s4 1934713408
        %v5018 = vunpack.c.0.s8 %v5017
        %v5019 = vlaneseq
        %v5020 = vshrl.u32 %v5019, 7
        %v5021 = vsub.s32 %v5018, %v5020
        %v5022 = vrot.slane %v5008, %v5021
        %v5023 = vcombine.low %v4990, %v5006
        %v5024 = vcombine.high %v4990, %v5006
        %v5026 = vunpack.c.l.s4 1934713408
        %v5027 = vunpack.c.0.s8 %v5026
        %v5028 = vlaneseq
        %v5029 = vshrl.u32 %v5028, 7
        %v5030 = vsub.s32 %v5027, %v5029
        %v5031 = vrot.slane %v5023, %v5030
        %v5033 = vunpack.c.l.s4 1934713408
        %v5034 = vunpack.c.0.s8 %v5033
        %v5035 = vlaneseq
        %v5036 = vshrl.u32 %v5035, 7
        %v5037 = vsub.s32 %v5034, %v5036
        %v5038 = vrot.slane %v5024, %v5037
        %v5039 = vcombine.high %v5015, 0.0
        %v5040 = vcombine.high %v5022, 0.0
        %v5041 = vcombine.high %v5031, 0.0
        %v5042 = vcombine.high %v5038, 0.0
        %5044 = vrot.lane.b32.xlu0 %v5039, 16
        %v5045 = vpop.permute.xlu0 %5044
        %5048 = vrot.lane.b32.xlu0 %v5022, 32
        %v5049 = vpop.permute.xlu0 %5048
        %5052 = vrot.lane.b32.xlu0 %v5040, 48
        %v5053 = vpop.permute.xlu0 %5052
        %5056 = vrot.lane.b32.xlu0 %v5031, 64
        %v5057 = vpop.permute.xlu0 %5056
        %5060 = vrot.lane.b32.xlu0 %v5041, 80
        %v5061 = vpop.permute.xlu0 %5060
        %5064 = vrot.lane.b32.xlu0 %v5038, 96
        %v5065 = vpop.permute.xlu0 %5064
        %5068 = vrot.lane.b32.xlu0 %v5042, 112
        %v5069 = vpop.permute.xlu0 %5068
        %v5071 = vsel %vm349, %v5015, %v5045
        %v5072 = vsel %vm351, %v5071, %v5049
        %v5073 = vsel %vm353, %v5072, %v5053
        %v5074 = vsel %vm355, %v5073, %v5057
        %v5075 = vsel %vm357, %v5074, %v5061
        %v5076 = vsel %vm359, %v5075, %v5065
        %v5077 = vsel %vm361, %v5076, %v5069
        %vm5078 = vcmask 1041408
        %v5079 = vrot.slane %v212, 6
        %v5080 = vrot.slane %v213, 6
        %v5081 = vsel %vm5078, %v5079, %v5080
        %v5082 = vrot.slane %v214, 6
        %v5083 = vrot.slane %v215, 6
        %v5084 = vsel %vm5078, %v5082, %v5083
        %v5085 = vrot.slane %v216, 6
        %v5086 = vrot.slane %v217, 6
        %v5087 = vsel %vm5078, %v5085, %v5086
        %v5088 = vrot.slane %v218, 6
        %v5089 = vrot.slane %v219, 6
        %v5090 = vsel %vm5078, %v5088, %v5089
        %v5095 = vcombine.low %v5081, %v5087
        %v5096 = vcombine.high %v5081, %v5087
        %v5098 = vunpack.c.l.s4 1983009808
        %v5099 = vunpack.c.0.s8 %v5098
        %v5100 = vlaneseq
        %v5101 = vshrl.u32 %v5100, 7
        %v5102 = vsub.s32 %v5099, %v5101
        %v5103 = vrot.slane %v5095, %v5102
        %v5105 = vunpack.c.l.s4 1983009808
        %v5106 = vunpack.c.0.s8 %v5105
        %v5107 = vlaneseq
        %v5108 = vshrl.u32 %v5107, 7
        %v5109 = vsub.s32 %v5106, %v5108
        %v5110 = vrot.slane %v5096, %v5109
        %v5111 = vcombine.low %v5084, %v5090
        %v5112 = vcombine.high %v5084, %v5090
        %v5114 = vunpack.c.l.s4 1983009808
        %v5115 = vunpack.c.0.s8 %v5114
        %v5116 = vlaneseq
        %v5117 = vshrl.u32 %v5116, 7
        %v5118 = vsub.s32 %v5115, %v5117
        %v5119 = vrot.slane %v5111, %v5118
        %v5121 = vunpack.c.l.s4 1983009808
        %v5122 = vunpack.c.0.s8 %v5121
        %v5123 = vlaneseq
        %v5124 = vshrl.u32 %v5123, 7
        %v5125 = vsub.s32 %v5122, %v5124
        %v5126 = vrot.slane %v5112, %v5125
        %v5127 = vcombine.low %v5103, %v5119
        %v5128 = vcombine.high %v5103, %v5119
        %v5130 = vunpack.c.l.s4 1934713408
        %v5131 = vunpack.c.0.s8 %v5130
        %v5132 = vlaneseq
        %v5133 = vshrl.u32 %v5132, 7
        %v5134 = vsub.s32 %v5131, %v5133
        %v5135 = vrot.slane %v5127, %v5134
        %v5137 = vunpack.c.l.s4 1934713408
        %v5138 = vunpack.c.0.s8 %v5137
        %v5139 = vlaneseq
        %v5140 = vshrl.u32 %v5139, 7
        %v5141 = vsub.s32 %v5138, %v5140
        %v5142 = vrot.slane %v5128, %v5141
        %v5143 = vcombine.low %v5110, %v5126
        %v5144 = vcombine.high %v5110, %v5126
        %v5146 = vunpack.c.l.s4 1934713408
        %v5147 = vunpack.c.0.s8 %v5146
        %v5148 = vlaneseq
        %v5149 = vshrl.u32 %v5148, 7
        %v5150 = vsub.s32 %v5147, %v5149
        %v5151 = vrot.slane %v5143, %v5150
        %v5153 = vunpack.c.l.s4 1934713408
        %v5154 = vunpack.c.0.s8 %v5153
        %v5155 = vlaneseq
        %v5156 = vshrl.u32 %v5155, 7
        %v5157 = vsub.s32 %v5154, %v5156
        %v5158 = vrot.slane %v5144, %v5157
        %v5159 = vcombine.high %v5135, 0.0
        %v5160 = vcombine.high %v5142, 0.0
        %v5161 = vcombine.high %v5151, 0.0
        %v5162 = vcombine.high %v5158, 0.0
        %5164 = vrot.lane.b32.xlu0 %v5159, 16
        %v5165 = vpop.permute.xlu0 %5164
        %5168 = vrot.lane.b32.xlu0 %v5142, 32
        %v5169 = vpop.permute.xlu0 %5168
        %5172 = vrot.lane.b32.xlu0 %v5160, 48
        %v5173 = vpop.permute.xlu0 %5172
        %5176 = vrot.lane.b32.xlu0 %v5151, 64
        %v5177 = vpop.permute.xlu0 %5176
        %5180 = vrot.lane.b32.xlu0 %v5161, 80
        %v5181 = vpop.permute.xlu0 %5180
        %5184 = vrot.lane.b32.xlu0 %v5158, 96
        %v5185 = vpop.permute.xlu0 %5184
        %5188 = vrot.lane.b32.xlu0 %v5162, 112
        %v5189 = vpop.permute.xlu0 %5188
        %v5191 = vsel %vm349, %v5135, %v5165
        %v5192 = vsel %vm351, %v5191, %v5169
        %v5193 = vsel %vm353, %v5192, %v5173
        %v5194 = vsel %vm355, %v5193, %v5177
        %v5195 = vsel %vm357, %v5194, %v5181
        %v5196 = vsel %vm359, %v5195, %v5185
        %v5197 = vsel %vm361, %v5196, %v5189
        %5198 = vrot.lane.b32.xlu0 %v5081, 127
        %v5199 = vpop.permute.xlu0 %5198
        %5200 = vrot.lane.b32.xlu0 %v5084, 127
        %v5201 = vpop.permute.xlu0 %5200
        %5202 = vrot.lane.b32.xlu0 %v5087, 127
        %v5203 = vpop.permute.xlu0 %5202
        %5204 = vrot.lane.b32.xlu0 %v5090, 127
        %v5205 = vpop.permute.xlu0 %5204
        %v5210 = vcombine.low %v5199, %v5203
        %v5211 = vcombine.high %v5199, %v5203
        %v5213 = vunpack.c.l.s4 1983009808
        %v5214 = vunpack.c.0.s8 %v5213
        %v5215 = vlaneseq
        %v5216 = vshrl.u32 %v5215, 7
        %v5217 = vsub.s32 %v5214, %v5216
        %v5218 = vrot.slane %v5210, %v5217
        %v5220 = vunpack.c.l.s4 1983009808
        %v5221 = vunpack.c.0.s8 %v5220
        %v5222 = vlaneseq
        %v5223 = vshrl.u32 %v5222, 7
        %v5224 = vsub.s32 %v5221, %v5223
        %v5225 = vrot.slane %v5211, %v5224
        %v5226 = vcombine.low %v5201, %v5205
        %v5227 = vcombine.high %v5201, %v5205
        %v5229 = vunpack.c.l.s4 1983009808
        %v5230 = vunpack.c.0.s8 %v5229
        %v5231 = vlaneseq
        %v5232 = vshrl.u32 %v5231, 7
        %v5233 = vsub.s32 %v5230, %v5232
        %v5234 = vrot.slane %v5226, %v5233
        %v5236 = vunpack.c.l.s4 1983009808
        %v5237 = vunpack.c.0.s8 %v5236
        %v5238 = vlaneseq
        %v5239 = vshrl.u32 %v5238, 7
        %v5240 = vsub.s32 %v5237, %v5239
        %v5241 = vrot.slane %v5227, %v5240
        %v5242 = vcombine.low %v5218, %v5234
        %v5243 = vcombine.high %v5218, %v5234
        %v5245 = vunpack.c.l.s4 1934713408
        %v5246 = vunpack.c.0.s8 %v5245
        %v5247 = vlaneseq
        %v5248 = vshrl.u32 %v5247, 7
        %v5249 = vsub.s32 %v5246, %v5248
        %v5250 = vrot.slane %v5242, %v5249
        %v5252 = vunpack.c.l.s4 1934713408
        %v5253 = vunpack.c.0.s8 %v5252
        %v5254 = vlaneseq
        %v5255 = vshrl.u32 %v5254, 7
        %v5256 = vsub.s32 %v5253, %v5255
        %v5257 = vrot.slane %v5243, %v5256
        %v5258 = vcombine.low %v5225, %v5241
        %v5259 = vcombine.high %v5225, %v5241
        %v5261 = vunpack.c.l.s4 1934713408
        %v5262 = vunpack.c.0.s8 %v5261
        %v5263 = vlaneseq
        %v5264 = vshrl.u32 %v5263, 7
        %v5265 = vsub.s32 %v5262, %v5264
        %v5266 = vrot.slane %v5258, %v5265
        %v5268 = vunpack.c.l.s4 1934713408
        %v5269 = vunpack.c.0.s8 %v5268
        %v5270 = vlaneseq
        %v5271 = vshrl.u32 %v5270, 7
        %v5272 = vsub.s32 %v5269, %v5271
        %v5273 = vrot.slane %v5259, %v5272
        %v5274 = vcombine.high %v5250, 0.0
        %v5275 = vcombine.high %v5257, 0.0
        %v5276 = vcombine.high %v5266, 0.0
        %v5277 = vcombine.high %v5273, 0.0
        %5279 = vrot.lane.b32.xlu0 %v5274, 16
        %v5280 = vpop.permute.xlu0 %5279
        %5283 = vrot.lane.b32.xlu0 %v5257, 32
        %v5284 = vpop.permute.xlu0 %5283
        %5287 = vrot.lane.b32.xlu0 %v5275, 48
        %v5288 = vpop.permute.xlu0 %5287
        %5291 = vrot.lane.b32.xlu0 %v5266, 64
        %v5292 = vpop.permute.xlu0 %5291
        %5295 = vrot.lane.b32.xlu0 %v5276, 80
        %v5296 = vpop.permute.xlu0 %5295
        %5299 = vrot.lane.b32.xlu0 %v5273, 96
        %v5300 = vpop.permute.xlu0 %5299
        %5303 = vrot.lane.b32.xlu0 %v5277, 112
        %v5304 = vpop.permute.xlu0 %5303
        %v5306 = vsel %vm349, %v5250, %v5280
        %v5307 = vsel %vm351, %v5306, %v5284
        %v5308 = vsel %vm353, %v5307, %v5288
        %v5309 = vsel %vm355, %v5308, %v5292
        %v5310 = vsel %vm357, %v5309, %v5296
        %v5311 = vsel %vm359, %v5310, %v5300
        %v5312 = vsel %vm361, %v5311, %v5304
        %5313 = vrot.lane.b32.xlu0 %v5081, 126
        %v5314 = vpop.permute.xlu0 %5313
        %5315 = vrot.lane.b32.xlu0 %v5084, 126
        %v5316 = vpop.permute.xlu0 %5315
        %5317 = vrot.lane.b32.xlu0 %v5087, 126
        %v5318 = vpop.permute.xlu0 %5317
        %5319 = vrot.lane.b32.xlu0 %v5090, 126
        %v5320 = vpop.permute.xlu0 %5319
        %v5325 = vcombine.low %v5314, %v5318
        %v5326 = vcombine.high %v5314, %v5318
        %v5328 = vunpack.c.l.s4 1983009808
        %v5329 = vunpack.c.0.s8 %v5328
        %v5330 = vlaneseq
        %v5331 = vshrl.u32 %v5330, 7
        %v5332 = vsub.s32 %v5329, %v5331
        %v5333 = vrot.slane %v5325, %v5332
        %v5335 = vunpack.c.l.s4 1983009808
        %v5336 = vunpack.c.0.s8 %v5335
        %v5337 = vlaneseq
        %v5338 = vshrl.u32 %v5337, 7
        %v5339 = vsub.s32 %v5336, %v5338
        %v5340 = vrot.slane %v5326, %v5339
        %v5341 = vcombine.low %v5316, %v5320
        %v5342 = vcombine.high %v5316, %v5320
        %v5344 = vunpack.c.l.s4 1983009808
        %v5345 = vunpack.c.0.s8 %v5344
        %v5346 = vlaneseq
        %v5347 = vshrl.u32 %v5346, 7
        %v5348 = vsub.s32 %v5345, %v5347
        %v5349 = vrot.slane %v5341, %v5348
        %v5351 = vunpack.c.l.s4 1983009808
        %v5352 = vunpack.c.0.s8 %v5351
        %v5353 = vlaneseq
        %v5354 = vshrl.u32 %v5353, 7
        %v5355 = vsub.s32 %v5352, %v5354
        %v5356 = vrot.slane %v5342, %v5355
        %v5357 = vcombine.low %v5333, %v5349
        %v5358 = vcombine.high %v5333, %v5349
        %v5360 = vunpack.c.l.s4 1934713408
        %v5361 = vunpack.c.0.s8 %v5360
        %v5362 = vlaneseq
        %v5363 = vshrl.u32 %v5362, 7
        %v5364 = vsub.s32 %v5361, %v5363
        %v5365 = vrot.slane %v5357, %v5364
        %v5367 = vunpack.c.l.s4 1934713408
        %v5368 = vunpack.c.0.s8 %v5367
        %v5369 = vlaneseq
        %v5370 = vshrl.u32 %v5369, 7
        %v5371 = vsub.s32 %v5368, %v5370
        %v5372 = vrot.slane %v5358, %v5371
        %v5373 = vcombine.low %v5340, %v5356
        %v5374 = vcombine.high %v5340, %v5356
        %v5376 = vunpack.c.l.s4 1934713408
        %v5377 = vunpack.c.0.s8 %v5376
        %v5378 = vlaneseq
        %v5379 = vshrl.u32 %v5378, 7
        %v5380 = vsub.s32 %v5377, %v5379
        %v5381 = vrot.slane %v5373, %v5380
        %v5383 = vunpack.c.l.s4 1934713408
        %v5384 = vunpack.c.0.s8 %v5383
        %v5385 = vlaneseq
        %v5386 = vshrl.u32 %v5385, 7
        %v5387 = vsub.s32 %v5384, %v5386
        %v5388 = vrot.slane %v5374, %v5387
        %v5389 = vcombine.high %v5365, 0.0
        %v5390 = vcombine.high %v5372, 0.0
        %v5391 = vcombine.high %v5381, 0.0
        %v5392 = vcombine.high %v5388, 0.0
        %5394 = vrot.lane.b32.xlu0 %v5389, 16
        %v5395 = vpop.permute.xlu0 %5394
        %5398 = vrot.lane.b32.xlu0 %v5372, 32
        %v5399 = vpop.permute.xlu0 %5398
        %5402 = vrot.lane.b32.xlu0 %v5390, 48
        %v5403 = vpop.permute.xlu0 %5402
        %5406 = vrot.lane.b32.xlu0 %v5381, 64
        %v5407 = vpop.permute.xlu0 %5406
        %5410 = vrot.lane.b32.xlu0 %v5391, 80
        %v5411 = vpop.permute.xlu0 %5410
        %5414 = vrot.lane.b32.xlu0 %v5388, 96
        %v5415 = vpop.permute.xlu0 %5414
        %5418 = vrot.lane.b32.xlu0 %v5392, 112
        %v5419 = vpop.permute.xlu0 %5418
        %v5421 = vsel %vm349, %v5365, %v5395
        %v5422 = vsel %vm351, %v5421, %v5399
        %v5423 = vsel %vm353, %v5422, %v5403
        %v5424 = vsel %vm355, %v5423, %v5407
        %v5425 = vsel %vm357, %v5424, %v5411
        %v5426 = vsel %vm359, %v5425, %v5415
        %v5427 = vsel %vm361, %v5426, %v5419
        %5428 = vrot.lane.b32.xlu0 %v5081, 125
        %v5429 = vpop.permute.xlu0 %5428
        %5430 = vrot.lane.b32.xlu0 %v5084, 125
        %v5431 = vpop.permute.xlu0 %5430
        %5432 = vrot.lane.b32.xlu0 %v5087, 125
        %v5433 = vpop.permute.xlu0 %5432
        %5434 = vrot.lane.b32.xlu0 %v5090, 125
        %v5435 = vpop.permute.xlu0 %5434
        %v5440 = vcombine.low %v5429, %v5433
        %v5441 = vcombine.high %v5429, %v5433
        %v5443 = vunpack.c.l.s4 1983009808
        %v5444 = vunpack.c.0.s8 %v5443
        %v5445 = vlaneseq
        %v5446 = vshrl.u32 %v5445, 7
        %v5447 = vsub.s32 %v5444, %v5446
        %v5448 = vrot.slane %v5440, %v5447
        %v5450 = vunpack.c.l.s4 1983009808
        %v5451 = vunpack.c.0.s8 %v5450
        %v5452 = vlaneseq
        %v5453 = vshrl.u32 %v5452, 7
        %v5454 = vsub.s32 %v5451, %v5453
        %v5455 = vrot.slane %v5441, %v5454
        %v5456 = vcombine.low %v5431, %v5435
        %v5457 = vcombine.high %v5431, %v5435
        %v5459 = vunpack.c.l.s4 1983009808
        %v5460 = vunpack.c.0.s8 %v5459
        %v5461 = vlaneseq
        %v5462 = vshrl.u32 %v5461, 7
        %v5463 = vsub.s32 %v5460, %v5462
        %v5464 = vrot.slane %v5456, %v5463
        %v5466 = vunpack.c.l.s4 1983009808
        %v5467 = vunpack.c.0.s8 %v5466
        %v5468 = vlaneseq
        %v5469 = vshrl.u32 %v5468, 7
        %v5470 = vsub.s32 %v5467, %v5469
        %v5471 = vrot.slane %v5457, %v5470
        %v5472 = vcombine.low %v5448, %v5464
        %v5473 = vcombine.high %v5448, %v5464
        %v5475 = vunpack.c.l.s4 1934713408
        %v5476 = vunpack.c.0.s8 %v5475
        %v5477 = vlaneseq
        %v5478 = vshrl.u32 %v5477, 7
        %v5479 = vsub.s32 %v5476, %v5478
        %v5480 = vrot.slane %v5472, %v5479
        %v5482 = vunpack.c.l.s4 1934713408
        %v5483 = vunpack.c.0.s8 %v5482
        %v5484 = vlaneseq
        %v5485 = vshrl.u32 %v5484, 7
        %v5486 = vsub.s32 %v5483, %v5485
        %v5487 = vrot.slane %v5473, %v5486
        %v5488 = vcombine.low %v5455, %v5471
        %v5489 = vcombine.high %v5455, %v5471
        %v5491 = vunpack.c.l.s4 1934713408
        %v5492 = vunpack.c.0.s8 %v5491
        %v5493 = vlaneseq
        %v5494 = vshrl.u32 %v5493, 7
        %v5495 = vsub.s32 %v5492, %v5494
        %v5496 = vrot.slane %v5488, %v5495
        %v5498 = vunpack.c.l.s4 1934713408
        %v5499 = vunpack.c.0.s8 %v5498
        %v5500 = vlaneseq
        %v5501 = vshrl.u32 %v5500, 7
        %v5502 = vsub.s32 %v5499, %v5501
        %v5503 = vrot.slane %v5489, %v5502
        %v5504 = vcombine.high %v5480, 0.0
        %v5505 = vcombine.high %v5487, 0.0
        %v5506 = vcombine.high %v5496, 0.0
        %v5507 = vcombine.high %v5503, 0.0
        %5509 = vrot.lane.b32.xlu0 %v5504, 16
        %v5510 = vpop.permute.xlu0 %5509
        %5513 = vrot.lane.b32.xlu0 %v5487, 32
        %v5514 = vpop.permute.xlu0 %5513
        %5517 = vrot.lane.b32.xlu0 %v5505, 48
        %v5518 = vpop.permute.xlu0 %5517
        %5521 = vrot.lane.b32.xlu0 %v5496, 64
        %v5522 = vpop.permute.xlu0 %5521
        %5525 = vrot.lane.b32.xlu0 %v5506, 80
        %v5526 = vpop.permute.xlu0 %5525
        %5529 = vrot.lane.b32.xlu0 %v5503, 96
        %v5530 = vpop.permute.xlu0 %5529
        %5533 = vrot.lane.b32.xlu0 %v5507, 112
        %v5534 = vpop.permute.xlu0 %5533
        %v5536 = vsel %vm349, %v5480, %v5510
        %v5537 = vsel %vm351, %v5536, %v5514
        %v5538 = vsel %vm353, %v5537, %v5518
        %v5539 = vsel %vm355, %v5538, %v5522
        %v5540 = vsel %vm357, %v5539, %v5526
        %v5541 = vsel %vm359, %v5540, %v5530
        %v5542 = vsel %vm361, %v5541, %v5534
        %5543 = vrot.lane.b32.xlu0 %v5081, 124
        %v5544 = vpop.permute.xlu0 %5543
        %5545 = vrot.lane.b32.xlu0 %v5084, 124
        %v5546 = vpop.permute.xlu0 %5545
        %5547 = vrot.lane.b32.xlu0 %v5087, 124
        %v5548 = vpop.permute.xlu0 %5547
        %5549 = vrot.lane.b32.xlu0 %v5090, 124
        %v5550 = vpop.permute.xlu0 %5549
        %v5555 = vcombine.low %v5544, %v5548
        %v5556 = vcombine.high %v5544, %v5548
        %v5558 = vunpack.c.l.s4 1983009808
        %v5559 = vunpack.c.0.s8 %v5558
        %v5560 = vlaneseq
        %v5561 = vshrl.u32 %v5560, 7
        %v5562 = vsub.s32 %v5559, %v5561
        %v5563 = vrot.slane %v5555, %v5562
        %v5565 = vunpack.c.l.s4 1983009808
        %v5566 = vunpack.c.0.s8 %v5565
        %v5567 = vlaneseq
        %v5568 = vshrl.u32 %v5567, 7
        %v5569 = vsub.s32 %v5566, %v5568
        %v5570 = vrot.slane %v5556, %v5569
        %v5571 = vcombine.low %v5546, %v5550
        %v5572 = vcombine.high %v5546, %v5550
        %v5574 = vunpack.c.l.s4 1983009808
        %v5575 = vunpack.c.0.s8 %v5574
        %v5576 = vlaneseq
        %v5577 = vshrl.u32 %v5576, 7
        %v5578 = vsub.s32 %v5575, %v5577
        %v5579 = vrot.slane %v5571, %v5578
        %v5581 = vunpack.c.l.s4 1983009808
        %v5582 = vunpack.c.0.s8 %v5581
        %v5583 = vlaneseq
        %v5584 = vshrl.u32 %v5583, 7
        %v5585 = vsub.s32 %v5582, %v5584
        %v5586 = vrot.slane %v5572, %v5585
        %v5587 = vcombine.low %v5563, %v5579
        %v5588 = vcombine.high %v5563, %v5579
        %v5590 = vunpack.c.l.s4 1934713408
        %v5591 = vunpack.c.0.s8 %v5590
        %v5592 = vlaneseq
        %v5593 = vshrl.u32 %v5592, 7
        %v5594 = vsub.s32 %v5591, %v5593
        %v5595 = vrot.slane %v5587, %v5594
        %v5597 = vunpack.c.l.s4 1934713408
        %v5598 = vunpack.c.0.s8 %v5597
        %v5599 = vlaneseq
        %v5600 = vshrl.u32 %v5599, 7
        %v5601 = vsub.s32 %v5598, %v5600
        %v5602 = vrot.slane %v5588, %v5601
        %v5603 = vcombine.low %v5570, %v5586
        %v5604 = vcombine.high %v5570, %v5586
        %v5606 = vunpack.c.l.s4 1934713408
        %v5607 = vunpack.c.0.s8 %v5606
        %v5608 = vlaneseq
        %v5609 = vshrl.u32 %v5608, 7
        %v5610 = vsub.s32 %v5607, %v5609
        %v5611 = vrot.slane %v5603, %v5610
        %v5613 = vunpack.c.l.s4 1934713408
        %v5614 = vunpack.c.0.s8 %v5613
        %v5615 = vlaneseq
        %v5616 = vshrl.u32 %v5615, 7
        %v5617 = vsub.s32 %v5614, %v5616
        %v5618 = vrot.slane %v5604, %v5617
        %v5619 = vcombine.high %v5595, 0.0
        %v5620 = vcombine.high %v5602, 0.0
        %v5621 = vcombine.high %v5611, 0.0
        %v5622 = vcombine.high %v5618, 0.0
        %5624 = vrot.lane.b32.xlu0 %v5619, 16
        %v5625 = vpop.permute.xlu0 %5624
        %5628 = vrot.lane.b32.xlu0 %v5602, 32
        %v5629 = vpop.permute.xlu0 %5628
        %5632 = vrot.lane.b32.xlu0 %v5620, 48
        %v5633 = vpop.permute.xlu0 %5632
        %5636 = vrot.lane.b32.xlu0 %v5611, 64
        %v5637 = vpop.permute.xlu0 %5636
        %5640 = vrot.lane.b32.xlu0 %v5621, 80
        %v5641 = vpop.permute.xlu0 %5640
        %5644 = vrot.lane.b32.xlu0 %v5618, 96
        %v5645 = vpop.permute.xlu0 %5644
        %5648 = vrot.lane.b32.xlu0 %v5622, 112
        %v5649 = vpop.permute.xlu0 %5648
        %v5651 = vsel %vm349, %v5595, %v5625
        %v5652 = vsel %vm351, %v5651, %v5629
        %v5653 = vsel %vm353, %v5652, %v5633
        %v5654 = vsel %vm355, %v5653, %v5637
        %v5655 = vsel %vm357, %v5654, %v5641
        %v5656 = vsel %vm359, %v5655, %v5645
        %v5657 = vsel %vm361, %v5656, %v5649
        %5658 = vrot.lane.b32.xlu0 %v5081, 123
        %v5659 = vpop.permute.xlu0 %5658
        %5660 = vrot.lane.b32.xlu0 %v5084, 123
        %v5661 = vpop.permute.xlu0 %5660
        %5662 = vrot.lane.b32.xlu0 %v5087, 123
        %v5663 = vpop.permute.xlu0 %5662
        %5664 = vrot.lane.b32.xlu0 %v5090, 123
        %v5665 = vpop.permute.xlu0 %5664
        %v5670 = vcombine.low %v5659, %v5663
        %v5671 = vcombine.high %v5659, %v5663
        %v5673 = vunpack.c.l.s4 1983009808
        %v5674 = vunpack.c.0.s8 %v5673
        %v5675 = vlaneseq
        %v5676 = vshrl.u32 %v5675, 7
        %v5677 = vsub.s32 %v5674, %v5676
        %v5678 = vrot.slane %v5670, %v5677
        %v5680 = vunpack.c.l.s4 1983009808
        %v5681 = vunpack.c.0.s8 %v5680
        %v5682 = vlaneseq
        %v5683 = vshrl.u32 %v5682, 7
        %v5684 = vsub.s32 %v5681, %v5683
        %v5685 = vrot.slane %v5671, %v5684
        %v5686 = vcombine.low %v5661, %v5665
        %v5687 = vcombine.high %v5661, %v5665
        %v5689 = vunpack.c.l.s4 1983009808
        %v5690 = vunpack.c.0.s8 %v5689
        %v5691 = vlaneseq
        %v5692 = vshrl.u32 %v5691, 7
        %v5693 = vsub.s32 %v5690, %v5692
        %v5694 = vrot.slane %v5686, %v5693
        %v5696 = vunpack.c.l.s4 1983009808
        %v5697 = vunpack.c.0.s8 %v5696
        %v5698 = vlaneseq
        %v5699 = vshrl.u32 %v5698, 7
        %v5700 = vsub.s32 %v5697, %v5699
        %v5701 = vrot.slane %v5687, %v5700
        %v5702 = vcombine.low %v5678, %v5694
        %v5703 = vcombine.high %v5678, %v5694
        %v5705 = vunpack.c.l.s4 1934713408
        %v5706 = vunpack.c.0.s8 %v5705
        %v5707 = vlaneseq
        %v5708 = vshrl.u32 %v5707, 7
        %v5709 = vsub.s32 %v5706, %v5708
        %v5710 = vrot.slane %v5702, %v5709
        %v5712 = vunpack.c.l.s4 1934713408
        %v5713 = vunpack.c.0.s8 %v5712
        %v5714 = vlaneseq
        %v5715 = vshrl.u32 %v5714, 7
        %v5716 = vsub.s32 %v5713, %v5715
        %v5717 = vrot.slane %v5703, %v5716
        %v5718 = vcombine.low %v5685, %v5701
        %v5719 = vcombine.high %v5685, %v5701
        %v5721 = vunpack.c.l.s4 1934713408
        %v5722 = vunpack.c.0.s8 %v5721
        %v5723 = vlaneseq
        %v5724 = vshrl.u32 %v5723, 7
        %v5725 = vsub.s32 %v5722, %v5724
        %v5726 = vrot.slane %v5718, %v5725
        %v5728 = vunpack.c.l.s4 1934713408
        %v5729 = vunpack.c.0.s8 %v5728
        %v5730 = vlaneseq
        %v5731 = vshrl.u32 %v5730, 7
        %v5732 = vsub.s32 %v5729, %v5731
        %v5733 = vrot.slane %v5719, %v5732
        %v5734 = vcombine.high %v5710, 0.0
        %v5735 = vcombine.high %v5717, 0.0
        %v5736 = vcombine.high %v5726, 0.0
        %v5737 = vcombine.high %v5733, 0.0
        %5739 = vrot.lane.b32.xlu0 %v5734, 16
        %v5740 = vpop.permute.xlu0 %5739
        %5743 = vrot.lane.b32.xlu0 %v5717, 32
        %v5744 = vpop.permute.xlu0 %5743
        %5747 = vrot.lane.b32.xlu0 %v5735, 48
        %v5748 = vpop.permute.xlu0 %5747
        %5751 = vrot.lane.b32.xlu0 %v5726, 64
        %v5752 = vpop.permute.xlu0 %5751
        %5755 = vrot.lane.b32.xlu0 %v5736, 80
        %v5756 = vpop.permute.xlu0 %5755
        %5759 = vrot.lane.b32.xlu0 %v5733, 96
        %v5760 = vpop.permute.xlu0 %5759
        %5763 = vrot.lane.b32.xlu0 %v5737, 112
        %v5764 = vpop.permute.xlu0 %5763
        %v5766 = vsel %vm349, %v5710, %v5740
        %v5767 = vsel %vm351, %v5766, %v5744
        %v5768 = vsel %vm353, %v5767, %v5748
        %v5769 = vsel %vm355, %v5768, %v5752
        %v5770 = vsel %vm357, %v5769, %v5756
        %v5771 = vsel %vm359, %v5770, %v5760
        %v5772 = vsel %vm361, %v5771, %v5764
        %5773 = vrot.lane.b32.xlu0 %v5081, 122
        %v5774 = vpop.permute.xlu0 %5773
        %5775 = vrot.lane.b32.xlu0 %v5084, 122
        %v5776 = vpop.permute.xlu0 %5775
        %5777 = vrot.lane.b32.xlu0 %v5087, 122
        %v5778 = vpop.permute.xlu0 %5777
        %5779 = vrot.lane.b32.xlu0 %v5090, 122
        %v5780 = vpop.permute.xlu0 %5779
        %v5785 = vcombine.low %v5774, %v5778
        %v5786 = vcombine.high %v5774, %v5778
        %v5788 = vunpack.c.l.s4 1983009808
        %v5789 = vunpack.c.0.s8 %v5788
        %v5790 = vlaneseq
        %v5791 = vshrl.u32 %v5790, 7
        %v5792 = vsub.s32 %v5789, %v5791
        %v5793 = vrot.slane %v5785, %v5792
        %v5795 = vunpack.c.l.s4 1983009808
        %v5796 = vunpack.c.0.s8 %v5795
        %v5797 = vlaneseq
        %v5798 = vshrl.u32 %v5797, 7
        %v5799 = vsub.s32 %v5796, %v5798
        %v5800 = vrot.slane %v5786, %v5799
        %v5801 = vcombine.low %v5776, %v5780
        %v5802 = vcombine.high %v5776, %v5780
        %v5804 = vunpack.c.l.s4 1983009808
        %v5805 = vunpack.c.0.s8 %v5804
        %v5806 = vlaneseq
        %v5807 = vshrl.u32 %v5806, 7
        %v5808 = vsub.s32 %v5805, %v5807
        %v5809 = vrot.slane %v5801, %v5808
        %v5811 = vunpack.c.l.s4 1983009808
        %v5812 = vunpack.c.0.s8 %v5811
        %v5813 = vlaneseq
        %v5814 = vshrl.u32 %v5813, 7
        %v5815 = vsub.s32 %v5812, %v5814
        %v5816 = vrot.slane %v5802, %v5815
        %v5817 = vcombine.low %v5793, %v5809
        %v5818 = vcombine.high %v5793, %v5809
        %v5820 = vunpack.c.l.s4 1934713408
        %v5821 = vunpack.c.0.s8 %v5820
        %v5822 = vlaneseq
        %v5823 = vshrl.u32 %v5822, 7
        %v5824 = vsub.s32 %v5821, %v5823
        %v5825 = vrot.slane %v5817, %v5824
        %v5827 = vunpack.c.l.s4 1934713408
        %v5828 = vunpack.c.0.s8 %v5827
        %v5829 = vlaneseq
        %v5830 = vshrl.u32 %v5829, 7
        %v5831 = vsub.s32 %v5828, %v5830
        %v5832 = vrot.slane %v5818, %v5831
        %v5833 = vcombine.low %v5800, %v5816
        %v5834 = vcombine.high %v5800, %v5816
        %v5836 = vunpack.c.l.s4 1934713408
        %v5837 = vunpack.c.0.s8 %v5836
        %v5838 = vlaneseq
        %v5839 = vshrl.u32 %v5838, 7
        %v5840 = vsub.s32 %v5837, %v5839
        %v5841 = vrot.slane %v5833, %v5840
        %v5843 = vunpack.c.l.s4 1934713408
        %v5844 = vunpack.c.0.s8 %v5843
        %v5845 = vlaneseq
        %v5846 = vshrl.u32 %v5845, 7
        %v5847 = vsub.s32 %v5844, %v5846
        %v5848 = vrot.slane %v5834, %v5847
        %v5849 = vcombine.high %v5825, 0.0
        %v5850 = vcombine.high %v5832, 0.0
        %v5851 = vcombine.high %v5841, 0.0
        %v5852 = vcombine.high %v5848, 0.0
        %5854 = vrot.lane.b32.xlu0 %v5849, 16
        %v5855 = vpop.permute.xlu0 %5854
        %5858 = vrot.lane.b32.xlu0 %v5832, 32
        %v5859 = vpop.permute.xlu0 %5858
        %5862 = vrot.lane.b32.xlu0 %v5850, 48
        %v5863 = vpop.permute.xlu0 %5862
        %5866 = vrot.lane.b32.xlu0 %v5841, 64
        %v5867 = vpop.permute.xlu0 %5866
        %5870 = vrot.lane.b32.xlu0 %v5851, 80
        %v5871 = vpop.permute.xlu0 %5870
        %5874 = vrot.lane.b32.xlu0 %v5848, 96
        %v5875 = vpop.permute.xlu0 %5874
        %5878 = vrot.lane.b32.xlu0 %v5852, 112
        %v5879 = vpop.permute.xlu0 %5878
        %v5881 = vsel %vm349, %v5825, %v5855
        %v5882 = vsel %vm351, %v5881, %v5859
        %v5883 = vsel %vm353, %v5882, %v5863
        %v5884 = vsel %vm355, %v5883, %v5867
        %v5885 = vsel %vm357, %v5884, %v5871
        %v5886 = vsel %vm359, %v5885, %v5875
        %v5887 = vsel %vm361, %v5886, %v5879
        %v5889 = vrot.slane %v477, 4
        %v5892 = vrot.slane %v720, 4
        %v5895 = vrot.slane %v950, 4
        %v5898 = vrot.slane %v1193, 4
        %v5901 = vrot.slane %v1436, 4
        %v5904 = vrot.slane %v1666, 4
        %v5907 = vrot.slane %v1896, 4
        %v5910 = vrot.slane %v2126, 4
        %v5912 = vsel %vm951, %v362, %v5889
        %v5913 = vsel %vm951, %v592, %v5892
        %v5914 = vsel %vm951, %v835, %v5895
        %v5915 = vsel %vm951, %v1078, %v5898
        %v5916 = vsel %vm951, %v1308, %v5901
        %v5917 = vsel %vm951, %v1551, %v5904
        %v5918 = vsel %vm951, %v1781, %v5907
        %v5919 = vsel %vm951, %v2011, %v5910
        %v5921 = vrot.slane %v2356, 4
        %v5924 = vrot.slane %v2586, 4
        %v5927 = vrot.slane %v2829, 4
        %v5930 = vrot.slane %v3059, 4
        %v5933 = vrot.slane %v3277, 4
        %v5936 = vrot.slane %v3507, 4
        %v5939 = vrot.slane %v3737, 4
        %v5942 = vrot.slane %v3967, 4
        %v5944 = vsel %vm951, %v2241, %v5921
        %v5945 = vsel %vm951, %v2471, %v5924
        %v5946 = vsel %vm951, %v2714, %v5927
        %v5947 = vsel %vm951, %v2944, %v5930
        %v5948 = vsel %vm951, %v3174, %v5933
        %v5949 = vsel %vm951, %v3392, %v5936
        %v5950 = vsel %vm951, %v3622, %v5939
        %v5951 = vsel %vm951, %v3852, %v5942
        %v5953 = vrot.slane %v4189, 4
        %v5956 = vrot.slane %v4411, 4
        %v5959 = vrot.slane %v4633, 4
        %v5962 = vrot.slane %v4855, 4
        %v5965 = vrot.slane %v5077, 4
        %v5968 = vrot.slane %v5312, 4
        %v5971 = vrot.slane %v5542, 4
        %v5974 = vrot.slane %v5772, 4
        %v5976 = vsel %vm951, %v4074, %v5953
        %v5977 = vsel %vm951, %v4296, %v5956
        %v5978 = vsel %vm951, %v4518, %v5959
        %v5979 = vsel %vm951, %v4740, %v5962
        %v5980 = vsel %vm951, %v4962, %v5965
        %v5981 = vsel %vm951, %v5197, %v5968
        %v5982 = vsel %vm951, %v5427, %v5971
        %v5983 = vsel %vm951, %v5657, %v5974
        %v5984 = vld [vmem:[%s1] sm:$0xff]
        %vm5985 = vcmask 293888
        %v5987 = vsel %vm5985, %v5984, 0
        %v5990 = vsel %vm951, %v5916, 0
        %5992 = vmatprep.subr.mxu0 0.0
        %5993 = vmatpush1.msra.mxu0 0.0
        %5994 = vmatprep.subr.mxu0 0.0
        %5995 = vmatpush1.msra.mxu0 0.0
        %5996 = vmatprep.subr.mxu0 0.0
        %5997 = vmatpush1.msra.mxu0 0.0
        %5998 = vmatprep.subr.mxu0 0.0
        %5999 = vmatpush1.msra.mxu0 0.0
        %6000 = vmatprep.subr.mxu0 0.0
        %6001 = vmatpush1.msra.mxu0 0.0
        %6002 = vmatprep.subr.mxu0 0.0
        %6003 = vmatpush1.msra.mxu0 0.0
        %6004 = vmatprep.subr.mxu0 0.0
        %6005 = vmatpush1.msra.mxu0 0.0
        %6006 = vmatprep.subr.mxu0 0.0
        %6007 = vmatpush1.msra.mxu0 0.0
        %6008 = vmatprep.subr.mxu0 0.0
        %6009 = vmatpush1.msra.mxu0 0.0
        %6010 = vmatprep.subr.mxu0 0.0
        %6011 = vmatpush1.msra.mxu0 0.0
        %6012 = vmatprep.subr.mxu0 0.0
        %6013 = vmatpush1.msra.mxu0 0.0
        %6014 = vmatprep.subr.mxu0 0.0
        %6015 = vmatpush1.msra.mxu0 %v5990
        %6016 = vmatprep.subr.mxu0 0.0
        %6017 = vmatpush1.msra.mxu0 %v5915
        %6018 = vmatprep.subr.mxu0 0.0
        %6019 = vmatpush1.msra.mxu0 %v5914
        %6020 = vmatprep.subr.mxu0 0.0
        %6021 = vmatpush1.msra.mxu0 %v5913
        %6022 = vmatprep.subr.mxu0 0.0
        %6023 = vmatpush1.msra.mxu0 %v5912
        %6024 = vmatprep.subr.mxu0 0.0
        %6025 = vmatpush2.msra.mxu0 0.0
        %6026 = vmatprep.subr.mxu0 0.0
        %6027 = vmatpush2.msra.mxu0 0.0
        %6028 = vmatprep.subr.mxu0 0.0
        %6029 = vmatpush2.msra.mxu0 0.0
        %6030 = vmatprep.subr.mxu0 0.0
        %6031 = vmatpush2.msra.mxu0 0.0
        %6032 = vmatprep.subr.mxu0 0.0
        %6033 = vmatpush2.msra.mxu0 0.0
        %6034 = vmatprep.subr.mxu0 0.0
        %6035 = vmatpush2.msra.mxu0 0.0
        %6036 = vmatprep.subr.mxu0 0.0
        %6037 = vmatpush2.msra.mxu0 0.0
        %6038 = vmatprep.subr.mxu0 0.0
        %6039 = vmatpush2.msra.mxu0 0.0
        %6040 = vmatprep.subr.mxu0 0.0
        %6041 = vmatpush2.msra.mxu0 0.0
        %6042 = vmatprep.subr.mxu0 0.0
        %6043 = vmatpush2.msra.mxu0 0.0
        %6044 = vmatprep.subr.mxu0 0.0
        %6045 = vmatpush2.msra.mxu0 0.0
        %6046 = vmatprep.subr.mxu0 0.0
        %6047 = vmatpush2.msra.mxu0 0.0
        %6048 = vmatprep.subr.mxu0 0.0
        %6049 = vmatpush2.msra.mxu0 0.0
        %6050 = vmatprep.subr.mxu0 0.0
        %6051 = vmatpush2.msra.mxu0 0.0
        %6052 = vmatprep.subr.mxu0 0.0
        %6053 = vmatpush2.msra.mxu0 0.0
        %6054 = vmatprep.subr.mxu0 0.0
        %6055 = vmatpush2.msra.mxu0 0.0
        %6056 = vmatprep.mubr.f32.mxu0 0.0
        %6057 = vmatmul.mubr.f32.gmra.mxu0 %v5987
        %v6058 = vpop.f32.mrf.mxu0
        %v6059 = vadd.f32 0.0, %v6058
        %v6060 = vpop.f32.mrf.mxu0
        %6061 = vdwg.mxu0
        %v6062 = vld [vmem:[%s2] sm:$0xff]
        %vm6063 = vcmask 818176
        %v6065 = vsel %vm6063, %v6062, 0
        %v6068 = vsel %vm951, %v5948, 0
        %6070 = vmatprep.subr.mxu0 0.0
        %6071 = vmatpush1.msra.mxu0 0.0
        %6072 = vmatprep.subr.mxu0 0.0
        %6073 = vmatpush1.msra.mxu0 0.0
        %6074 = vmatprep.subr.mxu0 0.0
        %6075 = vmatpush1.msra.mxu0 0.0
        %6076 = vmatprep.subr.mxu0 0.0
        %6077 = vmatpush1.msra.mxu0 %v6068
        %6078 = vmatprep.subr.mxu0 0.0
        %6079 = vmatpush1.msra.mxu0 %v5947
        %6080 = vmatprep.subr.mxu0 0.0
        %6081 = vmatpush1.msra.mxu0 %v5946
        %6082 = vmatprep.subr.mxu0 0.0
        %6083 = vmatpush1.msra.mxu0 %v5945
        %6084 = vmatprep.subr.mxu0 0.0
        %6085 = vmatpush1.msra.mxu0 %v5944
        %6086 = vmatprep.subr.mxu0 0.0
        %6087 = vmatpush1.msra.mxu0 %v5919
        %6088 = vmatprep.subr.mxu0 0.0
        %6089 = vmatpush1.msra.mxu0 %v5918
        %6090 = vmatprep.subr.mxu0 0.0
        %6091 = vmatpush1.msra.mxu0 %v5917
        %6092 = vmatprep.subr.mxu0 0.0
        %6093 = vmatpush1.msra.mxu0 %v5916
        %6094 = vmatprep.subr.mxu0 0.0
        %6095 = vmatpush1.msra.mxu0 %v5915
        %6096 = vmatprep.subr.mxu0 0.0
        %6097 = vmatpush1.msra.mxu0 %v5914
        %6098 = vmatprep.subr.mxu0 0.0
        %6099 = vmatpush1.msra.mxu0 %v5913
        %6100 = vmatprep.subr.mxu0 0.0
        %6101 = vmatpush1.msra.mxu0 %v5912
        %6102 = vmatprep.subr.mxu0 0.0
        %6103 = vmatpush2.msra.mxu0 0.0
        %6104 = vmatprep.subr.mxu0 0.0
        %6105 = vmatpush2.msra.mxu0 0.0
        %6106 = vmatprep.subr.mxu0 0.0
        %6107 = vmatpush2.msra.mxu0 0.0
        %6108 = vmatprep.subr.mxu0 0.0
        %6109 = vmatpush2.msra.mxu0 0.0
        %6110 = vmatprep.subr.mxu0 0.0
        %6111 = vmatpush2.msra.mxu0 0.0
        %6112 = vmatprep.subr.mxu0 0.0
        %6113 = vmatpush2.msra.mxu0 0.0
        %6114 = vmatprep.subr.mxu0 0.0
        %6115 = vmatpush2.msra.mxu0 0.0
        %6116 = vmatprep.subr.mxu0 0.0
        %6117 = vmatpush2.msra.mxu0 0.0
        %6118 = vmatprep.subr.mxu0 0.0
        %6119 = vmatpush2.msra.mxu0 0.0
        %6120 = vmatprep.subr.mxu0 0.0
        %6121 = vmatpush2.msra.mxu0 0.0
        %6122 = vmatprep.subr.mxu0 0.0
        %6123 = vmatpush2.msra.mxu0 0.0
        %6124 = vmatprep.subr.mxu0 0.0
        %6125 = vmatpush2.msra.mxu0 0.0
        %6126 = vmatprep.subr.mxu0 0.0
        %6127 = vmatpush2.msra.mxu0 0.0
        %6128 = vmatprep.subr.mxu0 0.0
        %6129 = vmatpush2.msra.mxu0 0.0
        %6130 = vmatprep.subr.mxu0 0.0
        %6131 = vmatpush2.msra.mxu0 0.0
        %6132 = vmatprep.subr.mxu0 0.0
        %6133 = vmatpush2.msra.mxu0 0.0
        %6134 = vmatprep.mubr.f32.mxu0 0.0
        %6135 = vmatmul.mubr.f32.gmra.mxu0 %v6065
        %v6136 = vpop.f32.mrf.mxu0
        %v6137 = vadd.f32 0.0, %v6136
        %v6138 = vpop.f32.mrf.mxu0
        %6139 = vdwg.mxu0
        %v6140 = vld [vmem:[%s3] sm:$0xff]
        %v6141 = vld [vmem:[%s3 + $0x8] sm:$0xff]
        %vm6142 = vcmask 556032
        %v6144 = vsel %vm6142, %v6141, 0
        %v6147 = vsel %vm951, %v5887, 0
        %6149 = vmatprep.subr.mxu0 0.0
        %6150 = vmatpush1.msra.mxu0 %v5951
        %6151 = vmatprep.subr.mxu0 0.0
        %6152 = vmatpush1.msra.mxu0 %v5950
        %6153 = vmatprep.subr.mxu0 0.0
        %6154 = vmatpush1.msra.mxu0 %v5949
        %6155 = vmatprep.subr.mxu0 0.0
        %6156 = vmatpush1.msra.mxu0 %v5948
        %6157 = vmatprep.subr.mxu0 0.0
        %6158 = vmatpush1.msra.mxu0 %v5947
        %6159 = vmatprep.subr.mxu0 0.0
        %6160 = vmatpush1.msra.mxu0 %v5946
        %6161 = vmatprep.subr.mxu0 0.0
        %6162 = vmatpush1.msra.mxu0 %v5945
        %6163 = vmatprep.subr.mxu0 0.0
        %6164 = vmatpush1.msra.mxu0 %v5944
        %6165 = vmatprep.subr.mxu0 0.0
        %6166 = vmatpush1.msra.mxu0 %v5919
        %6167 = vmatprep.subr.mxu0 0.0
        %6168 = vmatpush1.msra.mxu0 %v5918
        %6169 = vmatprep.subr.mxu0 0.0
        %6170 = vmatpush1.msra.mxu0 %v5917
        %6171 = vmatprep.subr.mxu0 0.0
        %6172 = vmatpush1.msra.mxu0 %v5916
        %6173 = vmatprep.subr.mxu0 0.0
        %6174 = vmatpush1.msra.mxu0 %v5915
        %6175 = vmatprep.subr.mxu0 0.0
        %6176 = vmatpush1.msra.mxu0 %v5914
        %6177 = vmatprep.subr.mxu0 0.0
        %6178 = vmatpush1.msra.mxu0 %v5913
        %6179 = vmatprep.subr.mxu0 0.0
        %6180 = vmatpush1.msra.mxu0 %v5912
        %6181 = vmatprep.subr.mxu0 0.0
        %6182 = vmatpush2.msra.mxu0 0.0
        %6183 = vmatprep.subr.mxu0 0.0
        %6184 = vmatpush2.msra.mxu0 0.0
        %6185 = vmatprep.subr.mxu0 0.0
        %6186 = vmatpush2.msra.mxu0 0.0
        %6187 = vmatprep.subr.mxu0 0.0
        %6188 = vmatpush2.msra.mxu0 0.0
        %6189 = vmatprep.subr.mxu0 0.0
        %6190 = vmatpush2.msra.mxu0 0.0
        %6191 = vmatprep.subr.mxu0 0.0
        %6192 = vmatpush2.msra.mxu0 0.0
        %6193 = vmatprep.subr.mxu0 0.0
        %6194 = vmatpush2.msra.mxu0 0.0
        %6195 = vmatprep.subr.mxu0 0.0
        %6196 = vmatpush2.msra.mxu0 %v6147
        %6197 = vmatprep.subr.mxu0 0.0
        %6198 = vmatpush2.msra.mxu0 %v5983
        %6199 = vmatprep.subr.mxu0 0.0
        %6200 = vmatpush2.msra.mxu0 %v5982
        %6201 = vmatprep.subr.mxu0 0.0
        %6202 = vmatpush2.msra.mxu0 %v5981
        %6203 = vmatprep.subr.mxu0 0.0
        %6204 = vmatpush2.msra.mxu0 %v5980
        %6205 = vmatprep.subr.mxu0 0.0
        %6206 = vmatpush2.msra.mxu0 %v5979
        %6207 = vmatprep.subr.mxu0 0.0
        %6208 = vmatpush2.msra.mxu0 %v5978
        %6209 = vmatprep.subr.mxu0 0.0
        %6210 = vmatpush2.msra.mxu0 %v5977
        %6211 = vmatprep.subr.mxu0 0.0
        %6212 = vmatpush2.msra.mxu0 %v5976
        %6213 = vmatprep.mubr.f32.mxu0 %v6144
        %6214 = vmatmul.mubr.f32.gmra.mxu0 %v6140
        %v6215 = vpop.f32.mrf.mxu0
        %v6216 = vadd.f32 0.0, %v6215
        %v6217 = vpop.f32.mrf.mxu0
        %6218 = vdwg.mxu0
        %v6219 = vmax.f32 %v6059, 0.0
        %6220 = vst [vmem:[%s204] sm:$0xff] %v6219
        %v6221 = vmax.f32 %v6137, 0.0
        %6222 = vst [vmem:[%s204 + $0x8] sm:$0xff] %v6221
        %v6223 = vmax.f32 %v6216, 0.0
        %6224 = vst [vmem:[%s204 + $0x10] sm:$0xff] %v6223
        %s6225 = sand.u32 %s129, 1
        %s6226 = scalar_lea.sflag [#allocation3], %s6225
        %s6227 = sand.u32 %s129, 1
        %s6228 = smul.addr %s6227, 24
        %s6229 = scalar_lea.vmem [#allocation2], %s6228
        // Predicated region
        $region37: #{tpu_custom_call.1} parent=35 // pred_check
          %p6230 = pneg %p139
        $region38: #{tpu_custom_call.1} parent=35 // pred_check_branch
          %6232 = sbr.rel (%p6230) target = $region40
        $region39: #{tpu_custom_call.1} parent=35 // pred_region
          %s6234 = ssub.s32 384, 384
          %6235 = vsyncadd %s6226, %s6234
          %s6236 = smul.addr %s22, 6
          %s6237 = sadd.s32 %s23, %s6236
          %s6238 = smul.addr %s6237, 128
          %s6239 = scalar_lea.hbm %s4, %s6238
          %s6240 = sshll.u32 %s6229, 4
          %s6241 = int_to_ptr.vmem [resolvable:$true] %s6240
          %6246 = dma.vmem_to_hbm [thread:$0]  %s6241, 384, %s6239, %s6226, 128, 256, 8
        $region40: #{tpu_custom_call.1} parent=35 // pred_fallthru
          _
      $region36: #{tpu_custom_call.1} parent=5 // pred_fallthru
        _
      %p6247 = scmp.le.s32.totalorder 2, %s13
      // Predicated region
      $region41: #{tpu_custom_call.1} parent=5 // pred_check
        %p6248 = pneg %p6247
      $region42: #{tpu_custom_call.1} parent=5 // pred_check_branch
        %6250 = sbr.rel (%p6248) target = $region44
      $region43: #{tpu_custom_call.1} parent=5 // pred_region
        %s6251 = ssub.s32 %s13, 2
        // Predicated region
        $region45: #{tpu_custom_call.1} parent=43 // pred_check
          %p6252 = pneg %p145
        $region46: #{tpu_custom_call.1} parent=43 // pred_check_branch
          %6254 = sbr.rel (%p6252) target = $region48
        $region47: #{tpu_custom_call.1} parent=43 // pred_region
          %s6255 = sand.u32 %s130, 1
          %s6256 = scalar_lea.sflag [#allocation3], %s6255
          %s6257 = sand.u32 %s130, 1
          %s6258 = smul.addr %s6257, 24
          %s6259 = scalar_lea.vmem [#allocation2], %s6258
          %6260 = dma.done %s6256, 384
        $region48: #{tpu_custom_call.1} parent=43 // pred_fallthru
          _
      $region44: #{tpu_custom_call.1} parent=5 // pred_fallthru
        _
    $region6: #{tpu_custom_call.1} parent=1 // loop_footer
      %s17 = sadd.s32 1, %s13
    $region7: #{tpu_custom_call.1} parent=1 // loop_footer_branch
      %12 = sbr.rel target = $region3
    $region8: #{tpu_custom_call.1} parent=1 // loop_exit
      _
    %6261 = vsyncpa [#allocation3], 1
    %s6262 = scalar_lea.sflag [#allocation3], 1
    %6263 = vsyncpa %s6262, 1

</llo_original>
